<compile_context>
chip_gen: v6e
topology: v6e:2x2x1
jax: 0.10.0
libtpu: 0.0.40
codegen_flags: <defaults>
</compile_context>

<pallas_src>
import functools
import math

import jax
import jax.numpy as jnp
import numpy as np
from jax.experimental import pallas as pl
from jax.experimental.pallas import tpu as pltpu


def _round_up(x, m):
    return ((x + m - 1) // m) * m


def _cdiv(a, b):
    return -(-a // b)


# ---------------------------------------------------------------------------
# In-kernel building blocks (plain traced values; strided flat (C, B_TILE*L) layout)
# ---------------------------------------------------------------------------
def _conv_same_strided(x, w_aug, masks, ones_blk, W, s, k, relu):
    """'Same' KxK conv (odd k, stride 1) over a strided logical grid.

    The logical Hg x Wg grid lives at per-image lanes (i*s)*W + (j*s); `masks`
    is a (k*k, BL) f32 0/1 array marking, per tap, which output lanes have a
    valid (in-bounds, on-stride, same-image) source.  Bias is folded into
    `w_aug` via a block of constant-one rows, so the whole conv is a single
    bf16 MXU contraction with f32 accumulation.
    """
    BL = x.shape[-1]
    pad = (k - 1) // 2
    taps = []
    t = 0
    for dh in range(-pad, pad + 1):
        for dw in range(-pad, pad + 1):
            off = s * (dh * W + dw)                      # flat lane offset of this tap
            shifted = pltpu.roll(x, (-off) % BL, 1) if off % BL != 0 else x
            taps.append(shifted * masks[t:t + 1, :])     # f32 mask-mul (v5e-safe)
            t += 1
    patches = jnp.concatenate(taps + [ones_blk], axis=0)         # (k*k*Cinp + 8, BL)
    out = jnp.dot(w_aug, patches.astype(w_aug.dtype),            # bf16 in, f32 acc
                  preferred_element_type=jnp.float32)
    if relu:
        out = jnp.maximum(out, 0.0)
    return out


def _maxpool_strided(x, W, s, k):
    """k x k max-pool (stride k, floor mode) over the strided logical grid.

    No re-compaction: the pooled value for output cell (i, j) lands on its
    window's top-left corner lane, i.e. the grid stride just becomes s*k.
    """
    BL = x.shape[-1]
    m = x
    for dj in range(1, k):                               # max along width
        m = jnp.maximum(m, pltpu.roll(x, (-(s * dj)) % BL, 1))
    m2 = m
    for di in range(1, k):                               # max along height
        m2 = jnp.maximum(m2, pltpu.roll(m, (-(s * di * W)) % BL, 1))
    return m2


# ---------------------------------------------------------------------------
# Fused whole-model kernel
# ---------------------------------------------------------------------------
def _fused_model_kernel(x_ref,
                        w1a, w1b, w2a, w2b, w3a, w3b, wg,
                        m1, m2, m3, mg,
                        o_ref, *, W, ksizes, pools, gen_k):
    h = x_ref[0]                                         # (C0p, B_TILE*L) f32
    BL = h.shape[-1]
    ones_blk = jnp.ones((8, BL), jnp.float32)            # bias rows, built once (hoisted)
    s = 1
    for (wa, wb, mref, k, pk) in ((w1a, w1b, m1, ksizes[0], pools[0]),
                                  (w2a, w2b, m2, ksizes[1], pools[1]),
                                  (w3a, w3b, m3, ksizes[2], pools[2])):
        mval = mref[...]
        h = _conv_same_strided(h, wa[...], mval, ones_blk, W, s, k, relu=True)
        h = _conv_same_strided(h, wb[...], mval, ones_blk, W, s, k, relu=True)
        # TODO(synk): BatchNorm2d (batch_norm=True branch) and training-mode
        # Dropout2d are not implemented; matches eval-mode forward with
        # batch_norm=False.
        if pk is not None:
            h = _maxpool_strided(h, W, s, pk)
            s *= pk
    g = _conv_same_strided(h, wg[...], mg[...], ones_blk, W, s, gen_k, relu=False)
    o_ref[0] = g.astype(o_ref.dtype)


# ---------------------------------------------------------------------------
# Host-side helpers
# ---------------------------------------------------------------------------
def _prep_conv_weight(w, b, cin_pad, cout_pad):
    """PyTorch (Cout,Cin,KH,KW) -> bf16 (cout_pad, KH*KW*cin_pad + 8), columns in
    (kh, kw, cin) order; the bias is folded into the first of 8 trailing columns
    which contract against a constant-ones block in the kernel."""
    cout, cin, kh, kw = w.shape
    wt = jnp.transpose(w, (0, 2, 3, 1))                              # (Cout,KH,KW,Cin)
    wt = jnp.pad(wt, ((0, cout_pad - cout), (0, 0), (0, 0), (0, cin_pad - cin)))
    wf = wt.reshape(cout_pad, kh * kw * cin_pad)
    bcol = jnp.zeros((cout_pad, 8), w.dtype).at[:cout, 0].set(b)
    return jnp.concatenate([wf, bcol], axis=1).astype(jnp.bfloat16)


def _tap_masks(H, W, L, Hg, Wg, s, k):
    """Host-precomputed (k*k, L) f32 0/1 per-tap validity masks for one conv stage
    (depends only on static geometry)."""
    q = np.arange(L)
    r, c = q // W, q % W
    i, j = r // s, c // s
    valid = (q < H * W) & (r % s == 0) & (c % s == 0) & (i < Hg) & (j < Wg)
    pad = (k - 1) // 2
    rows = []
    for dh in range(-pad, pad + 1):
        for dw in range(-pad, pad + 1):
            rows.append(valid & (i + dh >= 0) & (i + dh < Hg)
                        & (j + dw >= 0) & (j + dw < Wg))
    return np.stack(rows).astype(np.float32)


def _pick_b_tile(n, l, target_lanes=2048):
    """Pack images along lanes until ~target_lanes per grid step, but keep >= 2
    grid steps (v7x megacore) when the batch allows it."""
    bt = max(1, min(target_lanes // l, n))
    while bt > 1 and _cdiv(n, bt) < 2:
        bt = (bt + 1) // 2
    return bt


def conv2d_model_forward(x, params, *, seq_size, input_channel, h, w,
                         layers_param, b_tile=None):
    """Forward pass of the PyTorch `Conv2d` module (eval mode). NCHW in/out."""
    c_in = x.reshape(-1, seq_size * input_channel, h, w)             # == x.view(...)
    N, C0, H, W = c_in.shape

    ksizes = (layers_param["kernel_1"], layers_param["kernel_2"], layers_param["kernel_3"])
    pools = (layers_param["maxpool_1"], layers_param["maxpool_2"], layers_param["maxpool_3"])
    gen_k = params["gen"]["w"].shape[-1]
    out_size = params["gen"]["w"].shape[0]
    for k in ksizes + (gen_k,):
        assert k % 2 == 1, "only odd kernels give true 'same' padding (matches this module)"

    # Lane/sublane-native padding + batch packing along the lane axis.
    L = _round_up(H * W, 128)
    C0p = _round_up(C0, 8)
    if b_tile is None:
        b_tile = _pick_b_tile(N, L)
    Nb = _cdiv(N, b_tile)
    N_pad = Nb * b_tile
    BL = b_tile * L

    x_flat = jnp.pad(c_in.reshape(N, C0, H * W),
                     ((0, N_pad - N), (0, C0p - C0), (0, L - H * W)))
    x_pack = jnp.transpose(x_flat.reshape(Nb, b_tile, C0p, L),
                           (0, 2, 1, 3)).reshape(Nb, C0p, BL)

    # bf16 weights with bias folded in (fetched once, constant index_map).
    w_list = []
    cin_p = C0p
    for name, k in (("cnn_1", ksizes[0]), ("cnn_2", ksizes[1]), ("cnn_3", ksizes[2])):
        p = params[name]
        cout_p_blk = _round_up(p["w1"].shape[0], 8)
        w_list.append(_prep_conv_weight(p["w1"], p["b1"], cin_p, cout_p_blk))
        w_list.append(_prep_conv_weight(p["w2"], p["b2"], cout_p_blk, cout_p_blk))
        cin_p = cout_p_blk
    cout_p = _round_up(out_size, 8)
    w_list.append(_prep_conv_weight(params["gen"]["w"], params["gen"]["b"], cin_p, cout_p))

    # Host-precomputed per-tap boundary/stride masks, tiled across packed images.
    mask_list = []
    Hg, Wg, s = H, W, 1
    for k, pk in zip(ksizes, pools):
        mask_list.append(jnp.asarray(np.tile(_tap_masks(H, W, L, Hg, Wg, s, k), (1, b_tile))))
        if pk is not None:
            Hg, Wg = Hg // pk, Wg // pk
            s *= pk
    mask_list.append(jnp.asarray(np.tile(_tap_masks(H, W, L, Hg, Wg, s, gen_k), (1, b_tile))))
    Hf, Wf, s_f = Hg, Wg, s

    kernel = functools.partial(_fused_model_kernel, W=W, ksizes=ksizes,
                               pools=pools, gen_k=gen_k)
    in_specs = [pl.BlockSpec((1, C0p, BL), lambda n: (n, 0, 0))]
    in_specs += [pl.BlockSpec(a.shape, lambda n: (0, 0)) for a in w_list]
    in_specs += [pl.BlockSpec(a.shape, lambda n: (0, 0)) for a in mask_list]

    out = pl.pallas_call(
        kernel,
        out_shape=jax.ShapeDtypeStruct((Nb, cout_p, BL), jnp.float32),
        grid_spec=pltpu.PrefetchScalarGridSpec(
            num_scalar_prefetch=0,
            grid=(Nb,),                                  # packed-batch axis
            in_specs=in_specs,
            out_specs=pl.BlockSpec((1, cout_p, BL), lambda n: (n, 0, 0)),
        ),
        compiler_params=pltpu.CompilerParams(dimension_semantics=("parallel",)),
    )(x_pack, *w_list, *mask_list)

    # Unpack the lane-packed batch, drop padding, extract the strided (pooled)
    # grid and restore NCHW.
    out = jnp.transpose(out.reshape(Nb, cout_p, b_tile, L),
                        (0, 2, 1, 3)).reshape(N_pad, cout_p, L)
    out = out[:N, :out_size, :H * W].reshape(N, out_size, H, W)
    return out[:, :, ::s_f, ::s_f][:, :, :Hf, :Wf]


# ---------------------------------------------------------------------------
# Deterministic parameter init (PyTorch Conv2d default: U(-1/sqrt(fan_in), +)),
# weights kept in PyTorch layout (Cout, Cin, KH, KW).
# ---------------------------------------------------------------------------
def _init_conv(key, cin, cout, k):
    kw_, kb_ = jax.random.split(key)
    bound = 1.0 / math.sqrt(cin * k * k)
    w = jax.random.uniform(kw_, (cout, cin, k, k), jnp.float32, -bound, bound)
    b = jax.random.uniform(kb_, (cout,), jnp.float32, -bound, bound)
    return w, b


def init_params(key, cin0, layers_param, output_size):
    keys = jax.random.split(key, 7)
    c1, c2, c3 = layers_param["cnn1"], layers_param["cnn2"], layers_param["cnn3"]
    k1, k2, k3 = layers_param["kernel_1"], layers_param["kernel_2"], layers_param["kernel_3"]
    p = {}
    w, b = _init_conv(keys[0], cin0, c1, k1); w2, b2 = _init_conv(keys[1], c1, c1, k1)
    p["cnn_1"] = {"w1": w, "b1": b, "w2": w2, "b2": b2}
    w, b = _init_conv(keys[2], c1, c2, k2); w2, b2 = _init_conv(keys[3], c2, c2, k2)
    p["cnn_2"] = {"w1": w, "b1": b, "w2": w2, "b2": b2}
    w, b = _init_conv(keys[4], c2, c3, k3); w2, b2 = _init_conv(keys[5], c3, c3, k3)
    p["cnn_3"] = {"w1": w, "b1": b, "w2": w2, "b2": b2}
    w, b = _init_conv(keys[6], c3, output_size, 3)
    p["gen"] = {"w": w, "b": b}
    return p


if __name__ == "__main__":
    key = jax.random.PRNGKey(0)
    k_param, k_x = jax.random.split(key)

    # Small shapes consistent with the module's forward; batch=8 exercises both
    # the lane-packing (B_TILE=4 images/step) and >=2 "parallel" grid steps.
    batch, seq_size, input_channel, H, W = 8, 2, 2, 16, 16
    output_size = 5
    layers_param = {
        "cnn1": 8, "cnn2": 8, "cnn3": 8,
        "kernel_1": 3, "kernel_2": 3, "kernel_3": 3,
        "maxpool_1": 2, "maxpool_2": 2, "maxpool_3": None,
        "dropout": 0.5, "batch_norm": False,
    }

    params = init_params(k_param, seq_size * input_channel, layers_param, output_size)
    x = jax.random.normal(k_x, (batch, seq_size, input_channel, H, W), jnp.float32)

    fwd = jax.jit(functools.partial(
        conv2d_model_forward, seq_size=seq_size, input_channel=input_channel,
        h=H, w=W, layers_param=layers_param))
    out = jax.block_until_ready(fwd(x, params))
    assert out.shape == (batch, output_size, 4, 4), out.shape
    print("KERNEL_OK")
</pallas_src>

<mosaic_0001>
module attributes {stable_mosaic.version = 11 : i64} {
  func.func @_fused_model_kernel(%arg0: i32, %arg1: memref<1x8x1024xf32, #tpu.memory_space<vmem>>, %arg2: memref<8x80xbf16, #tpu.memory_space<vmem>>, %arg3: memref<8x80xbf16, #tpu.memory_space<vmem>>, %arg4: memref<8x80xbf16, #tpu.memory_space<vmem>>, %arg5: memref<8x80xbf16, #tpu.memory_space<vmem>>, %arg6: memref<8x80xbf16, #tpu.memory_space<vmem>>, %arg7: memref<8x80xbf16, #tpu.memory_space<vmem>>, %arg8: memref<8x80xbf16, #tpu.memory_space<vmem>>, %arg9: memref<9x1024xf32, #tpu.memory_space<vmem>>, %arg10: memref<9x1024xf32, #tpu.memory_space<vmem>>, %arg11: memref<9x1024xf32, #tpu.memory_space<vmem>>, %arg12: memref<9x1024xf32, #tpu.memory_space<vmem>>, %arg13: memref<1x8x1024xf32, #tpu.memory_space<vmem>>) attributes {dimension_semantics = [#tpu.dimension_semantics<parallel>], iteration_bounds = array<i64: 2>, scalar_prefetch = 0 : i64, scratch_operands = 0 : i64, tpu.core_type = #tpu.core_type<tc>, window_params = [{transform_indices = @transform_0, window_bounds = array<i64: 1, 8, 1024>}, {pipeline_mode = #tpu.pipeline_mode<synchronous>, transform_indices = @transform_1, window_bounds = array<i64: 8, 80>}, {pipeline_mode = #tpu.pipeline_mode<synchronous>, transform_indices = @transform_2, window_bounds = array<i64: 8, 80>}, {pipeline_mode = #tpu.pipeline_mode<synchronous>, transform_indices = @transform_3, window_bounds = array<i64: 8, 80>}, {pipeline_mode = #tpu.pipeline_mode<synchronous>, transform_indices = @transform_4, window_bounds = array<i64: 8, 80>}, {pipeline_mode = #tpu.pipeline_mode<synchronous>, transform_indices = @transform_5, window_bounds = array<i64: 8, 80>}, {pipeline_mode = #tpu.pipeline_mode<synchronous>, transform_indices = @transform_6, window_bounds = array<i64: 8, 80>}, {pipeline_mode = #tpu.pipeline_mode<synchronous>, transform_indices = @transform_7, window_bounds = array<i64: 8, 80>}, {pipeline_mode = #tpu.pipeline_mode<synchronous>, transform_indices = @transform_8, window_bounds = array<i64: 9, 1024>}, {pipeline_mode = #tpu.pipeline_mode<synchronous>, transform_indices = @transform_9, window_bounds = array<i64: 9, 1024>}, {pipeline_mode = #tpu.pipeline_mode<synchronous>, transform_indices = @transform_10, window_bounds = array<i64: 9, 1024>}, {pipeline_mode = #tpu.pipeline_mode<synchronous>, transform_indices = @transform_11, window_bounds = array<i64: 9, 1024>}, {transform_indices = @transform_12, window_bounds = array<i64: 1, 8, 1024>}]} {
    %c0 = arith.constant 0 : index
    %c0_0 = arith.constant 0 : index
    %c0_1 = arith.constant 0 : index
    %0 = vector.load %arg1[%c0, %c0_0, %c0_1] : memref<1x8x1024xf32, #tpu.memory_space<vmem>>, vector<1x8x1024xf32>
    %1 = vector.shape_cast %0 : vector<1x8x1024xf32> to vector<8x1024xf32>
    %cst = arith.constant 1.000000e+00 : f32
    %2 = vector.broadcast %cst : f32 to vector<8x1024xf32>
    %c0_2 = arith.constant 0 : index
    %c0_3 = arith.constant 0 : index
    %3 = vector.load %arg9[%c0_2, %c0_3] : memref<9x1024xf32, #tpu.memory_space<vmem>>, vector<9x1024xf32>
    %c0_4 = arith.constant 0 : index
    %c0_5 = arith.constant 0 : index
    %4 = vector.load %arg2[%c0_4, %c0_5] : memref<8x80xbf16, #tpu.memory_space<vmem>>, vector<8x80xbf16>
    %c17_i32 = arith.constant 17 : i32
    %5 = tpu.dynamic_rotate %1 by %c17_i32 dim 1 : vector<8x1024xf32>, i32 -> vector<8x1024xf32>
    %6 = vector.extract_strided_slice %3 {offsets = [0, 0], sizes = [1, 1024], strides = [1, 1]} : vector<9x1024xf32> to vector<1x1024xf32>
    %7 = vector.broadcast %6 : vector<1x1024xf32> to vector<8x1024xf32>
    %8 = arith.mulf %5, %7 : vector<8x1024xf32>
    %c16_i32 = arith.constant 16 : i32
    %9 = tpu.dynamic_rotate %1 by %c16_i32 dim 1 : vector<8x1024xf32>, i32 -> vector<8x1024xf32>
    %10 = vector.extract_strided_slice %3 {offsets = [1, 0], sizes = [1, 1024], strides = [1, 1]} : vector<9x1024xf32> to vector<1x1024xf32>
    %11 = vector.broadcast %10 : vector<1x1024xf32> to vector<8x1024xf32>
    %12 = arith.mulf %9, %11 : vector<8x1024xf32>
    %c15_i32 = arith.constant 15 : i32
    %13 = tpu.dynamic_rotate %1 by %c15_i32 dim 1 : vector<8x1024xf32>, i32 -> vector<8x1024xf32>
    %14 = vector.extract_strided_slice %3 {offsets = [2, 0], sizes = [1, 1024], strides = [1, 1]} : vector<9x1024xf32> to vector<1x1024xf32>
    %15 = vector.broadcast %14 : vector<1x1024xf32> to vector<8x1024xf32>
    %16 = arith.mulf %13, %15 : vector<8x1024xf32>
    %c1_i32 = arith.constant 1 : i32
    %17 = tpu.dynamic_rotate %1 by %c1_i32 dim 1 : vector<8x1024xf32>, i32 -> vector<8x1024xf32>
    %18 = vector.extract_strided_slice %3 {offsets = [3, 0], sizes = [1, 1024], strides = [1, 1]} : vector<9x1024xf32> to vector<1x1024xf32>
    %19 = vector.broadcast %18 : vector<1x1024xf32> to vector<8x1024xf32>
    %20 = arith.mulf %17, %19 : vector<8x1024xf32>
    %21 = vector.extract_strided_slice %3 {offsets = [4, 0], sizes = [1, 1024], strides = [1, 1]} : vector<9x1024xf32> to vector<1x1024xf32>
    %22 = vector.broadcast %21 : vector<1x1024xf32> to vector<8x1024xf32>
    %23 = arith.mulf %1, %22 : vector<8x1024xf32>
    %c1023_i32 = arith.constant 1023 : i32
    %24 = tpu.dynamic_rotate %1 by %c1023_i32 dim 1 : vector<8x1024xf32>, i32 -> vector<8x1024xf32>
    %25 = vector.extract_strided_slice %3 {offsets = [5, 0], sizes = [1, 1024], strides = [1, 1]} : vector<9x1024xf32> to vector<1x1024xf32>
    %26 = vector.broadcast %25 : vector<1x1024xf32> to vector<8x1024xf32>
    %27 = arith.mulf %24, %26 : vector<8x1024xf32>
    %c1009_i32 = arith.constant 1009 : i32
    %28 = tpu.dynamic_rotate %1 by %c1009_i32 dim 1 : vector<8x1024xf32>, i32 -> vector<8x1024xf32>
    %29 = vector.extract_strided_slice %3 {offsets = [6, 0], sizes = [1, 1024], strides = [1, 1]} : vector<9x1024xf32> to vector<1x1024xf32>
    %30 = vector.broadcast %29 : vector<1x1024xf32> to vector<8x1024xf32>
    %31 = arith.mulf %28, %30 : vector<8x1024xf32>
    %c1008_i32 = arith.constant 1008 : i32
    %32 = tpu.dynamic_rotate %1 by %c1008_i32 dim 1 : vector<8x1024xf32>, i32 -> vector<8x1024xf32>
    %33 = vector.extract_strided_slice %3 {offsets = [7, 0], sizes = [1, 1024], strides = [1, 1]} : vector<9x1024xf32> to vector<1x1024xf32>
    %34 = vector.broadcast %33 : vector<1x1024xf32> to vector<8x1024xf32>
    %35 = arith.mulf %32, %34 : vector<8x1024xf32>
    %c1007_i32 = arith.constant 1007 : i32
    %36 = tpu.dynamic_rotate %1 by %c1007_i32 dim 1 : vector<8x1024xf32>, i32 -> vector<8x1024xf32>
    %37 = vector.extract_strided_slice %3 {offsets = [8, 0], sizes = [1, 1024], strides = [1, 1]} : vector<9x1024xf32> to vector<1x1024xf32>
    %38 = vector.broadcast %37 : vector<1x1024xf32> to vector<8x1024xf32>
    %39 = arith.mulf %36, %38 : vector<8x1024xf32>
    %40 = tpu.concatenate %8, %12, %16, %20, %23, %27, %31, %35, %39, %2 in 0 : vector<8x1024xf32>, vector<8x1024xf32>, vector<8x1024xf32>, vector<8x1024xf32>, vector<8x1024xf32>, vector<8x1024xf32>, vector<8x1024xf32>, vector<8x1024xf32>, vector<8x1024xf32>, vector<8x1024xf32> -> vector<80x1024xf32>
    %41 = arith.truncf %40 : vector<80x1024xf32> to vector<80x1024xbf16>
    %cst_6 = arith.constant dense<0.000000e+00> : vector<8x1024xf32>
    %42 = tpu.matmul %4, %41, %cst_6 {dimension_numbers = #tpu.dot_dimension_numbers<[1], [0], [0], [1], [0, 0, 1, 1], [], []>} : vector<8x80xbf16>, vector<80x1024xbf16>, vector<8x1024xf32> -> vector<8x1024xf32>
    %cst_7 = arith.constant 0.000000e+00 : f32
    %43 = vector.broadcast %cst_7 : f32 to vector<8x1024xf32>
    %44 = arith.maximumf %42, %43 : vector<8x1024xf32>
    %c0_8 = arith.constant 0 : index
    %c0_9 = arith.constant 0 : index
    %45 = vector.load %arg3[%c0_8, %c0_9] : memref<8x80xbf16, #tpu.memory_space<vmem>>, vector<8x80xbf16>
    %c17_i32_10 = arith.constant 17 : i32
    %46 = tpu.dynamic_rotate %44 by %c17_i32_10 dim 1 : vector<8x1024xf32>, i32 -> vector<8x1024xf32>
    %47 = vector.extract_strided_slice %3 {offsets = [0, 0], sizes = [1, 1024], strides = [1, 1]} : vector<9x1024xf32> to vector<1x1024xf32>
    %48 = vector.broadcast %47 : vector<1x1024xf32> to vector<8x1024xf32>
    %49 = arith.mulf %46, %48 : vector<8x1024xf32>
    %c16_i32_11 = arith.constant 16 : i32
    %50 = tpu.dynamic_rotate %44 by %c16_i32_11 dim 1 : vector<8x1024xf32>, i32 -> vector<8x1024xf32>
    %51 = vector.extract_strided_slice %3 {offsets = [1, 0], sizes = [1, 1024], strides = [1, 1]} : vector<9x1024xf32> to vector<1x1024xf32>
    %52 = vector.broadcast %51 : vector<1x1024xf32> to vector<8x1024xf32>
    %53 = arith.mulf %50, %52 : vector<8x1024xf32>
    %c15_i32_12 = arith.constant 15 : i32
    %54 = tpu.dynamic_rotate %44 by %c15_i32_12 dim 1 : vector<8x1024xf32>, i32 -> vector<8x1024xf32>
    %55 = vector.extract_strided_slice %3 {offsets = [2, 0], sizes = [1, 1024], strides = [1, 1]} : vector<9x1024xf32> to vector<1x1024xf32>
    %56 = vector.broadcast %55 : vector<1x1024xf32> to vector<8x1024xf32>
    %57 = arith.mulf %54, %56 : vector<8x1024xf32>
    %c1_i32_13 = arith.constant 1 : i32
    %58 = tpu.dynamic_rotate %44 by %c1_i32_13 dim 1 : vector<8x1024xf32>, i32 -> vector<8x1024xf32>
    %59 = vector.extract_strided_slice %3 {offsets = [3, 0], sizes = [1, 1024], strides = [1, 1]} : vector<9x1024xf32> to vector<1x1024xf32>
    %60 = vector.broadcast %59 : vector<1x1024xf32> to vector<8x1024xf32>
    %61 = arith.mulf %58, %60 : vector<8x1024xf32>
    %62 = vector.extract_strided_slice %3 {offsets = [4, 0], sizes = [1, 1024], strides = [1, 1]} : vector<9x1024xf32> to vector<1x1024xf32>
    %63 = vector.broadcast %62 : vector<1x1024xf32> to vector<8x1024xf32>
    %64 = arith.mulf %44, %63 : vector<8x1024xf32>
    %c1023_i32_14 = arith.constant 1023 : i32
    %65 = tpu.dynamic_rotate %44 by %c1023_i32_14 dim 1 : vector<8x1024xf32>, i32 -> vector<8x1024xf32>
    %66 = vector.extract_strided_slice %3 {offsets = [5, 0], sizes = [1, 1024], strides = [1, 1]} : vector<9x1024xf32> to vector<1x1024xf32>
    %67 = vector.broadcast %66 : vector<1x1024xf32> to vector<8x1024xf32>
    %68 = arith.mulf %65, %67 : vector<8x1024xf32>
    %c1009_i32_15 = arith.constant 1009 : i32
    %69 = tpu.dynamic_rotate %44 by %c1009_i32_15 dim 1 : vector<8x1024xf32>, i32 -> vector<8x1024xf32>
    %70 = vector.extract_strided_slice %3 {offsets = [6, 0], sizes = [1, 1024], strides = [1, 1]} : vector<9x1024xf32> to vector<1x1024xf32>
    %71 = vector.broadcast %70 : vector<1x1024xf32> to vector<8x1024xf32>
    %72 = arith.mulf %69, %71 : vector<8x1024xf32>
    %c1008_i32_16 = arith.constant 1008 : i32
    %73 = tpu.dynamic_rotate %44 by %c1008_i32_16 dim 1 : vector<8x1024xf32>, i32 -> vector<8x1024xf32>
    %74 = vector.extract_strided_slice %3 {offsets = [7, 0], sizes = [1, 1024], strides = [1, 1]} : vector<9x1024xf32> to vector<1x1024xf32>
    %75 = vector.broadcast %74 : vector<1x1024xf32> to vector<8x1024xf32>
    %76 = arith.mulf %73, %75 : vector<8x1024xf32>
    %c1007_i32_17 = arith.constant 1007 : i32
    %77 = tpu.dynamic_rotate %44 by %c1007_i32_17 dim 1 : vector<8x1024xf32>, i32 -> vector<8x1024xf32>
    %78 = vector.extract_strided_slice %3 {offsets = [8, 0], sizes = [1, 1024], strides = [1, 1]} : vector<9x1024xf32> to vector<1x1024xf32>
    %79 = vector.broadcast %78 : vector<1x1024xf32> to vector<8x1024xf32>
    %80 = arith.mulf %77, %79 : vector<8x1024xf32>
    %81 = tpu.concatenate %49, %53, %57, %61, %64, %68, %72, %76, %80, %2 in 0 : vector<8x1024xf32>, vector<8x1024xf32>, vector<8x1024xf32>, vector<8x1024xf32>, vector<8x1024xf32>, vector<8x1024xf32>, vector<8x1024xf32>, vector<8x1024xf32>, vector<8x1024xf32>, vector<8x1024xf32> -> vector<80x1024xf32>
    %82 = arith.truncf %81 : vector<80x1024xf32> to vector<80x1024xbf16>
    %cst_18 = arith.constant dense<0.000000e+00> : vector<8x1024xf32>
    %83 = tpu.matmul %45, %82, %cst_18 {dimension_numbers = #tpu.dot_dimension_numbers<[1], [0], [0], [1], [0, 0, 1, 1], [], []>} : vector<8x80xbf16>, vector<80x1024xbf16>, vector<8x1024xf32> -> vector<8x1024xf32>
    %cst_19 = arith.constant 0.000000e+00 : f32
    %84 = vector.broadcast %cst_19 : f32 to vector<8x1024xf32>
    %85 = arith.maximumf %83, %84 : vector<8x1024xf32>
    %c1023_i32_20 = arith.constant 1023 : i32
    %86 = tpu.dynamic_rotate %85 by %c1023_i32_20 dim 1 : vector<8x1024xf32>, i32 -> vector<8x1024xf32>
    %87 = arith.maximumf %85, %86 : vector<8x1024xf32>
    %c1008_i32_21 = arith.constant 1008 : i32
    %88 = tpu.dynamic_rotate %87 by %c1008_i32_21 dim 1 : vector<8x1024xf32>, i32 -> vector<8x1024xf32>
    %89 = arith.maximumf %87, %88 : vector<8x1024xf32>
    %c0_22 = arith.constant 0 : index
    %c0_23 = arith.constant 0 : index
    %90 = vector.load %arg10[%c0_22, %c0_23] : memref<9x1024xf32, #tpu.memory_space<vmem>>, vector<9x1024xf32>
    %c0_24 = arith.constant 0 : index
    %c0_25 = arith.constant 0 : index
    %91 = vector.load %arg4[%c0_24, %c0_25] : memref<8x80xbf16, #tpu.memory_space<vmem>>, vector<8x80xbf16>
    %c34_i32 = arith.constant 34 : i32
    %92 = tpu.dynamic_rotate %89 by %c34_i32 dim 1 : vector<8x1024xf32>, i32 -> vector<8x1024xf32>
    %93 = vector.extract_strided_slice %90 {offsets = [0, 0], sizes = [1, 1024], strides = [1, 1]} : vector<9x1024xf32> to vector<1x1024xf32>
    %94 = vector.broadcast %93 : vector<1x1024xf32> to vector<8x1024xf32>
    %95 = arith.mulf %92, %94 : vector<8x1024xf32>
    %c32_i32 = arith.constant 32 : i32
    %96 = tpu.dynamic_rotate %89 by %c32_i32 dim 1 : vector<8x1024xf32>, i32 -> vector<8x1024xf32>
    %97 = vector.extract_strided_slice %90 {offsets = [1, 0], sizes = [1, 1024], strides = [1, 1]} : vector<9x1024xf32> to vector<1x1024xf32>
    %98 = vector.broadcast %97 : vector<1x1024xf32> to vector<8x1024xf32>
    %99 = arith.mulf %96, %98 : vector<8x1024xf32>
    %c30_i32 = arith.constant 30 : i32
    %100 = tpu.dynamic_rotate %89 by %c30_i32 dim 1 : vector<8x1024xf32>, i32 -> vector<8x1024xf32>
    %101 = vector.extract_strided_slice %90 {offsets = [2, 0], sizes = [1, 1024], strides = [1, 1]} : vector<9x1024xf32> to vector<1x1024xf32>
    %102 = vector.broadcast %101 : vector<1x1024xf32> to vector<8x1024xf32>
    %103 = arith.mulf %100, %102 : vector<8x1024xf32>
    %c2_i32 = arith.constant 2 : i32
    %104 = tpu.dynamic_rotate %89 by %c2_i32 dim 1 : vector<8x1024xf32>, i32 -> vector<8x1024xf32>
    %105 = vector.extract_strided_slice %90 {offsets = [3, 0], sizes = [1, 1024], strides = [1, 1]} : vector<9x1024xf32> to vector<1x1024xf32>
    %106 = vector.broadcast %105 : vector<1x1024xf32> to vector<8x1024xf32>
    %107 = arith.mulf %104, %106 : vector<8x1024xf32>
    %108 = vector.extract_strided_slice %90 {offsets = [4, 0], sizes = [1, 1024], strides = [1, 1]} : vector<9x1024xf32> to vector<1x1024xf32>
    %109 = vector.broadcast %108 : vector<1x1024xf32> to vector<8x1024xf32>
    %110 = arith.mulf %89, %109 : vector<8x1024xf32>
    %c1022_i32 = arith.constant 1022 : i32
    %111 = tpu.dynamic_rotate %89 by %c1022_i32 dim 1 : vector<8x1024xf32>, i32 -> vector<8x1024xf32>
    %112 = vector.extract_strided_slice %90 {offsets = [5, 0], sizes = [1, 1024], strides = [1, 1]} : vector<9x1024xf32> to vector<1x1024xf32>
    %113 = vector.broadcast %112 : vector<1x1024xf32> to vector<8x1024xf32>
    %114 = arith.mulf %111, %113 : vector<8x1024xf32>
    %c994_i32 = arith.constant 994 : i32
    %115 = tpu.dynamic_rotate %89 by %c994_i32 dim 1 : vector<8x1024xf32>, i32 -> vector<8x1024xf32>
    %116 = vector.extract_strided_slice %90 {offsets = [6, 0], sizes = [1, 1024], strides = [1, 1]} : vector<9x1024xf32> to vector<1x1024xf32>
    %117 = vector.broadcast %116 : vector<1x1024xf32> to vector<8x1024xf32>
    %118 = arith.mulf %115, %117 : vector<8x1024xf32>
    %c992_i32 = arith.constant 992 : i32
    %119 = tpu.dynamic_rotate %89 by %c992_i32 dim 1 : vector<8x1024xf32>, i32 -> vector<8x1024xf32>
    %120 = vector.extract_strided_slice %90 {offsets = [7, 0], sizes = [1, 1024], strides = [1, 1]} : vector<9x1024xf32> to vector<1x1024xf32>
    %121 = vector.broadcast %120 : vector<1x1024xf32> to vector<8x1024xf32>
    %122 = arith.mulf %119, %121 : vector<8x1024xf32>
    %c990_i32 = arith.constant 990 : i32
    %123 = tpu.dynamic_rotate %89 by %c990_i32 dim 1 : vector<8x1024xf32>, i32 -> vector<8x1024xf32>
    %124 = vector.extract_strided_slice %90 {offsets = [8, 0], sizes = [1, 1024], strides = [1, 1]} : vector<9x1024xf32> to vector<1x1024xf32>
    %125 = vector.broadcast %124 : vector<1x1024xf32> to vector<8x1024xf32>
    %126 = arith.mulf %123, %125 : vector<8x1024xf32>
    %127 = tpu.concatenate %95, %99, %103, %107, %110, %114, %118, %122, %126, %2 in 0 : vector<8x1024xf32>, vector<8x1024xf32>, vector<8x1024xf32>, vector<8x1024xf32>, vector<8x1024xf32>, vector<8x1024xf32>, vector<8x1024xf32>, vector<8x1024xf32>, vector<8x1024xf32>, vector<8x1024xf32> -> vector<80x1024xf32>
    %128 = arith.truncf %127 : vector<80x1024xf32> to vector<80x1024xbf16>
    %cst_26 = arith.constant dense<0.000000e+00> : vector<8x1024xf32>
    %129 = tpu.matmul %91, %128, %cst_26 {dimension_numbers = #tpu.dot_dimension_numbers<[1], [0], [0], [1], [0, 0, 1, 1], [], []>} : vector<8x80xbf16>, vector<80x1024xbf16>, vector<8x1024xf32> -> vector<8x1024xf32>
    %cst_27 = arith.constant 0.000000e+00 : f32
    %130 = vector.broadcast %cst_27 : f32 to vector<8x1024xf32>
    %131 = arith.maximumf %129, %130 : vector<8x1024xf32>
    %c0_28 = arith.constant 0 : index
    %c0_29 = arith.constant 0 : index
    %132 = vector.load %arg5[%c0_28, %c0_29] : memref<8x80xbf16, #tpu.memory_space<vmem>>, vector<8x80xbf16>
    %c34_i32_30 = arith.constant 34 : i32
    %133 = tpu.dynamic_rotate %131 by %c34_i32_30 dim 1 : vector<8x1024xf32>, i32 -> vector<8x1024xf32>
    %134 = vector.extract_strided_slice %90 {offsets = [0, 0], sizes = [1, 1024], strides = [1, 1]} : vector<9x1024xf32> to vector<1x1024xf32>
    %135 = vector.broadcast %134 : vector<1x1024xf32> to vector<8x1024xf32>
    %136 = arith.mulf %133, %135 : vector<8x1024xf32>
    %c32_i32_31 = arith.constant 32 : i32
    %137 = tpu.dynamic_rotate %131 by %c32_i32_31 dim 1 : vector<8x1024xf32>, i32 -> vector<8x1024xf32>
    %138 = vector.extract_strided_slice %90 {offsets = [1, 0], sizes = [1, 1024], strides = [1, 1]} : vector<9x1024xf32> to vector<1x1024xf32>
    %139 = vector.broadcast %138 : vector<1x1024xf32> to vector<8x1024xf32>
    %140 = arith.mulf %137, %139 : vector<8x1024xf32>
    %c30_i32_32 = arith.constant 30 : i32
    %141 = tpu.dynamic_rotate %131 by %c30_i32_32 dim 1 : vector<8x1024xf32>, i32 -> vector<8x1024xf32>
    %142 = vector.extract_strided_slice %90 {offsets = [2, 0], sizes = [1, 1024], strides = [1, 1]} : vector<9x1024xf32> to vector<1x1024xf32>
    %143 = vector.broadcast %142 : vector<1x1024xf32> to vector<8x1024xf32>
    %144 = arith.mulf %141, %143 : vector<8x1024xf32>
    %c2_i32_33 = arith.constant 2 : i32
    %145 = tpu.dynamic_rotate %131 by %c2_i32_33 dim 1 : vector<8x1024xf32>, i32 -> vector<8x1024xf32>
    %146 = vector.extract_strided_slice %90 {offsets = [3, 0], sizes = [1, 1024], strides = [1, 1]} : vector<9x1024xf32> to vector<1x1024xf32>
    %147 = vector.broadcast %146 : vector<1x1024xf32> to vector<8x1024xf32>
    %148 = arith.mulf %145, %147 : vector<8x1024xf32>
    %149 = vector.extract_strided_slice %90 {offsets = [4, 0], sizes = [1, 1024], strides = [1, 1]} : vector<9x1024xf32> to vector<1x1024xf32>
    %150 = vector.broadcast %149 : vector<1x1024xf32> to vector<8x1024xf32>
    %151 = arith.mulf %131, %150 : vector<8x1024xf32>
    %c1022_i32_34 = arith.constant 1022 : i32
    %152 = tpu.dynamic_rotate %131 by %c1022_i32_34 dim 1 : vector<8x1024xf32>, i32 -> vector<8x1024xf32>
    %153 = vector.extract_strided_slice %90 {offsets = [5, 0], sizes = [1, 1024], strides = [1, 1]} : vector<9x1024xf32> to vector<1x1024xf32>
    %154 = vector.broadcast %153 : vector<1x1024xf32> to vector<8x1024xf32>
    %155 = arith.mulf %152, %154 : vector<8x1024xf32>
    %c994_i32_35 = arith.constant 994 : i32
    %156 = tpu.dynamic_rotate %131 by %c994_i32_35 dim 1 : vector<8x1024xf32>, i32 -> vector<8x1024xf32>
    %157 = vector.extract_strided_slice %90 {offsets = [6, 0], sizes = [1, 1024], strides = [1, 1]} : vector<9x1024xf32> to vector<1x1024xf32>
    %158 = vector.broadcast %157 : vector<1x1024xf32> to vector<8x1024xf32>
    %159 = arith.mulf %156, %158 : vector<8x1024xf32>
    %c992_i32_36 = arith.constant 992 : i32
    %160 = tpu.dynamic_rotate %131 by %c992_i32_36 dim 1 : vector<8x1024xf32>, i32 -> vector<8x1024xf32>
    %161 = vector.extract_strided_slice %90 {offsets = [7, 0], sizes = [1, 1024], strides = [1, 1]} : vector<9x1024xf32> to vector<1x1024xf32>
    %162 = vector.broadcast %161 : vector<1x1024xf32> to vector<8x1024xf32>
    %163 = arith.mulf %160, %162 : vector<8x1024xf32>
    %c990_i32_37 = arith.constant 990 : i32
    %164 = tpu.dynamic_rotate %131 by %c990_i32_37 dim 1 : vector<8x1024xf32>, i32 -> vector<8x1024xf32>
    %165 = vector.extract_strided_slice %90 {offsets = [8, 0], sizes = [1, 1024], strides = [1, 1]} : vector<9x1024xf32> to vector<1x1024xf32>
    %166 = vector.broadcast %165 : vector<1x1024xf32> to vector<8x1024xf32>
    %167 = arith.mulf %164, %166 : vector<8x1024xf32>
    %168 = tpu.concatenate %136, %140, %144, %148, %151, %155, %159, %163, %167, %2 in 0 : vector<8x1024xf32>, vector<8x1024xf32>, vector<8x1024xf32>, vector<8x1024xf32>, vector<8x1024xf32>, vector<8x1024xf32>, vector<8x1024xf32>, vector<8x1024xf32>, vector<8x1024xf32>, vector<8x1024xf32> -> vector<80x1024xf32>
    %169 = arith.truncf %168 : vector<80x1024xf32> to vector<80x1024xbf16>
    %cst_38 = arith.constant dense<0.000000e+00> : vector<8x1024xf32>
    %170 = tpu.matmul %132, %169, %cst_38 {dimension_numbers = #tpu.dot_dimension_numbers<[1], [0], [0], [1], [0, 0, 1, 1], [], []>} : vector<8x80xbf16>, vector<80x1024xbf16>, vector<8x1024xf32> -> vector<8x1024xf32>
    %cst_39 = arith.constant 0.000000e+00 : f32
    %171 = vector.broadcast %cst_39 : f32 to vector<8x1024xf32>
    %172 = arith.maximumf %170, %171 : vector<8x1024xf32>
    %c1022_i32_40 = arith.constant 1022 : i32
    %173 = tpu.dynamic_rotate %172 by %c1022_i32_40 dim 1 : vector<8x1024xf32>, i32 -> vector<8x1024xf32>
    %174 = arith.maximumf %172, %173 : vector<8x1024xf32>
    %c992_i32_41 = arith.constant 992 : i32
    %175 = tpu.dynamic_rotate %174 by %c992_i32_41 dim 1 : vector<8x1024xf32>, i32 -> vector<8x1024xf32>
    %176 = arith.maximumf %174, %175 : vector<8x1024xf32>
    %c0_42 = arith.constant 0 : index
    %c0_43 = arith.constant 0 : index
    %177 = vector.load %arg11[%c0_42, %c0_43] : memref<9x1024xf32, #tpu.memory_space<vmem>>, vector<9x1024xf32>
    %c0_44 = arith.constant 0 : index
    %c0_45 = arith.constant 0 : index
    %178 = vector.load %arg6[%c0_44, %c0_45] : memref<8x80xbf16, #tpu.memory_space<vmem>>, vector<8x80xbf16>
    %c68_i32 = arith.constant 68 : i32
    %179 = tpu.dynamic_rotate %176 by %c68_i32 dim 1 : vector<8x1024xf32>, i32 -> vector<8x1024xf32>
    %180 = vector.extract_strided_slice %177 {offsets = [0, 0], sizes = [1, 1024], strides = [1, 1]} : vector<9x1024xf32> to vector<1x1024xf32>
    %181 = vector.broadcast %180 : vector<1x1024xf32> to vector<8x1024xf32>
    %182 = arith.mulf %179, %181 : vector<8x1024xf32>
    %c64_i32 = arith.constant 64 : i32
    %183 = tpu.dynamic_rotate %176 by %c64_i32 dim 1 : vector<8x1024xf32>, i32 -> vector<8x1024xf32>
    %184 = vector.extract_strided_slice %177 {offsets = [1, 0], sizes = [1, 1024], strides = [1, 1]} : vector<9x1024xf32> to vector<1x1024xf32>
    %185 = vector.broadcast %184 : vector<1x1024xf32> to vector<8x1024xf32>
    %186 = arith.mulf %183, %185 : vector<8x1024xf32>
    %c60_i32 = arith.constant 60 : i32
    %187 = tpu.dynamic_rotate %176 by %c60_i32 dim 1 : vector<8x1024xf32>, i32 -> vector<8x1024xf32>
    %188 = vector.extract_strided_slice %177 {offsets = [2, 0], sizes = [1, 1024], strides = [1, 1]} : vector<9x1024xf32> to vector<1x1024xf32>
    %189 = vector.broadcast %188 : vector<1x1024xf32> to vector<8x1024xf32>
    %190 = arith.mulf %187, %189 : vector<8x1024xf32>
    %c4_i32 = arith.constant 4 : i32
    %191 = tpu.dynamic_rotate %176 by %c4_i32 dim 1 : vector<8x1024xf32>, i32 -> vector<8x1024xf32>
    %192 = vector.extract_strided_slice %177 {offsets = [3, 0], sizes = [1, 1024], strides = [1, 1]} : vector<9x1024xf32> to vector<1x1024xf32>
    %193 = vector.broadcast %192 : vector<1x1024xf32> to vector<8x1024xf32>
    %194 = arith.mulf %191, %193 : vector<8x1024xf32>
    %195 = vector.extract_strided_slice %177 {offsets = [4, 0], sizes = [1, 1024], strides = [1, 1]} : vector<9x1024xf32> to vector<1x1024xf32>
    %196 = vector.broadcast %195 : vector<1x1024xf32> to vector<8x1024xf32>
    %197 = arith.mulf %176, %196 : vector<8x1024xf32>
    %c1020_i32 = arith.constant 1020 : i32
    %198 = tpu.dynamic_rotate %176 by %c1020_i32 dim 1 : vector<8x1024xf32>, i32 -> vector<8x1024xf32>
    %199 = vector.extract_strided_slice %177 {offsets = [5, 0], sizes = [1, 1024], strides = [1, 1]} : vector<9x1024xf32> to vector<1x1024xf32>
    %200 = vector.broadcast %199 : vector<1x1024xf32> to vector<8x1024xf32>
    %201 = arith.mulf %198, %200 : vector<8x1024xf32>
    %c964_i32 = arith.constant 964 : i32
    %202 = tpu.dynamic_rotate %176 by %c964_i32 dim 1 : vector<8x1024xf32>, i32 -> vector<8x1024xf32>
    %203 = vector.extract_strided_slice %177 {offsets = [6, 0], sizes = [1, 1024], strides = [1, 1]} : vector<9x1024xf32> to vector<1x1024xf32>
    %204 = vector.broadcast %203 : vector<1x1024xf32> to vector<8x1024xf32>
    %205 = arith.mulf %202, %204 : vector<8x1024xf32>
    %c960_i32 = arith.constant 960 : i32
    %206 = tpu.dynamic_rotate %176 by %c960_i32 dim 1 : vector<8x1024xf32>, i32 -> vector<8x1024xf32>
    %207 = vector.extract_strided_slice %177 {offsets = [7, 0], sizes = [1, 1024], strides = [1, 1]} : vector<9x1024xf32> to vector<1x1024xf32>
    %208 = vector.broadcast %207 : vector<1x1024xf32> to vector<8x1024xf32>
    %209 = arith.mulf %206, %208 : vector<8x1024xf32>
    %c956_i32 = arith.constant 956 : i32
    %210 = tpu.dynamic_rotate %176 by %c956_i32 dim 1 : vector<8x1024xf32>, i32 -> vector<8x1024xf32>
    %211 = vector.extract_strided_slice %177 {offsets = [8, 0], sizes = [1, 1024], strides = [1, 1]} : vector<9x1024xf32> to vector<1x1024xf32>
    %212 = vector.broadcast %211 : vector<1x1024xf32> to vector<8x1024xf32>
    %213 = arith.mulf %210, %212 : vector<8x1024xf32>
    %214 = tpu.concatenate %182, %186, %190, %194, %197, %201, %205, %209, %213, %2 in 0 : vector<8x1024xf32>, vector<8x1024xf32>, vector<8x1024xf32>, vector<8x1024xf32>, vector<8x1024xf32>, vector<8x1024xf32>, vector<8x1024xf32>, vector<8x1024xf32>, vector<8x1024xf32>, vector<8x1024xf32> -> vector<80x1024xf32>
    %215 = arith.truncf %214 : vector<80x1024xf32> to vector<80x1024xbf16>
    %cst_46 = arith.constant dense<0.000000e+00> : vector<8x1024xf32>
    %216 = tpu.matmul %178, %215, %cst_46 {dimension_numbers = #tpu.dot_dimension_numbers<[1], [0], [0], [1], [0, 0, 1, 1], [], []>} : vector<8x80xbf16>, vector<80x1024xbf16>, vector<8x1024xf32> -> vector<8x1024xf32>
    %cst_47 = arith.constant 0.000000e+00 : f32
    %217 = vector.broadcast %cst_47 : f32 to vector<8x1024xf32>
    %218 = arith.maximumf %216, %217 : vector<8x1024xf32>
    %c0_48 = arith.constant 0 : index
    %c0_49 = arith.constant 0 : index
    %219 = vector.load %arg7[%c0_48, %c0_49] : memref<8x80xbf16, #tpu.memory_space<vmem>>, vector<8x80xbf16>
    %c68_i32_50 = arith.constant 68 : i32
    %220 = tpu.dynamic_rotate %218 by %c68_i32_50 dim 1 : vector<8x1024xf32>, i32 -> vector<8x1024xf32>
    %221 = vector.extract_strided_slice %177 {offsets = [0, 0], sizes = [1, 1024], strides = [1, 1]} : vector<9x1024xf32> to vector<1x1024xf32>
    %222 = vector.broadcast %221 : vector<1x1024xf32> to vector<8x1024xf32>
    %223 = arith.mulf %220, %222 : vector<8x1024xf32>
    %c64_i32_51 = arith.constant 64 : i32
    %224 = tpu.dynamic_rotate %218 by %c64_i32_51 dim 1 : vector<8x1024xf32>, i32 -> vector<8x1024xf32>
    %225 = vector.extract_strided_slice %177 {offsets = [1, 0], sizes = [1, 1024], strides = [1, 1]} : vector<9x1024xf32> to vector<1x1024xf32>
    %226 = vector.broadcast %225 : vector<1x1024xf32> to vector<8x1024xf32>
    %227 = arith.mulf %224, %226 : vector<8x1024xf32>
    %c60_i32_52 = arith.constant 60 : i32
    %228 = tpu.dynamic_rotate %218 by %c60_i32_52 dim 1 : vector<8x1024xf32>, i32 -> vector<8x1024xf32>
    %229 = vector.extract_strided_slice %177 {offsets = [2, 0], sizes = [1, 1024], strides = [1, 1]} : vector<9x1024xf32> to vector<1x1024xf32>
    %230 = vector.broadcast %229 : vector<1x1024xf32> to vector<8x1024xf32>
    %231 = arith.mulf %228, %230 : vector<8x1024xf32>
    %c4_i32_53 = arith.constant 4 : i32
    %232 = tpu.dynamic_rotate %218 by %c4_i32_53 dim 1 : vector<8x1024xf32>, i32 -> vector<8x1024xf32>
    %233 = vector.extract_strided_slice %177 {offsets = [3, 0], sizes = [1, 1024], strides = [1, 1]} : vector<9x1024xf32> to vector<1x1024xf32>
    %234 = vector.broadcast %233 : vector<1x1024xf32> to vector<8x1024xf32>
    %235 = arith.mulf %232, %234 : vector<8x1024xf32>
    %236 = vector.extract_strided_slice %177 {offsets = [4, 0], sizes = [1, 1024], strides = [1, 1]} : vector<9x1024xf32> to vector<1x1024xf32>
    %237 = vector.broadcast %236 : vector<1x1024xf32> to vector<8x1024xf32>
    %238 = arith.mulf %218, %237 : vector<8x1024xf32>
    %c1020_i32_54 = arith.constant 1020 : i32
    %239 = tpu.dynamic_rotate %218 by %c1020_i32_54 dim 1 : vector<8x1024xf32>, i32 -> vector<8x1024xf32>
    %240 = vector.extract_strided_slice %177 {offsets = [5, 0], sizes = [1, 1024], strides = [1, 1]} : vector<9x1024xf32> to vector<1x1024xf32>
    %241 = vector.broadcast %240 : vector<1x1024xf32> to vector<8x1024xf32>
    %242 = arith.mulf %239, %241 : vector<8x1024xf32>
    %c964_i32_55 = arith.constant 964 : i32
    %243 = tpu.dynamic_rotate %218 by %c964_i32_55 dim 1 : vector<8x1024xf32>, i32 -> vector<8x1024xf32>
    %244 = vector.extract_strided_slice %177 {offsets = [6, 0], sizes = [1, 1024], strides = [1, 1]} : vector<9x1024xf32> to vector<1x1024xf32>
    %245 = vector.broadcast %244 : vector<1x1024xf32> to vector<8x1024xf32>
    %246 = arith.mulf %243, %245 : vector<8x1024xf32>
    %c960_i32_56 = arith.constant 960 : i32
    %247 = tpu.dynamic_rotate %218 by %c960_i32_56 dim 1 : vector<8x1024xf32>, i32 -> vector<8x1024xf32>
    %248 = vector.extract_strided_slice %177 {offsets = [7, 0], sizes = [1, 1024], strides = [1, 1]} : vector<9x1024xf32> to vector<1x1024xf32>
    %249 = vector.broadcast %248 : vector<1x1024xf32> to vector<8x1024xf32>
    %250 = arith.mulf %247, %249 : vector<8x1024xf32>
    %c956_i32_57 = arith.constant 956 : i32
    %251 = tpu.dynamic_rotate %218 by %c956_i32_57 dim 1 : vector<8x1024xf32>, i32 -> vector<8x1024xf32>
    %252 = vector.extract_strided_slice %177 {offsets = [8, 0], sizes = [1, 1024], strides = [1, 1]} : vector<9x1024xf32> to vector<1x1024xf32>
    %253 = vector.broadcast %252 : vector<1x1024xf32> to vector<8x1024xf32>
    %254 = arith.mulf %251, %253 : vector<8x1024xf32>
    %255 = tpu.concatenate %223, %227, %231, %235, %238, %242, %246, %250, %254, %2 in 0 : vector<8x1024xf32>, vector<8x1024xf32>, vector<8x1024xf32>, vector<8x1024xf32>, vector<8x1024xf32>, vector<8x1024xf32>, vector<8x1024xf32>, vector<8x1024xf32>, vector<8x1024xf32>, vector<8x1024xf32> -> vector<80x1024xf32>
    %256 = arith.truncf %255 : vector<80x1024xf32> to vector<80x1024xbf16>
    %cst_58 = arith.constant dense<0.000000e+00> : vector<8x1024xf32>
    %257 = tpu.matmul %219, %256, %cst_58 {dimension_numbers = #tpu.dot_dimension_numbers<[1], [0], [0], [1], [0, 0, 1, 1], [], []>} : vector<8x80xbf16>, vector<80x1024xbf16>, vector<8x1024xf32> -> vector<8x1024xf32>
    %cst_59 = arith.constant 0.000000e+00 : f32
    %258 = vector.broadcast %cst_59 : f32 to vector<8x1024xf32>
    %259 = arith.maximumf %257, %258 : vector<8x1024xf32>
    %c0_60 = arith.constant 0 : index
    %c0_61 = arith.constant 0 : index
    %260 = vector.load %arg8[%c0_60, %c0_61] : memref<8x80xbf16, #tpu.memory_space<vmem>>, vector<8x80xbf16>
    %c0_62 = arith.constant 0 : index
    %c0_63 = arith.constant 0 : index
    %261 = vector.load %arg12[%c0_62, %c0_63] : memref<9x1024xf32, #tpu.memory_space<vmem>>, vector<9x1024xf32>
    %c68_i32_64 = arith.constant 68 : i32
    %262 = tpu.dynamic_rotate %259 by %c68_i32_64 dim 1 : vector<8x1024xf32>, i32 -> vector<8x1024xf32>
    %263 = vector.extract_strided_slice %261 {offsets = [0, 0], sizes = [1, 1024], strides = [1, 1]} : vector<9x1024xf32> to vector<1x1024xf32>
    %264 = vector.broadcast %263 : vector<1x1024xf32> to vector<8x1024xf32>
    %265 = arith.mulf %262, %264 : vector<8x1024xf32>
    %c64_i32_65 = arith.constant 64 : i32
    %266 = tpu.dynamic_rotate %259 by %c64_i32_65 dim 1 : vector<8x1024xf32>, i32 -> vector<8x1024xf32>
    %267 = vector.extract_strided_slice %261 {offsets = [1, 0], sizes = [1, 1024], strides = [1, 1]} : vector<9x1024xf32> to vector<1x1024xf32>
    %268 = vector.broadcast %267 : vector<1x1024xf32> to vector<8x1024xf32>
    %269 = arith.mulf %266, %268 : vector<8x1024xf32>
    %c60_i32_66 = arith.constant 60 : i32
    %270 = tpu.dynamic_rotate %259 by %c60_i32_66 dim 1 : vector<8x1024xf32>, i32 -> vector<8x1024xf32>
    %271 = vector.extract_strided_slice %261 {offsets = [2, 0], sizes = [1, 1024], strides = [1, 1]} : vector<9x1024xf32> to vector<1x1024xf32>
    %272 = vector.broadcast %271 : vector<1x1024xf32> to vector<8x1024xf32>
    %273 = arith.mulf %270, %272 : vector<8x1024xf32>
    %c4_i32_67 = arith.constant 4 : i32
    %274 = tpu.dynamic_rotate %259 by %c4_i32_67 dim 1 : vector<8x1024xf32>, i32 -> vector<8x1024xf32>
    %275 = vector.extract_strided_slice %261 {offsets = [3, 0], sizes = [1, 1024], strides = [1, 1]} : vector<9x1024xf32> to vector<1x1024xf32>
    %276 = vector.broadcast %275 : vector<1x1024xf32> to vector<8x1024xf32>
    %277 = arith.mulf %274, %276 : vector<8x1024xf32>
    %278 = vector.extract_strided_slice %261 {offsets = [4, 0], sizes = [1, 1024], strides = [1, 1]} : vector<9x1024xf32> to vector<1x1024xf32>
    %279 = vector.broadcast %278 : vector<1x1024xf32> to vector<8x1024xf32>
    %280 = arith.mulf %259, %279 : vector<8x1024xf32>
    %c1020_i32_68 = arith.constant 1020 : i32
    %281 = tpu.dynamic_rotate %259 by %c1020_i32_68 dim 1 : vector<8x1024xf32>, i32 -> vector<8x1024xf32>
    %282 = vector.extract_strided_slice %261 {offsets = [5, 0], sizes = [1, 1024], strides = [1, 1]} : vector<9x1024xf32> to vector<1x1024xf32>
    %283 = vector.broadcast %282 : vector<1x1024xf32> to vector<8x1024xf32>
    %284 = arith.mulf %281, %283 : vector<8x1024xf32>
    %c964_i32_69 = arith.constant 964 : i32
    %285 = tpu.dynamic_rotate %259 by %c964_i32_69 dim 1 : vector<8x1024xf32>, i32 -> vector<8x1024xf32>
    %286 = vector.extract_strided_slice %261 {offsets = [6, 0], sizes = [1, 1024], strides = [1, 1]} : vector<9x1024xf32> to vector<1x1024xf32>
    %287 = vector.broadcast %286 : vector<1x1024xf32> to vector<8x1024xf32>
    %288 = arith.mulf %285, %287 : vector<8x1024xf32>
    %c960_i32_70 = arith.constant 960 : i32
    %289 = tpu.dynamic_rotate %259 by %c960_i32_70 dim 1 : vector<8x1024xf32>, i32 -> vector<8x1024xf32>
    %290 = vector.extract_strided_slice %261 {offsets = [7, 0], sizes = [1, 1024], strides = [1, 1]} : vector<9x1024xf32> to vector<1x1024xf32>
    %291 = vector.broadcast %290 : vector<1x1024xf32> to vector<8x1024xf32>
    %292 = arith.mulf %289, %291 : vector<8x1024xf32>
    %c956_i32_71 = arith.constant 956 : i32
    %293 = tpu.dynamic_rotate %259 by %c956_i32_71 dim 1 : vector<8x1024xf32>, i32 -> vector<8x1024xf32>
    %294 = vector.extract_strided_slice %261 {offsets = [8, 0], sizes = [1, 1024], strides = [1, 1]} : vector<9x1024xf32> to vector<1x1024xf32>
    %295 = vector.broadcast %294 : vector<1x1024xf32> to vector<8x1024xf32>
    %296 = arith.mulf %293, %295 : vector<8x1024xf32>
    %297 = tpu.concatenate %265, %269, %273, %277, %280, %284, %288, %292, %296, %2 in 0 : vector<8x1024xf32>, vector<8x1024xf32>, vector<8x1024xf32>, vector<8x1024xf32>, vector<8x1024xf32>, vector<8x1024xf32>, vector<8x1024xf32>, vector<8x1024xf32>, vector<8x1024xf32>, vector<8x1024xf32> -> vector<80x1024xf32>
    %298 = arith.truncf %297 : vector<80x1024xf32> to vector<80x1024xbf16>
    %cst_72 = arith.constant dense<0.000000e+00> : vector<8x1024xf32>
    %299 = tpu.matmul %260, %298, %cst_72 {dimension_numbers = #tpu.dot_dimension_numbers<[1], [0], [0], [1], [0, 0, 1, 1], [], []>} : vector<8x80xbf16>, vector<80x1024xbf16>, vector<8x1024xf32> -> vector<8x1024xf32>
    %c0_73 = arith.constant 0 : index
    %c0_74 = arith.constant 0 : index
    %c0_75 = arith.constant 0 : index
    %300 = vector.load %arg13[%c0_73, %c0_74, %c0_75] : memref<1x8x1024xf32, #tpu.memory_space<vmem>>, vector<1x8x1024xf32>
    %301 = vector.shape_cast %300 : vector<1x8x1024xf32> to vector<8x1024xf32>
    %302 = vector.shape_cast %299 : vector<8x1024xf32> to vector<1x8x1024xf32>
    tpu.vector_store %arg13[%c0_73, %c0_74, %c0_75], %302 {strides = array<i32>} : memref<1x8x1024xf32, #tpu.memory_space<vmem>>, vector<1x8x1024xf32>,
    return
  }
  func.func @transform_0(%arg0: i32) -> (i32, i32, i32) {
    %c0_i32 = arith.constant 0 : i32
    %c0_i32_0 = arith.constant 0 : i32
    %c0_i32_1 = arith.constant 0 : i32
    return %arg0, %c0_i32, %c0_i32_0 : i32, i32, i32
  }
  func.func @transform_1(%arg0: i32) -> (i32, i32) {
    %c0_i32 = arith.constant 0 : i32
    %c0_i32_0 = arith.constant 0 : i32
    %c0_i32_1 = arith.constant 0 : i32
    return %c0_i32, %c0_i32_0 : i32, i32
  }
  func.func @transform_2(%arg0: i32) -> (i32, i32) {
    %c0_i32 = arith.constant 0 : i32
    %c0_i32_0 = arith.constant 0 : i32
    %c0_i32_1 = arith.constant 0 : i32
    return %c0_i32, %c0_i32_0 : i32, i32
  }
  func.func @transform_3(%arg0: i32) -> (i32, i32) {
    %c0_i32 = arith.constant 0 : i32
    %c0_i32_0 = arith.constant 0 : i32
    %c0_i32_1 = arith.constant 0 : i32
    return %c0_i32, %c0_i32_0 : i32, i32
  }
  func.func @transform_4(%arg0: i32) -> (i32, i32) {
    %c0_i32 = arith.constant 0 : i32
    %c0_i32_0 = arith.constant 0 : i32
    %c0_i32_1 = arith.constant 0 : i32
    return %c0_i32, %c0_i32_0 : i32, i32
  }
  func.func @transform_5(%arg0: i32) -> (i32, i32) {
    %c0_i32 = arith.constant 0 : i32
    %c0_i32_0 = arith.constant 0 : i32
    %c0_i32_1 = arith.constant 0 : i32
    return %c0_i32, %c0_i32_0 : i32, i32
  }
  func.func @transform_6(%arg0: i32) -> (i32, i32) {
    %c0_i32 = arith.constant 0 : i32
    %c0_i32_0 = arith.constant 0 : i32
    %c0_i32_1 = arith.constant 0 : i32
    return %c0_i32, %c0_i32_0 : i32, i32
  }
  func.func @transform_7(%arg0: i32) -> (i32, i32) {
    %c0_i32 = arith.constant 0 : i32
    %c0_i32_0 = arith.constant 0 : i32
    %c0_i32_1 = arith.constant 0 : i32
    return %c0_i32, %c0_i32_0 : i32, i32
  }
  func.func @transform_8(%arg0: i32) -> (i32, i32) {
    %c0_i32 = arith.constant 0 : i32
    %c0_i32_0 = arith.constant 0 : i32
    %c0_i32_1 = arith.constant 0 : i32
    return %c0_i32, %c0_i32_0 : i32, i32
  }
  func.func @transform_9(%arg0: i32) -> (i32, i32) {
    %c0_i32 = arith.constant 0 : i32
    %c0_i32_0 = arith.constant 0 : i32
    %c0_i32_1 = arith.constant 0 : i32
    return %c0_i32, %c0_i32_0 : i32, i32
  }
  func.func @transform_10(%arg0: i32) -> (i32, i32) {
    %c0_i32 = arith.constant 0 : i32
    %c0_i32_0 = arith.constant 0 : i32
    %c0_i32_1 = arith.constant 0 : i32
    return %c0_i32, %c0_i32_0 : i32, i32
  }
  func.func @transform_11(%arg0: i32) -> (i32, i32) {
    %c0_i32 = arith.constant 0 : i32
    %c0_i32_0 = arith.constant 0 : i32
    %c0_i32_1 = arith.constant 0 : i32
    return %c0_i32, %c0_i32_0 : i32, i32
  }
  func.func @transform_12(%arg0: i32) -> (i32, i32, i32) {
    %c0_i32 = arith.constant 0 : i32
    %c0_i32_0 = arith.constant 0 : i32
    %c0_i32_1 = arith.constant 0 : i32
    return %arg0, %c0_i32, %c0_i32_0 : i32, i32, i32
  }
}

</mosaic_0001>

<llo_original>
// kernel: conv2d_model_forward.1
$region0: #{conv2d_model_forward.1}
  #allocation0 [shape = 'u32[]', space=smem, size = 0x4, offset = 0x4, fixed_abs, tag = 'smem constant byte address 0x4 - core index']
  #allocation1 [shape = 'u32[144,128]{1,0:T(1,128)}', space=vmem, size = 0x12000, scoped, tag = 'internal scratch']
  %s0 = inlined_call_operand.vmem [shape: f32[2,8,1024], index: 0, kind: input, shape index: {}]
  %s1 = inlined_call_operand.vmem [shape: bf16[8,80], index: 1, kind: input, shape index: {}]
  %s2 = inlined_call_operand.vmem [shape: bf16[8,80], index: 2, kind: input, shape index: {}]
  %s3 = inlined_call_operand.vmem [shape: bf16[8,80], index: 3, kind: input, shape index: {}]
  %s4 = inlined_call_operand.vmem [shape: bf16[8,80], index: 4, kind: input, shape index: {}]
  %s5 = inlined_call_operand.vmem [shape: bf16[8,80], index: 5, kind: input, shape index: {}]
  %s6 = inlined_call_operand.vmem [shape: bf16[8,80], index: 6, kind: input, shape index: {}]
  %s7 = inlined_call_operand.vmem [shape: bf16[8,80], index: 7, kind: input, shape index: {}]
  %s8 = inlined_call_operand.vmem [shape: f32[9,1024], index: 8, kind: input, shape index: {}]
  %s9 = inlined_call_operand.vmem [shape: f32[9,1024], index: 9, kind: input, shape index: {}]
  %s10 = inlined_call_operand.vmem [shape: f32[9,1024], index: 10, kind: input, shape index: {}, may-alias: {10,11}]
  %s11 = inlined_call_operand.vmem [shape: f32[9,1024], index: 11, kind: input, shape index: {}, may-alias: {10,11}]
  %s12 = inlined_call_operand.vmem [shape: f32[2,8,1024], index: 12, kind: output, shape index: {}]
  %s13 = sld [smem:[#allocation0]]
  $region81: #{conv2d_model_forward.1} parent=0
    _
  %s15 = ssub.s32 1, %s13
  %s16 = scalar_select 0, %s15, %s13
  loop: start=0, step=1, limit=4
  $region2: #{conv2d_model_forward.1} parent=0 // loop_pre_header
    _
  $region3: #{conv2d_model_forward.1} parent=0 // loop_header
    %s18 = sphi 0, %s22
    %p19 = scmp.ge.s32.totalorder %s18, 4
    %s28 = sphi 0, %s30
    %s31 = sphi 0, %s28
    %s32 = sphi 0, %s31
    %s48 = sphi 0, %s32
    %s52 = sphi 0, %s52
    %s54 = sphi 0, %s52
    %s55 = sphi 0, %s54
    %s69 = sphi 0, %s55
    %s73 = sphi 0, %s73
    %s75 = sphi 0, %s73
    %s76 = sphi 0, %s75
    %s90 = sphi 0, %s76
    %s94 = sphi 0, %s94
    %s96 = sphi 0, %s94
    %s97 = sphi 0, %s96
    %s111 = sphi 0, %s97
    %s115 = sphi 0, %s115
    %s117 = sphi 0, %s115
    %s118 = sphi 0, %s117
    %s132 = sphi 0, %s118
    %s136 = sphi 0, %s136
    %s138 = sphi 0, %s136
    %s139 = sphi 0, %s138
    %s153 = sphi 0, %s139
    %s157 = sphi 0, %s157
    %s159 = sphi 0, %s157
    %s160 = sphi 0, %s159
    %s174 = sphi 0, %s160
    %s178 = sphi 0, %s178
    %s180 = sphi 0, %s178
    %s181 = sphi 0, %s180
    %s195 = sphi 0, %s181
    %s199 = sphi 0, %s199
    %s201 = sphi 0, %s199
    %s202 = sphi 0, %s201
    %s216 = sphi 0, %s202
    %s220 = sphi 0, %s220
    %s222 = sphi 0, %s220
    %s223 = sphi 0, %s222
    %s237 = sphi 0, %s223
    %s241 = sphi 0, %s241
    %s243 = sphi 0, %s241
    %s244 = sphi 0, %s243
    %s258 = sphi 0, %s244
    %s262 = sphi 0, %s262
    %s264 = sphi 0, %s262
    %s265 = sphi 0, %s264
    %s279 = sphi 0, %s265
    %s285 = sphi 0, %s287
    %s288 = sphi 0, %s285
    %s289 = sphi 0, %s288
    %s305 = sphi 0, %s289
  $region4: #{conv2d_model_forward.1} parent=0 // loop_header_branch
    %21 = sbr.rel (%p19) target = $region8
  $region5: #{conv2d_model_forward.1} parent=0 // loop_body
    %s23 = ssub.s32 %s18, 1
    %s24 = ssub.s32 %s18, 2
    %s25 = sadd.s32 %s18, 1
    %s26 = ssub.s32 %s18, %s25
    %p27 = scmp.eq.s32.totalorder %s26, 0
    %s29 = sadd.s32 %s28, 1
    %s30 = scalar_select %p27, %s28, %s29
    %p33 = pneg %p27
    %p34 = scmp.eq.s32.totalorder %s18, 1
    %p35 = por %p33, %p34
    %p36 = scmp.ne.s32.totalorder %s28, %s31
    %p37 = scmp.eq.s32.totalorder %s18, 0
    %p38 = por %p36, %p37
    %p39 = scmp.ne.s32.totalorder %s28, %s31
    %p40 = scmp.eq.s32.totalorder %s23, 1
    %p41 = por %p39, %p40
    %p42 = scmp.ne.s32.totalorder %s31, %s32
    %p43 = scmp.eq.s32.totalorder %s23, 0
    %p44 = por %p42, %p43
    %p45 = scmp.ne.s32.totalorder %s31, %s32
    %p46 = scmp.eq.s32.totalorder %s24, 1
    %p47 = por %p45, %p46
    %p49 = scmp.ne.s32.totalorder %s32, %s48
    %p50 = scmp.eq.s32.totalorder %s24, 0
    %p51 = por %p49, %p50
    %s53 = sadd.s32 %s52, 1
    %p56 = scmp.eq.s32.totalorder %s18, 1
    %p57 = scmp.ne.s32.totalorder %s52, %s54
    %p58 = scmp.eq.s32.totalorder %s18, 0
    %p59 = por %p57, %p58
    %p60 = scmp.ne.s32.totalorder %s52, %s54
    %p61 = scmp.eq.s32.totalorder %s23, 1
    %p62 = por %p60, %p61
    %p63 = scmp.ne.s32.totalorder %s54, %s55
    %p64 = scmp.eq.s32.totalorder %s23, 0
    %p65 = por %p63, %p64
    %p66 = scmp.ne.s32.totalorder %s54, %s55
    %p67 = scmp.eq.s32.totalorder %s24, 1
    %p68 = por %p66, %p67
    %p70 = scmp.ne.s32.totalorder %s55, %s69
    %p71 = scmp.eq.s32.totalorder %s24, 0
    %p72 = por %p70, %p71
    %s74 = sadd.s32 %s73, 1
    %p77 = scmp.eq.s32.totalorder %s18, 1
    %p78 = scmp.ne.s32.totalorder %s73, %s75
    %p79 = scmp.eq.s32.totalorder %s18, 0
    %p80 = por %p78, %p79
    %p81 = scmp.ne.s32.totalorder %s73, %s75
    %p82 = scmp.eq.s32.totalorder %s23, 1
    %p83 = por %p81, %p82
    %p84 = scmp.ne.s32.totalorder %s75, %s76
    %p85 = scmp.eq.s32.totalorder %s23, 0
    %p86 = por %p84, %p85
    %p87 = scmp.ne.s32.totalorder %s75, %s76
    %p88 = scmp.eq.s32.totalorder %s24, 1
    %p89 = por %p87, %p88
    %p91 = scmp.ne.s32.totalorder %s76, %s90
    %p92 = scmp.eq.s32.totalorder %s24, 0
    %p93 = por %p91, %p92
    %s95 = sadd.s32 %s94, 1
    %p98 = scmp.eq.s32.totalorder %s18, 1
    %p99 = scmp.ne.s32.totalorder %s94, %s96
    %p100 = scmp.eq.s32.totalorder %s18, 0
    %p101 = por %p99, %p100
    %p102 = scmp.ne.s32.totalorder %s94, %s96
    %p103 = scmp.eq.s32.totalorder %s23, 1
    %p104 = por %p102, %p103
    %p105 = scmp.ne.s32.totalorder %s96, %s97
    %p106 = scmp.eq.s32.totalorder %s23, 0
    %p107 = por %p105, %p106
    %p108 = scmp.ne.s32.totalorder %s96, %s97
    %p109 = scmp.eq.s32.totalorder %s24, 1
    %p110 = por %p108, %p109
    %p112 = scmp.ne.s32.totalorder %s97, %s111
    %p113 = scmp.eq.s32.totalorder %s24, 0
    %p114 = por %p112, %p113
    %s116 = sadd.s32 %s115, 1
    %p119 = scmp.eq.s32.totalorder %s18, 1
    %p120 = scmp.ne.s32.totalorder %s115, %s117
    %p121 = scmp.eq.s32.totalorder %s18, 0
    %p122 = por %p120, %p121
    %p123 = scmp.ne.s32.totalorder %s115, %s117
    %p124 = scmp.eq.s32.totalorder %s23, 1
    %p125 = por %p123, %p124
    %p126 = scmp.ne.s32.totalorder %s117, %s118
    %p127 = scmp.eq.s32.totalorder %s23, 0
    %p128 = por %p126, %p127
    %p129 = scmp.ne.s32.totalorder %s117, %s118
    %p130 = scmp.eq.s32.totalorder %s24, 1
    %p131 = por %p129, %p130
    %p133 = scmp.ne.s32.totalorder %s118, %s132
    %p134 = scmp.eq.s32.totalorder %s24, 0
    %p135 = por %p133, %p134
    %s137 = sadd.s32 %s136, 1
    %p140 = scmp.eq.s32.totalorder %s18, 1
    %p141 = scmp.ne.s32.totalorder %s136, %s138
    %p142 = scmp.eq.s32.totalorder %s18, 0
    %p143 = por %p141, %p142
    %p144 = scmp.ne.s32.totalorder %s136, %s138
    %p145 = scmp.eq.s32.totalorder %s23, 1
    %p146 = por %p144, %p145
    %p147 = scmp.ne.s32.totalorder %s138, %s139
    %p148 = scmp.eq.s32.totalorder %s23, 0
    %p149 = por %p147, %p148
    %p150 = scmp.ne.s32.totalorder %s138, %s139
    %p151 = scmp.eq.s32.totalorder %s24, 1
    %p152 = por %p150, %p151
    %p154 = scmp.ne.s32.totalorder %s139, %s153
    %p155 = scmp.eq.s32.totalorder %s24, 0
    %p156 = por %p154, %p155
    %s158 = sadd.s32 %s157, 1
    %p161 = scmp.eq.s32.totalorder %s18, 1
    %p162 = scmp.ne.s32.totalorder %s157, %s159
    %p163 = scmp.eq.s32.totalorder %s18, 0
    %p164 = por %p162, %p163
    %p165 = scmp.ne.s32.totalorder %s157, %s159
    %p166 = scmp.eq.s32.totalorder %s23, 1
    %p167 = por %p165, %p166
    %p168 = scmp.ne.s32.totalorder %s159, %s160
    %p169 = scmp.eq.s32.totalorder %s23, 0
    %p170 = por %p168, %p169
    %p171 = scmp.ne.s32.totalorder %s159, %s160
    %p172 = scmp.eq.s32.totalorder %s24, 1
    %p173 = por %p171, %p172
    %p175 = scmp.ne.s32.totalorder %s160, %s174
    %p176 = scmp.eq.s32.totalorder %s24, 0
    %p177 = por %p175, %p176
    %s179 = sadd.s32 %s178, 1
    %p182 = scmp.eq.s32.totalorder %s18, 1
    %p183 = scmp.ne.s32.totalorder %s178, %s180
    %p184 = scmp.eq.s32.totalorder %s18, 0
    %p185 = por %p183, %p184
    %p186 = scmp.ne.s32.totalorder %s178, %s180
    %p187 = scmp.eq.s32.totalorder %s23, 1
    %p188 = por %p186, %p187
    %p189 = scmp.ne.s32.totalorder %s180, %s181
    %p190 = scmp.eq.s32.totalorder %s23, 0
    %p191 = por %p189, %p190
    %p192 = scmp.ne.s32.totalorder %s180, %s181
    %p193 = scmp.eq.s32.totalorder %s24, 1
    %p194 = por %p192, %p193
    %p196 = scmp.ne.s32.totalorder %s181, %s195
    %p197 = scmp.eq.s32.totalorder %s24, 0
    %p198 = por %p196, %p197
    %s200 = sadd.s32 %s199, 1
    %p203 = scmp.eq.s32.totalorder %s18, 1
    %p204 = scmp.ne.s32.totalorder %s199, %s201
    %p205 = scmp.eq.s32.totalorder %s18, 0
    %p206 = por %p204, %p205
    %p207 = scmp.ne.s32.totalorder %s199, %s201
    %p208 = scmp.eq.s32.totalorder %s23, 1
    %p209 = por %p207, %p208
    %p210 = scmp.ne.s32.totalorder %s201, %s202
    %p211 = scmp.eq.s32.totalorder %s23, 0
    %p212 = por %p210, %p211
    %p213 = scmp.ne.s32.totalorder %s201, %s202
    %p214 = scmp.eq.s32.totalorder %s24, 1
    %p215 = por %p213, %p214
    %p217 = scmp.ne.s32.totalorder %s202, %s216
    %p218 = scmp.eq.s32.totalorder %s24, 0
    %p219 = por %p217, %p218
    %s221 = sadd.s32 %s220, 1
    %p224 = scmp.eq.s32.totalorder %s18, 1
    %p225 = scmp.ne.s32.totalorder %s220, %s222
    %p226 = scmp.eq.s32.totalorder %s18, 0
    %p227 = por %p225, %p226
    %p228 = scmp.ne.s32.totalorder %s220, %s222
    %p229 = scmp.eq.s32.totalorder %s23, 1
    %p230 = por %p228, %p229
    %p231 = scmp.ne.s32.totalorder %s222, %s223
    %p232 = scmp.eq.s32.totalorder %s23, 0
    %p233 = por %p231, %p232
    %p234 = scmp.ne.s32.totalorder %s222, %s223
    %p235 = scmp.eq.s32.totalorder %s24, 1
    %p236 = por %p234, %p235
    %p238 = scmp.ne.s32.totalorder %s223, %s237
    %p239 = scmp.eq.s32.totalorder %s24, 0
    %p240 = por %p238, %p239
    %s242 = sadd.s32 %s241, 1
    %p245 = scmp.eq.s32.totalorder %s18, 1
    %p246 = scmp.ne.s32.totalorder %s241, %s243
    %p247 = scmp.eq.s32.totalorder %s18, 0
    %p248 = por %p246, %p247
    %p249 = scmp.ne.s32.totalorder %s241, %s243
    %p250 = scmp.eq.s32.totalorder %s23, 1
    %p251 = por %p249, %p250
    %p252 = scmp.ne.s32.totalorder %s243, %s244
    %p253 = scmp.eq.s32.totalorder %s23, 0
    %p254 = por %p252, %p253
    %p255 = scmp.ne.s32.totalorder %s243, %s244
    %p256 = scmp.eq.s32.totalorder %s24, 1
    %p257 = por %p255, %p256
    %p259 = scmp.ne.s32.totalorder %s244, %s258
    %p260 = scmp.eq.s32.totalorder %s24, 0
    %p261 = por %p259, %p260
    %s263 = sadd.s32 %s262, 1
    %p266 = scmp.eq.s32.totalorder %s18, 1
    %p267 = scmp.ne.s32.totalorder %s262, %s264
    %p268 = scmp.eq.s32.totalorder %s18, 0
    %p269 = por %p267, %p268
    %p270 = scmp.ne.s32.totalorder %s262, %s264
    %p271 = scmp.eq.s32.totalorder %s23, 1
    %p272 = por %p270, %p271
    %p273 = scmp.ne.s32.totalorder %s264, %s265
    %p274 = scmp.eq.s32.totalorder %s23, 0
    %p275 = por %p273, %p274
    %p276 = scmp.ne.s32.totalorder %s264, %s265
    %p277 = scmp.eq.s32.totalorder %s24, 1
    %p278 = por %p276, %p277
    %p280 = scmp.ne.s32.totalorder %s265, %s279
    %p281 = scmp.eq.s32.totalorder %s24, 0
    %p282 = por %p280, %p281
    %s283 = ssub.s32 %s18, %s25
    %p284 = scmp.eq.s32.totalorder %s283, 0
    %s286 = sadd.s32 %s285, 1
    %s287 = scalar_select %p284, %s285, %s286
    %p290 = pneg %p284
    %p291 = scmp.eq.s32.totalorder %s18, 1
    %p292 = por %p290, %p291
    %p293 = scmp.ne.s32.totalorder %s285, %s288
    %p294 = scmp.eq.s32.totalorder %s18, 0
    %p295 = por %p293, %p294
    %p296 = scmp.ne.s32.totalorder %s285, %s288
    %p297 = scmp.eq.s32.totalorder %s23, 1
    %p298 = por %p296, %p297
    %p299 = scmp.ne.s32.totalorder %s288, %s289
    %p300 = scmp.eq.s32.totalorder %s23, 0
    %p301 = por %p299, %p300
    %p302 = scmp.ne.s32.totalorder %s288, %s289
    %p303 = scmp.eq.s32.totalorder %s24, 1
    %p304 = por %p302, %p303
    %p306 = scmp.ne.s32.totalorder %s289, %s305
    %p307 = scmp.eq.s32.totalorder %s24, 0
    %p308 = por %p306, %p307
    %p309 = scmp.le.s32.totalorder 1, %s18
    %p310 = scmp.lt.s32.totalorder %s18, 3
    %p311 = pnand %p309, %p310
    %p312 = pneg %p311
    // Predicated region
    $region9: #{conv2d_model_forward.1} parent=5 // pred_check
      _
    $region10: #{conv2d_model_forward.1} parent=5 // pred_check_branch
      %314 = sbr.rel (%p311) target = $region12
    $region11: #{conv2d_model_forward.1} parent=5 // pred_region
      %s315 = ssub.s32 %s18, 1
      // Predicated region
      $region13: #{conv2d_model_forward.1} parent=11 // pred_check
        %p316 = pneg %p65
      $region14: #{conv2d_model_forward.1} parent=11 // pred_check_branch
        %318 = sbr.rel (%p316) target = $region16
      $region15: #{conv2d_model_forward.1} parent=11 // pred_region
        _
      $region16: #{conv2d_model_forward.1} parent=11 // pred_fallthru
        _
      // Predicated region
      $region17: #{conv2d_model_forward.1} parent=11 // pred_check
        %p319 = pneg %p86
      $region18: #{conv2d_model_forward.1} parent=11 // pred_check_branch
        %321 = sbr.rel (%p319) target = $region20
      $region19: #{conv2d_model_forward.1} parent=11 // pred_region
        _
      $region20: #{conv2d_model_forward.1} parent=11 // pred_fallthru
        _
      // Predicated region
      $region21: #{conv2d_model_forward.1} parent=11 // pred_check
        %p322 = pneg %p107
      $region22: #{conv2d_model_forward.1} parent=11 // pred_check_branch
        %324 = sbr.rel (%p322) target = $region24
      $region23: #{conv2d_model_forward.1} parent=11 // pred_region
        _
      $region24: #{conv2d_model_forward.1} parent=11 // pred_fallthru
        _
      // Predicated region
      $region25: #{conv2d_model_forward.1} parent=11 // pred_check
        %p325 = pneg %p128
      $region26: #{conv2d_model_forward.1} parent=11 // pred_check_branch
        %327 = sbr.rel (%p325) target = $region28
      $region27: #{conv2d_model_forward.1} parent=11 // pred_region
        _
      $region28: #{conv2d_model_forward.1} parent=11 // pred_fallthru
        _
      // Predicated region
      $region29: #{conv2d_model_forward.1} parent=11 // pred_check
        %p328 = pneg %p149
      $region30: #{conv2d_model_forward.1} parent=11 // pred_check_branch
        %330 = sbr.rel (%p328) target = $region32
      $region31: #{conv2d_model_forward.1} parent=11 // pred_region
        _
      $region32: #{conv2d_model_forward.1} parent=11 // pred_fallthru
        _
      // Predicated region
      $region33: #{conv2d_model_forward.1} parent=11 // pred_check
        %p331 = pneg %p170
      $region34: #{conv2d_model_forward.1} parent=11 // pred_check_branch
        %333 = sbr.rel (%p331) target = $region36
      $region35: #{conv2d_model_forward.1} parent=11 // pred_region
        _
      $region36: #{conv2d_model_forward.1} parent=11 // pred_fallthru
        _
      // Predicated region
      $region37: #{conv2d_model_forward.1} parent=11 // pred_check
        %p334 = pneg %p191
      $region38: #{conv2d_model_forward.1} parent=11 // pred_check_branch
        %336 = sbr.rel (%p334) target = $region40
      $region39: #{conv2d_model_forward.1} parent=11 // pred_region
        _
      $region40: #{conv2d_model_forward.1} parent=11 // pred_fallthru
        _
      // Predicated region
      $region41: #{conv2d_model_forward.1} parent=11 // pred_check
        %p337 = pneg %p212
      $region42: #{conv2d_model_forward.1} parent=11 // pred_check_branch
        %339 = sbr.rel (%p337) target = $region44
      $region43: #{conv2d_model_forward.1} parent=11 // pred_region
        _
      $region44: #{conv2d_model_forward.1} parent=11 // pred_fallthru
        _
      // Predicated region
      $region45: #{conv2d_model_forward.1} parent=11 // pred_check
        %p340 = pneg %p233
      $region46: #{conv2d_model_forward.1} parent=11 // pred_check_branch
        %342 = sbr.rel (%p340) target = $region48
      $region47: #{conv2d_model_forward.1} parent=11 // pred_region
        _
      $region48: #{conv2d_model_forward.1} parent=11 // pred_fallthru
        _
      // Predicated region
      $region49: #{conv2d_model_forward.1} parent=11 // pred_check
        %p343 = pneg %p254
      $region50: #{conv2d_model_forward.1} parent=11 // pred_check_branch
        %345 = sbr.rel (%p343) target = $region52
      $region51: #{conv2d_model_forward.1} parent=11 // pred_region
        _
      $region52: #{conv2d_model_forward.1} parent=11 // pred_fallthru
        _
      // Predicated region
      $region53: #{conv2d_model_forward.1} parent=11 // pred_check
        %p346 = pneg %p275
      $region54: #{conv2d_model_forward.1} parent=11 // pred_check_branch
        %348 = sbr.rel (%p346) target = $region56
      $region55: #{conv2d_model_forward.1} parent=11 // pred_region
        _
      $region56: #{conv2d_model_forward.1} parent=11 // pred_fallthru
        _
    $region12: #{conv2d_model_forward.1} parent=5 // pred_fallthru
      _
    %p349 = scmp.lt.s32.totalorder %s18, 2
    // Predicated region
    $region57: #{conv2d_model_forward.1} parent=5 // pred_check
      %p350 = pneg %p349
    $region58: #{conv2d_model_forward.1} parent=5 // pred_check_branch
      %352 = sbr.rel (%p350) target = $region60
    $region59: #{conv2d_model_forward.1} parent=5 // pred_region
      // Predicated region
      $region61: #{conv2d_model_forward.1} parent=59 // pred_check
        %p353 = pneg %p38
      $region62: #{conv2d_model_forward.1} parent=59 // pred_check_branch
        %355 = sbr.rel (%p353) target = $region64
      $region63: #{conv2d_model_forward.1} parent=59 // pred_region
        %p356 = scmp.lt.s32.totalorder %s18, 1
        %s357 = scalar_select %p356, %s18, 1
        %s358 = smul.addr %s357, 8
        %s359 = smul.addr %s358, 8
        %s360 = scalar_lea.vmem %s0, %s359
      $region64: #{conv2d_model_forward.1} parent=59 // pred_fallthru
        _
    $region60: #{conv2d_model_forward.1} parent=5 // pred_fallthru
      _
    %p361 = scmp.le.s32.totalorder 1, %s18
    %p362 = scmp.lt.s32.totalorder %s18, 3
    %p363 = pnand %p361, %p362
    %p364 = pneg %p363
    // Predicated region
    $region65: #{conv2d_model_forward.1} parent=5 // pred_check
      _
    $region66: #{conv2d_model_forward.1} parent=5 // pred_check_branch
      %366 = sbr.rel (%p363) target = $region68
    $region67: #{conv2d_model_forward.1} parent=5 // pred_region
      %s367 = ssub.s32 %s18, 1
      %p368 = scmp.lt.s32.totalorder %s23, 1
      %s369 = scalar_select %p368, %s23, 1
      %s370 = smul.addr %s369, 8
      %s371 = smul.addr %s370, 8
      %s372 = scalar_lea.vmem %s0, %s371
      %p373 = pneg %p44
      %p374 = pneg %p41
      %p375 = pneg %p65
      %p376 = pneg %p62
      %p377 = pneg %p86
      %p378 = pneg %p83
      %p379 = pneg %p107
      %p380 = pneg %p104
      %p381 = pneg %p128
      %p382 = pneg %p125
      %p383 = pneg %p149
      %p384 = pneg %p146
      %p385 = pneg %p170
      %p386 = pneg %p167
      %p387 = pneg %p191
      %p388 = pneg %p188
      %p389 = pneg %p212
      %p390 = pneg %p209
      %p391 = pneg %p233
      %p392 = pneg %p230
      %p393 = pneg %p254
      %p394 = pneg %p251
      %p395 = pneg %p275
      %p396 = pneg %p272
      %p397 = pneg %p301
      %p398 = pneg %p298
      %p399 = scmp.lt.s32.totalorder %s23, 1
      %s400 = scalar_select %p399, %s23, 1
      %s401 = smul.addr %s400, 8
      %s402 = smul.addr %s401, 8
      %s403 = scalar_lea.vmem %s12, %s402
      %p404 = scmp.lt.s32.totalorder %s23, 1
      %s405 = scalar_select %p404, %s23, 1
      %s406 = smul.addr %s405, 8
      %s407 = smul.addr %s406, 8
      %s408 = scalar_lea.vmem %s0, %s407
      %p409 = scmp.lt.s32.totalorder %s23, 1
      %s410 = scalar_select %p409, %s23, 1
      %s411 = smul.addr %s410, 8
      %s412 = smul.addr %s411, 8
      %s413 = scalar_lea.vmem %s12, %s412
      %v415 = vld [vmem:[%s408] sm:$0xff]
      %v416 = vld [vmem:[%s408 + $0x8] sm:$0xff]
      %v417 = vld [vmem:[%s408 + $0x10] sm:$0xff]
      %v418 = vld [vmem:[%s408 + $0x18] sm:$0xff]
      %v419 = vld [vmem:[%s408 + $0x20] sm:$0xff]
      %v420 = vld [vmem:[%s408 + $0x28] sm:$0xff]
      %v421 = vld [vmem:[%s408 + $0x30] sm:$0xff]
      %v422 = vld [vmem:[%s408 + $0x38] sm:$0xff]
      %v423 = vld [vmem:[%s8] sm:$0xff]
      %v424 = vld [vmem:[%s8 + $0x8] sm:$0xff]
      %v425 = vld [vmem:[%s8 + $0x10] sm:$0xff]
      %v426 = vld [vmem:[%s8 + $0x18] sm:$0xff]
      %v427 = vld [vmem:[%s8 + $0x20] sm:$0xff]
      %v428 = vld [vmem:[%s8 + $0x28] sm:$0xff]
      %v429 = vld [vmem:[%s8 + $0x30] sm:$0xff]
      %v430 = vld [vmem:[%s8 + $0x38] sm:$0xff]
      %v431 = vld [vmem:[%s8 + $0x40] sm:$0x1]
      %v432 = vld [vmem:[%s8 + $0x48] sm:$0x1]
      %v433 = vld [vmem:[%s8 + $0x50] sm:$0x1]
      %v434 = vld [vmem:[%s8 + $0x58] sm:$0x1]
      %v435 = vld [vmem:[%s8 + $0x60] sm:$0x1]
      %v436 = vld [vmem:[%s8 + $0x68] sm:$0x1]
      %v437 = vld [vmem:[%s8 + $0x70] sm:$0x1]
      %v438 = vld [vmem:[%s8 + $0x78] sm:$0x1]
      %v439 = vld [vmem:[%s1] sm:$0xf]
      %440 = vrot.lane.b32.xlu0 %v415, 17
      %v441 = vpop.permute.xlu0 %440
      %442 = vrot.lane.b32.xlu0 %v416, 17
      %v443 = vpop.permute.xlu0 %442
      %444 = vrot.lane.b32.xlu0 %v417, 17
      %v445 = vpop.permute.xlu0 %444
      %446 = vrot.lane.b32.xlu0 %v418, 17
      %v447 = vpop.permute.xlu0 %446
      %448 = vrot.lane.b32.xlu0 %v419, 17
      %v449 = vpop.permute.xlu0 %448
      %450 = vrot.lane.b32.xlu0 %v420, 17
      %v451 = vpop.permute.xlu0 %450
      %452 = vrot.lane.b32.xlu0 %v421, 17
      %v453 = vpop.permute.xlu0 %452
      %454 = vrot.lane.b32.xlu0 %v422, 17
      %v455 = vpop.permute.xlu0 %454
      %v456 = vlaneseq
      %v457 = vand.u32 %v456, 127
      %vm458 = vcmp.lt.s32.totalorder %v457, 17
      %v459 = vsel %vm458, %v453, %v455
      %v460 = vsel %vm458, %v451, %v453
      %v461 = vsel %vm458, %v449, %v451
      %v462 = vsel %vm458, %v447, %v449
      %v463 = vsel %vm458, %v445, %v447
      %v464 = vsel %vm458, %v443, %v445
      %v465 = vsel %vm458, %v441, %v443
      %v466 = vsel %vm458, %v455, %v441
      %v467 = vlaneseq
      %v468 = vshrl.u32 %v467, 7
      %v469 = vsub.s32 0, %v468
      %v470 = vrot.slane %v423, %v469
      %v471 = vlaneseq
      %v472 = vshrl.u32 %v471, 7
      %v473 = vsub.s32 0, %v472
      %v474 = vrot.slane %v424, %v473
      %v475 = vlaneseq
      %v476 = vshrl.u32 %v475, 7
      %v477 = vsub.s32 0, %v476
      %v478 = vrot.slane %v425, %v477
      %v479 = vlaneseq
      %v480 = vshrl.u32 %v479, 7
      %v481 = vsub.s32 0, %v480
      %v482 = vrot.slane %v426, %v481
      %v483 = vlaneseq
      %v484 = vshrl.u32 %v483, 7
      %v485 = vsub.s32 0, %v484
      %v486 = vrot.slane %v427, %v485
      %v487 = vlaneseq
      %v488 = vshrl.u32 %v487, 7
      %v489 = vsub.s32 0, %v488
      %v490 = vrot.slane %v428, %v489
      %v491 = vlaneseq
      %v492 = vshrl.u32 %v491, 7
      %v493 = vsub.s32 0, %v492
      %v494 = vrot.slane %v429, %v493
      %v495 = vlaneseq
      %v496 = vshrl.u32 %v495, 7
      %v497 = vsub.s32 0, %v496
      %v498 = vrot.slane %v430, %v497
      %v499 = vmul.f32 %v466, %v470
      %v500 = vmul.f32 %v465, %v474
      %v501 = vmul.f32 %v464, %v478
      %v502 = vmul.f32 %v463, %v482
      %v503 = vmul.f32 %v462, %v486
      %v504 = vmul.f32 %v461, %v490
      %v505 = vmul.f32 %v460, %v494
      %v506 = vmul.f32 %v459, %v498
      %507 = vrot.lane.b32.xlu0 %v415, 16
      %v508 = vpop.permute.xlu0 %507
      %509 = vrot.lane.b32.xlu0 %v416, 16
      %v510 = vpop.permute.xlu0 %509
      %511 = vrot.lane.b32.xlu0 %v417, 16
      %v512 = vpop.permute.xlu0 %511
      %513 = vrot.lane.b32.xlu0 %v418, 16
      %v514 = vpop.permute.xlu0 %513
      %515 = vrot.lane.b32.xlu0 %v419, 16
      %v516 = vpop.permute.xlu0 %515
      %517 = vrot.lane.b32.xlu0 %v420, 16
      %v518 = vpop.permute.xlu0 %517
      %519 = vrot.lane.b32.xlu0 %v421, 16
      %v520 = vpop.permute.xlu0 %519
      %521 = vrot.lane.b32.xlu0 %v422, 16
      %v522 = vpop.permute.xlu0 %521
      %vm523 = vcmp.lt.s32.totalorder %v457, 16
      %v524 = vsel %vm523, %v520, %v522
      %v525 = vsel %vm523, %v518, %v520
      %v526 = vsel %vm523, %v516, %v518
      %v527 = vsel %vm523, %v514, %v516
      %v528 = vsel %vm523, %v512, %v514
      %v529 = vsel %vm523, %v510, %v512
      %v530 = vsel %vm523, %v508, %v510
      %v531 = vsel %vm523, %v522, %v508
      %v532 = vlaneseq
      %v533 = vshrl.u32 %v532, 7
      %v534 = vsub.s32 1, %v533
      %v535 = vrot.slane %v423, %v534
      %v536 = vlaneseq
      %v537 = vshrl.u32 %v536, 7
      %v538 = vsub.s32 1, %v537
      %v539 = vrot.slane %v424, %v538
      %v540 = vlaneseq
      %v541 = vshrl.u32 %v540, 7
      %v542 = vsub.s32 1, %v541
      %v543 = vrot.slane %v425, %v542
      %v544 = vlaneseq
      %v545 = vshrl.u32 %v544, 7
      %v546 = vsub.s32 1, %v545
      %v547 = vrot.slane %v426, %v546
      %v548 = vlaneseq
      %v549 = vshrl.u32 %v548, 7
      %v550 = vsub.s32 1, %v549
      %v551 = vrot.slane %v427, %v550
      %v552 = vlaneseq
      %v553 = vshrl.u32 %v552, 7
      %v554 = vsub.s32 1, %v553
      %v555 = vrot.slane %v428, %v554
      %v556 = vlaneseq
      %v557 = vshrl.u32 %v556, 7
      %v558 = vsub.s32 1, %v557
      %v559 = vrot.slane %v429, %v558
      %v560 = vlaneseq
      %v561 = vshrl.u32 %v560, 7
      %v562 = vsub.s32 1, %v561
      %v563 = vrot.slane %v430, %v562
      %v564 = vmul.f32 %v531, %v535
      %v565 = vmul.f32 %v530, %v539
      %v566 = vmul.f32 %v529, %v543
      %v567 = vmul.f32 %v528, %v547
      %v568 = vmul.f32 %v527, %v551
      %v569 = vmul.f32 %v526, %v555
      %v570 = vmul.f32 %v525, %v559
      %v571 = vmul.f32 %v524, %v563
      %572 = vrot.lane.b32.xlu0 %v415, 15
      %v573 = vpop.permute.xlu0 %572
      %574 = vrot.lane.b32.xlu0 %v416, 15
      %v575 = vpop.permute.xlu0 %574
      %576 = vrot.lane.b32.xlu0 %v417, 15
      %v577 = vpop.permute.xlu0 %576
      %578 = vrot.lane.b32.xlu0 %v418, 15
      %v579 = vpop.permute.xlu0 %578
      %580 = vrot.lane.b32.xlu0 %v419, 15
      %v581 = vpop.permute.xlu0 %580
      %582 = vrot.lane.b32.xlu0 %v420, 15
      %v583 = vpop.permute.xlu0 %582
      %584 = vrot.lane.b32.xlu0 %v421, 15
      %v585 = vpop.permute.xlu0 %584
      %586 = vrot.lane.b32.xlu0 %v422, 15
      %v587 = vpop.permute.xlu0 %586
      %vm588 = vcmp.lt.s32.totalorder %v457, 15
      %v589 = vsel %vm588, %v585, %v587
      %v590 = vsel %vm588, %v583, %v585
      %v591 = vsel %vm588, %v581, %v583
      %v592 = vsel %vm588, %v579, %v581
      %v593 = vsel %vm588, %v577, %v579
      %v594 = vsel %vm588, %v575, %v577
      %v595 = vsel %vm588, %v573, %v575
      %v596 = vsel %vm588, %v587, %v573
      %v597 = vlaneseq
      %v598 = vshrl.u32 %v597, 7
      %v599 = vsub.s32 2, %v598
      %v600 = vrot.slane %v423, %v599
      %v601 = vlaneseq
      %v602 = vshrl.u32 %v601, 7
      %v603 = vsub.s32 2, %v602
      %v604 = vrot.slane %v424, %v603
      %v605 = vlaneseq
      %v606 = vshrl.u32 %v605, 7
      %v607 = vsub.s32 2, %v606
      %v608 = vrot.slane %v425, %v607
      %v609 = vlaneseq
      %v610 = vshrl.u32 %v609, 7
      %v611 = vsub.s32 2, %v610
      %v612 = vrot.slane %v426, %v611
      %v613 = vlaneseq
      %v614 = vshrl.u32 %v613, 7
      %v615 = vsub.s32 2, %v614
      %v616 = vrot.slane %v427, %v615
      %v617 = vlaneseq
      %v618 = vshrl.u32 %v617, 7
      %v619 = vsub.s32 2, %v618
      %v620 = vrot.slane %v428, %v619
      %v621 = vlaneseq
      %v622 = vshrl.u32 %v621, 7
      %v623 = vsub.s32 2, %v622
      %v624 = vrot.slane %v429, %v623
      %v625 = vlaneseq
      %v626 = vshrl.u32 %v625, 7
      %v627 = vsub.s32 2, %v626
      %v628 = vrot.slane %v430, %v627
      %v629 = vmul.f32 %v596, %v600
      %v630 = vmul.f32 %v595, %v604
      %v631 = vmul.f32 %v594, %v608
      %v632 = vmul.f32 %v593, %v612
      %v633 = vmul.f32 %v592, %v616
      %v634 = vmul.f32 %v591, %v620
      %v635 = vmul.f32 %v590, %v624
      %v636 = vmul.f32 %v589, %v628
      %637 = vrot.lane.b32.xlu0 %v415, 1
      %v638 = vpop.permute.xlu0 %637
      %639 = vrot.lane.b32.xlu0 %v416, 1
      %v640 = vpop.permute.xlu0 %639
      %641 = vrot.lane.b32.xlu0 %v417, 1
      %v642 = vpop.permute.xlu0 %641
      %643 = vrot.lane.b32.xlu0 %v418, 1
      %v644 = vpop.permute.xlu0 %643
      %645 = vrot.lane.b32.xlu0 %v419, 1
      %v646 = vpop.permute.xlu0 %645
      %647 = vrot.lane.b32.xlu0 %v420, 1
      %v648 = vpop.permute.xlu0 %647
      %649 = vrot.lane.b32.xlu0 %v421, 1
      %v650 = vpop.permute.xlu0 %649
      %651 = vrot.lane.b32.xlu0 %v422, 1
      %v652 = vpop.permute.xlu0 %651
      %vm653 = vcmp.lt.s32.totalorder %v457, 1
      %v654 = vsel %vm653, %v650, %v652
      %v655 = vsel %vm653, %v648, %v650
      %v656 = vsel %vm653, %v646, %v648
      %v657 = vsel %vm653, %v644, %v646
      %v658 = vsel %vm653, %v642, %v644
      %v659 = vsel %vm653, %v640, %v642
      %v660 = vsel %vm653, %v638, %v640
      %v661 = vsel %vm653, %v652, %v638
      %v662 = vlaneseq
      %v663 = vshrl.u32 %v662, 7
      %v664 = vsub.s32 3, %v663
      %v665 = vrot.slane %v423, %v664
      %v666 = vlaneseq
      %v667 = vshrl.u32 %v666, 7
      %v668 = vsub.s32 3, %v667
      %v669 = vrot.slane %v424, %v668
      %v670 = vlaneseq
      %v671 = vshrl.u32 %v670, 7
      %v672 = vsub.s32 3, %v671
      %v673 = vrot.slane %v425, %v672
      %v674 = vlaneseq
      %v675 = vshrl.u32 %v674, 7
      %v676 = vsub.s32 3, %v675
      %v677 = vrot.slane %v426, %v676
      %v678 = vlaneseq
      %v679 = vshrl.u32 %v678, 7
      %v680 = vsub.s32 3, %v679
      %v681 = vrot.slane %v427, %v680
      %v682 = vlaneseq
      %v683 = vshrl.u32 %v682, 7
      %v684 = vsub.s32 3, %v683
      %v685 = vrot.slane %v428, %v684
      %v686 = vlaneseq
      %v687 = vshrl.u32 %v686, 7
      %v688 = vsub.s32 3, %v687
      %v689 = vrot.slane %v429, %v688
      %v690 = vlaneseq
      %v691 = vshrl.u32 %v690, 7
      %v692 = vsub.s32 3, %v691
      %v693 = vrot.slane %v430, %v692
      %v694 = vmul.f32 %v661, %v665
      %v695 = vmul.f32 %v660, %v669
      %v696 = vmul.f32 %v659, %v673
      %v697 = vmul.f32 %v658, %v677
      %v698 = vmul.f32 %v657, %v681
      %v699 = vmul.f32 %v656, %v685
      %v700 = vmul.f32 %v655, %v689
      %v701 = vmul.f32 %v654, %v693
      %v702 = vlaneseq
      %v703 = vshrl.u32 %v702, 7
      %v704 = vsub.s32 4, %v703
      %v705 = vrot.slane %v423, %v704
      %v706 = vlaneseq
      %v707 = vshrl.u32 %v706, 7
      %v708 = vsub.s32 4, %v707
      %v709 = vrot.slane %v424, %v708
      %v710 = vlaneseq
      %v711 = vshrl.u32 %v710, 7
      %v712 = vsub.s32 4, %v711
      %v713 = vrot.slane %v425, %v712
      %v714 = vlaneseq
      %v715 = vshrl.u32 %v714, 7
      %v716 = vsub.s32 4, %v715
      %v717 = vrot.slane %v426, %v716
      %v718 = vlaneseq
      %v719 = vshrl.u32 %v718, 7
      %v720 = vsub.s32 4, %v719
      %v721 = vrot.slane %v427, %v720
      %v722 = vlaneseq
      %v723 = vshrl.u32 %v722, 7
      %v724 = vsub.s32 4, %v723
      %v725 = vrot.slane %v428, %v724
      %v726 = vlaneseq
      %v727 = vshrl.u32 %v726, 7
      %v728 = vsub.s32 4, %v727
      %v729 = vrot.slane %v429, %v728
      %v730 = vlaneseq
      %v731 = vshrl.u32 %v730, 7
      %v732 = vsub.s32 4, %v731
      %v733 = vrot.slane %v430, %v732
      %v734 = vmul.f32 %v415, %v705
      %v735 = vmul.f32 %v416, %v709
      %v736 = vmul.f32 %v417, %v713
      %v737 = vmul.f32 %v418, %v717
      %v738 = vmul.f32 %v419, %v721
      %v739 = vmul.f32 %v420, %v725
      %v740 = vmul.f32 %v421, %v729
      %v741 = vmul.f32 %v422, %v733
      %742 = vrot.lane.b32.xlu0 %v415, 127
      %v743 = vpop.permute.xlu0 %742
      %744 = vrot.lane.b32.xlu0 %v416, 127
      %v745 = vpop.permute.xlu0 %744
      %746 = vrot.lane.b32.xlu0 %v417, 127
      %v747 = vpop.permute.xlu0 %746
      %748 = vrot.lane.b32.xlu0 %v418, 127
      %v749 = vpop.permute.xlu0 %748
      %750 = vrot.lane.b32.xlu0 %v419, 127
      %v751 = vpop.permute.xlu0 %750
      %752 = vrot.lane.b32.xlu0 %v420, 127
      %v753 = vpop.permute.xlu0 %752
      %754 = vrot.lane.b32.xlu0 %v421, 127
      %v755 = vpop.permute.xlu0 %754
      %756 = vrot.lane.b32.xlu0 %v422, 127
      %v757 = vpop.permute.xlu0 %756
      %vm758 = vcmp.lt.s32.totalorder %v457, 127
      %v759 = vsel %vm758, %v755, %v757
      %v760 = vsel %vm758, %v753, %v755
      %v761 = vsel %vm758, %v751, %v753
      %v762 = vsel %vm758, %v749, %v751
      %v763 = vsel %vm758, %v747, %v749
      %v764 = vsel %vm758, %v745, %v747
      %v765 = vsel %vm758, %v743, %v745
      %v766 = vsel %vm758, %v757, %v743
      %v767 = vlaneseq
      %v768 = vshrl.u32 %v767, 7
      %v769 = vsub.s32 5, %v768
      %v770 = vrot.slane %v423, %v769
      %v771 = vlaneseq
      %v772 = vshrl.u32 %v771, 7
      %v773 = vsub.s32 5, %v772
      %v774 = vrot.slane %v424, %v773
      %v775 = vlaneseq
      %v776 = vshrl.u32 %v775, 7
      %v777 = vsub.s32 5, %v776
      %v778 = vrot.slane %v425, %v777
      %v779 = vlaneseq
      %v780 = vshrl.u32 %v779, 7
      %v781 = vsub.s32 5, %v780
      %v782 = vrot.slane %v426, %v781
      %v783 = vlaneseq
      %v784 = vshrl.u32 %v783, 7
      %v785 = vsub.s32 5, %v784
      %v786 = vrot.slane %v427, %v785
      %v787 = vlaneseq
      %v788 = vshrl.u32 %v787, 7
      %v789 = vsub.s32 5, %v788
      %v790 = vrot.slane %v428, %v789
      %v791 = vlaneseq
      %v792 = vshrl.u32 %v791, 7
      %v793 = vsub.s32 5, %v792
      %v794 = vrot.slane %v429, %v793
      %v795 = vlaneseq
      %v796 = vshrl.u32 %v795, 7
      %v797 = vsub.s32 5, %v796
      %v798 = vrot.slane %v430, %v797
      %v799 = vmul.f32 %v765, %v770
      %v800 = vmul.f32 %v764, %v774
      %v801 = vmul.f32 %v763, %v778
      %v802 = vmul.f32 %v762, %v782
      %v803 = vmul.f32 %v761, %v786
      %v804 = vmul.f32 %v760, %v790
      %v805 = vmul.f32 %v759, %v794
      %v806 = vmul.f32 %v766, %v798
      %807 = vrot.lane.b32.xlu0 %v415, 113
      %v808 = vpop.permute.xlu0 %807
      %809 = vrot.lane.b32.xlu0 %v416, 113
      %v810 = vpop.permute.xlu0 %809
      %811 = vrot.lane.b32.xlu0 %v417, 113
      %v812 = vpop.permute.xlu0 %811
      %813 = vrot.lane.b32.xlu0 %v418, 113
      %v814 = vpop.permute.xlu0 %813
      %815 = vrot.lane.b32.xlu0 %v419, 113
      %v816 = vpop.permute.xlu0 %815
      %817 = vrot.lane.b32.xlu0 %v420, 113
      %v818 = vpop.permute.xlu0 %817
      %819 = vrot.lane.b32.xlu0 %v421, 113
      %v820 = vpop.permute.xlu0 %819
      %821 = vrot.lane.b32.xlu0 %v422, 113
      %v822 = vpop.permute.xlu0 %821
      %vm823 = vcmp.lt.s32.totalorder %v457, 113
      %v824 = vsel %vm823, %v820, %v822
      %v825 = vsel %vm823, %v818, %v820
      %v826 = vsel %vm823, %v816, %v818
      %v827 = vsel %vm823, %v814, %v816
      %v828 = vsel %vm823, %v812, %v814
      %v829 = vsel %vm823, %v810, %v812
      %v830 = vsel %vm823, %v808, %v810
      %v831 = vsel %vm823, %v822, %v808
      %v832 = vlaneseq
      %v833 = vshrl.u32 %v832, 7
      %v834 = vsub.s32 6, %v833
      %v835 = vrot.slane %v423, %v834
      %v836 = vlaneseq
      %v837 = vshrl.u32 %v836, 7
      %v838 = vsub.s32 6, %v837
      %v839 = vrot.slane %v424, %v838
      %v840 = vlaneseq
      %v841 = vshrl.u32 %v840, 7
      %v842 = vsub.s32 6, %v841
      %v843 = vrot.slane %v425, %v842
      %v844 = vlaneseq
      %v845 = vshrl.u32 %v844, 7
      %v846 = vsub.s32 6, %v845
      %v847 = vrot.slane %v426, %v846
      %v848 = vlaneseq
      %v849 = vshrl.u32 %v848, 7
      %v850 = vsub.s32 6, %v849
      %v851 = vrot.slane %v427, %v850
      %v852 = vlaneseq
      %v853 = vshrl.u32 %v852, 7
      %v854 = vsub.s32 6, %v853
      %v855 = vrot.slane %v428, %v854
      %v856 = vlaneseq
      %v857 = vshrl.u32 %v856, 7
      %v858 = vsub.s32 6, %v857
      %v859 = vrot.slane %v429, %v858
      %v860 = vlaneseq
      %v861 = vshrl.u32 %v860, 7
      %v862 = vsub.s32 6, %v861
      %v863 = vrot.slane %v430, %v862
      %v864 = vmul.f32 %v830, %v835
      %v865 = vmul.f32 %v829, %v839
      %v866 = vmul.f32 %v828, %v843
      %v867 = vmul.f32 %v827, %v847
      %v868 = vmul.f32 %v826, %v851
      %v869 = vmul.f32 %v825, %v855
      %v870 = vmul.f32 %v824, %v859
      %v871 = vmul.f32 %v831, %v863
      %872 = vrot.lane.b32.xlu0 %v415, 112
      %v873 = vpop.permute.xlu0 %872
      %874 = vrot.lane.b32.xlu0 %v416, 112
      %v875 = vpop.permute.xlu0 %874
      %876 = vrot.lane.b32.xlu0 %v417, 112
      %v877 = vpop.permute.xlu0 %876
      %878 = vrot.lane.b32.xlu0 %v418, 112
      %v879 = vpop.permute.xlu0 %878
      %880 = vrot.lane.b32.xlu0 %v419, 112
      %v881 = vpop.permute.xlu0 %880
      %882 = vrot.lane.b32.xlu0 %v420, 112
      %v883 = vpop.permute.xlu0 %882
      %884 = vrot.lane.b32.xlu0 %v421, 112
      %v885 = vpop.permute.xlu0 %884
      %886 = vrot.lane.b32.xlu0 %v422, 112
      %v887 = vpop.permute.xlu0 %886
      %vm888 = vcmp.lt.s32.totalorder %v457, 112
      %v889 = vsel %vm888, %v885, %v887
      %v890 = vsel %vm888, %v883, %v885
      %v891 = vsel %vm888, %v881, %v883
      %v892 = vsel %vm888, %v879, %v881
      %v893 = vsel %vm888, %v877, %v879
      %v894 = vsel %vm888, %v875, %v877
      %v895 = vsel %vm888, %v873, %v875
      %v896 = vsel %vm888, %v887, %v873
      %v897 = vlaneseq
      %v898 = vshrl.u32 %v897, 7
      %v899 = vsub.s32 7, %v898
      %v900 = vrot.slane %v423, %v899
      %v901 = vlaneseq
      %v902 = vshrl.u32 %v901, 7
      %v903 = vsub.s32 7, %v902
      %v904 = vrot.slane %v424, %v903
      %v905 = vlaneseq
      %v906 = vshrl.u32 %v905, 7
      %v907 = vsub.s32 7, %v906
      %v908 = vrot.slane %v425, %v907
      %v909 = vlaneseq
      %v910 = vshrl.u32 %v909, 7
      %v911 = vsub.s32 7, %v910
      %v912 = vrot.slane %v426, %v911
      %v913 = vlaneseq
      %v914 = vshrl.u32 %v913, 7
      %v915 = vsub.s32 7, %v914
      %v916 = vrot.slane %v427, %v915
      %v917 = vlaneseq
      %v918 = vshrl.u32 %v917, 7
      %v919 = vsub.s32 7, %v918
      %v920 = vrot.slane %v428, %v919
      %v921 = vlaneseq
      %v922 = vshrl.u32 %v921, 7
      %v923 = vsub.s32 7, %v922
      %v924 = vrot.slane %v429, %v923
      %v925 = vlaneseq
      %v926 = vshrl.u32 %v925, 7
      %v927 = vsub.s32 7, %v926
      %v928 = vrot.slane %v430, %v927
      %v929 = vmul.f32 %v895, %v900
      %v930 = vmul.f32 %v894, %v904
      %v931 = vmul.f32 %v893, %v908
      %v932 = vmul.f32 %v892, %v912
      %v933 = vmul.f32 %v891, %v916
      %v934 = vmul.f32 %v890, %v920
      %v935 = vmul.f32 %v889, %v924
      %v936 = vmul.f32 %v896, %v928
      %937 = vrot.lane.b32.xlu0 %v415, 111
      %v938 = vpop.permute.xlu0 %937
      %939 = vrot.lane.b32.xlu0 %v416, 111
      %v940 = vpop.permute.xlu0 %939
      %941 = vrot.lane.b32.xlu0 %v417, 111
      %v942 = vpop.permute.xlu0 %941
      %943 = vrot.lane.b32.xlu0 %v418, 111
      %v944 = vpop.permute.xlu0 %943
      %945 = vrot.lane.b32.xlu0 %v419, 111
      %v946 = vpop.permute.xlu0 %945
      %947 = vrot.lane.b32.xlu0 %v420, 111
      %v948 = vpop.permute.xlu0 %947
      %949 = vrot.lane.b32.xlu0 %v421, 111
      %v950 = vpop.permute.xlu0 %949
      %951 = vrot.lane.b32.xlu0 %v422, 111
      %v952 = vpop.permute.xlu0 %951
      %vm953 = vcmp.lt.s32.totalorder %v457, 111
      %v954 = vsel %vm953, %v950, %v952
      %v955 = vsel %vm953, %v948, %v950
      %v956 = vsel %vm953, %v946, %v948
      %v957 = vsel %vm953, %v944, %v946
      %v958 = vsel %vm953, %v942, %v944
      %v959 = vsel %vm953, %v940, %v942
      %v960 = vsel %vm953, %v938, %v940
      %v961 = vsel %vm953, %v952, %v938
      %v962 = vlaneseq
      %v963 = vshrl.u32 %v962, 7
      %v964 = vsub.s32 0, %v963
      %v965 = vrot.slane %v431, %v964
      %v966 = vlaneseq
      %v967 = vshrl.u32 %v966, 7
      %v968 = vsub.s32 0, %v967
      %v969 = vrot.slane %v432, %v968
      %v970 = vlaneseq
      %v971 = vshrl.u32 %v970, 7
      %v972 = vsub.s32 0, %v971
      %v973 = vrot.slane %v433, %v972
      %v974 = vlaneseq
      %v975 = vshrl.u32 %v974, 7
      %v976 = vsub.s32 0, %v975
      %v977 = vrot.slane %v434, %v976
      %v978 = vlaneseq
      %v979 = vshrl.u32 %v978, 7
      %v980 = vsub.s32 0, %v979
      %v981 = vrot.slane %v435, %v980
      %v982 = vlaneseq
      %v983 = vshrl.u32 %v982, 7
      %v984 = vsub.s32 0, %v983
      %v985 = vrot.slane %v436, %v984
      %v986 = vlaneseq
      %v987 = vshrl.u32 %v986, 7
      %v988 = vsub.s32 0, %v987
      %v989 = vrot.slane %v437, %v988
      %v990 = vlaneseq
      %v991 = vshrl.u32 %v990, 7
      %v992 = vsub.s32 0, %v991
      %v993 = vrot.slane %v438, %v992
      %v994 = vmul.f32 %v960, %v965
      %v995 = vmul.f32 %v959, %v969
      %v996 = vmul.f32 %v958, %v973
      %v997 = vmul.f32 %v957, %v977
      %v998 = vmul.f32 %v956, %v981
      %v999 = vmul.f32 %v955, %v985
      %v1000 = vmul.f32 %v954, %v989
      %v1001 = vmul.f32 %v961, %v993
      %v1002 = vpack.c.bf16 %v564, %v499
      %v1003 = vpack.c.bf16 %v565, %v500
      %v1004 = vpack.c.bf16 %v566, %v501
      %v1005 = vpack.c.bf16 %v567, %v502
      %v1006 = vpack.c.bf16 %v568, %v503
      %v1007 = vpack.c.bf16 %v569, %v504
      %v1008 = vpack.c.bf16 %v570, %v505
      %v1009 = vpack.c.bf16 %v571, %v506
      %v1010 = vpack.c.bf16 %v694, %v629
      %v1011 = vpack.c.bf16 %v695, %v630
      %v1012 = vpack.c.bf16 %v696, %v631
      %v1013 = vpack.c.bf16 %v697, %v632
      %v1014 = vpack.c.bf16 %v698, %v633
      %v1015 = vpack.c.bf16 %v699, %v634
      %v1016 = vpack.c.bf16 %v700, %v635
      %v1017 = vpack.c.bf16 %v701, %v636
      %v1018 = vpack.c.bf16 %v799, %v734
      %v1019 = vpack.c.bf16 %v800, %v735
      %v1020 = vpack.c.bf16 %v801, %v736
      %v1021 = vpack.c.bf16 %v802, %v737
      %v1022 = vpack.c.bf16 %v803, %v738
      %v1023 = vpack.c.bf16 %v804, %v739
      %v1024 = vpack.c.bf16 %v805, %v740
      %v1025 = vpack.c.bf16 %v806, %v741
      %v1026 = vpack.c.bf16 %v929, %v864
      %v1027 = vpack.c.bf16 %v930, %v865
      %v1028 = vpack.c.bf16 %v931, %v866
      %v1029 = vpack.c.bf16 %v932, %v867
      %v1030 = vpack.c.bf16 %v933, %v868
      %v1031 = vpack.c.bf16 %v934, %v869
      %v1032 = vpack.c.bf16 %v935, %v870
      %v1033 = vpack.c.bf16 %v936, %v871
      %v1034 = vpack.c.bf16 1.0, %v994
      %v1035 = vpack.c.bf16 1.0, %v995
      %v1036 = vpack.c.bf16 1.0, %v996
      %v1037 = vpack.c.bf16 1.0, %v997
      %v1038 = vpack.c.bf16 1.0, %v998
      %v1039 = vpack.c.bf16 1.0, %v999
      %v1040 = vpack.c.bf16 1.0, %v1000
      %v1041 = vpack.c.bf16 1.0, %v1001
      %vm1042 = vcmask 654336
      %v1044 = vsel %vm1042, %v439, 0
      %1046 = vmatprep.subr.bf16.mxu0 0
      %1047 = vmatpush1.bf16.msra.mxu0 0
      %1048 = vmatprep.subr.bf16.mxu0 0
      %1049 = vmatpush1.bf16.msra.mxu0 0
      %1050 = vmatprep.subr.bf16.mxu0 0
      %1051 = vmatpush1.bf16.msra.mxu0 0
      %1052 = vmatprep.subr.bf16.mxu0 %v1035
      %1053 = vmatpush1.bf16.msra.mxu0 %v1034
      %1054 = vmatprep.subr.bf16.mxu0 %v1027
      %1055 = vmatpush1.bf16.msra.mxu0 %v1026
      %1056 = vmatprep.subr.bf16.mxu0 %v1019
      %1057 = vmatpush1.bf16.msra.mxu0 %v1018
      %1058 = vmatprep.subr.bf16.mxu0 %v1011
      %1059 = vmatpush1.bf16.msra.mxu0 %v1010
      %1060 = vmatprep.subr.bf16.mxu0 %v1003
      %1061 = vmatpush1.bf16.msra.mxu0 %v1002
      %1062 = vmatprep.subr.bf16.mxu0 0
      %1063 = vmatpush2.bf16.msra.mxu0 0
      %1064 = vmatprep.subr.bf16.mxu0 0
      %1065 = vmatpush2.bf16.msra.mxu0 0
      %1066 = vmatprep.subr.bf16.mxu0 0
      %1067 = vmatpush2.bf16.msra.mxu0 0
      %1068 = vmatprep.subr.bf16.mxu0 0
      %1069 = vmatpush2.bf16.msra.mxu0 0
      %1070 = vmatprep.subr.bf16.mxu0 0
      %1071 = vmatpush2.bf16.msra.mxu0 0
      %1072 = vmatprep.subr.bf16.mxu0 0
      %1073 = vmatpush2.bf16.msra.mxu0 0
      %1074 = vmatprep.subr.bf16.mxu0 0
      %1075 = vmatpush2.bf16.msra.mxu0 0
      %1076 = vmatprep.subr.bf16.mxu0 0
      %1077 = vmatpush2.bf16.msra.mxu0 0
      %1078 = vmatprep.mubr.bf16.mxu0 0
      %1079 = vmatmul.mubr.bf16.gmra.mxu0 %v1044
      %v1080 = vpop.f32.mrf.mxu0
      %v1081 = vadd.f32 0.0, %v1080
      %v1082 = vpop.f32.mrf.mxu0
      %v1083 = vadd.f32 0.0, %v1082
      %v1084 = vpop.f32.mrf.mxu0
      %v1085 = vpop.f32.mrf.mxu0
      %1086 = vdwg.mxu0
      %1087 = vmatprep.subr.bf16.mxu0 0
      %1088 = vmatpush1.bf16.msra.mxu0 0
      %1089 = vmatprep.subr.bf16.mxu0 0
      %1090 = vmatpush1.bf16.msra.mxu0 0
      %1091 = vmatprep.subr.bf16.mxu0 0
      %1092 = vmatpush1.bf16.msra.mxu0 0
      %1093 = vmatprep.subr.bf16.mxu0 %v1037
      %1094 = vmatpush1.bf16.msra.mxu0 %v1036
      %1095 = vmatprep.subr.bf16.mxu0 %v1029
      %1096 = vmatpush1.bf16.msra.mxu0 %v1028
      %1097 = vmatprep.subr.bf16.mxu0 %v1021
      %1098 = vmatpush1.bf16.msra.mxu0 %v1020
      %1099 = vmatprep.subr.bf16.mxu0 %v1013
      %1100 = vmatpush1.bf16.msra.mxu0 %v1012
      %1101 = vmatprep.subr.bf16.mxu0 %v1005
      %1102 = vmatpush1.bf16.msra.mxu0 %v1004
      %1103 = vmatprep.subr.bf16.mxu0 0
      %1104 = vmatpush2.bf16.msra.mxu0 0
      %1105 = vmatprep.subr.bf16.mxu0 0
      %1106 = vmatpush2.bf16.msra.mxu0 0
      %1107 = vmatprep.subr.bf16.mxu0 0
      %1108 = vmatpush2.bf16.msra.mxu0 0
      %1109 = vmatprep.subr.bf16.mxu0 0
      %1110 = vmatpush2.bf16.msra.mxu0 0
      %1111 = vmatprep.subr.bf16.mxu0 0
      %1112 = vmatpush2.bf16.msra.mxu0 0
      %1113 = vmatprep.subr.bf16.mxu0 0
      %1114 = vmatpush2.bf16.msra.mxu0 0
      %1115 = vmatprep.subr.bf16.mxu0 0
      %1116 = vmatpush2.bf16.msra.mxu0 0
      %1117 = vmatprep.subr.bf16.mxu0 0
      %1118 = vmatpush2.bf16.msra.mxu0 0
      %1119 = vmatprep.mubr.bf16.mxu0 0
      %1120 = vmatmul.mubr.bf16.gmra.mxu0 %v1044
      %v1121 = vpop.f32.mrf.mxu0
      %v1122 = vadd.f32 0.0, %v1121
      %v1123 = vpop.f32.mrf.mxu0
      %v1124 = vadd.f32 0.0, %v1123
      %v1125 = vpop.f32.mrf.mxu0
      %v1126 = vpop.f32.mrf.mxu0
      %1127 = vdwg.mxu0
      %1128 = vmatprep.subr.bf16.mxu0 0
      %1129 = vmatpush1.bf16.msra.mxu0 0
      %1130 = vmatprep.subr.bf16.mxu0 0
      %1131 = vmatpush1.bf16.msra.mxu0 0
      %1132 = vmatprep.subr.bf16.mxu0 0
      %1133 = vmatpush1.bf16.msra.mxu0 0
      %1134 = vmatprep.subr.bf16.mxu0 %v1039
      %1135 = vmatpush1.bf16.msra.mxu0 %v1038
      %1136 = vmatprep.subr.bf16.mxu0 %v1031
      %1137 = vmatpush1.bf16.msra.mxu0 %v1030
      %1138 = vmatprep.subr.bf16.mxu0 %v1023
      %1139 = vmatpush1.bf16.msra.mxu0 %v1022
      %1140 = vmatprep.subr.bf16.mxu0 %v1015
      %1141 = vmatpush1.bf16.msra.mxu0 %v1014
      %1142 = vmatprep.subr.bf16.mxu0 %v1007
      %1143 = vmatpush1.bf16.msra.mxu0 %v1006
      %1144 = vmatprep.subr.bf16.mxu0 0
      %1145 = vmatpush2.bf16.msra.mxu0 0
      %1146 = vmatprep.subr.bf16.mxu0 0
      %1147 = vmatpush2.bf16.msra.mxu0 0
      %1148 = vmatprep.subr.bf16.mxu0 0
      %1149 = vmatpush2.bf16.msra.mxu0 0
      %1150 = vmatprep.subr.bf16.mxu0 0
      %1151 = vmatpush2.bf16.msra.mxu0 0
      %1152 = vmatprep.subr.bf16.mxu0 0
      %1153 = vmatpush2.bf16.msra.mxu0 0
      %1154 = vmatprep.subr.bf16.mxu0 0
      %1155 = vmatpush2.bf16.msra.mxu0 0
      %1156 = vmatprep.subr.bf16.mxu0 0
      %1157 = vmatpush2.bf16.msra.mxu0 0
      %1158 = vmatprep.subr.bf16.mxu0 0
      %1159 = vmatpush2.bf16.msra.mxu0 0
      %1160 = vmatprep.mubr.bf16.mxu0 0
      %1161 = vmatmul.mubr.bf16.gmra.mxu0 %v1044
      %v1162 = vpop.f32.mrf.mxu0
      %v1163 = vadd.f32 0.0, %v1162
      %v1164 = vpop.f32.mrf.mxu0
      %v1165 = vadd.f32 0.0, %v1164
      %v1166 = vpop.f32.mrf.mxu0
      %v1167 = vpop.f32.mrf.mxu0
      %1168 = vdwg.mxu0
      %1169 = vmatprep.subr.bf16.mxu0 0
      %1170 = vmatpush1.bf16.msra.mxu0 0
      %1171 = vmatprep.subr.bf16.mxu0 0
      %1172 = vmatpush1.bf16.msra.mxu0 0
      %1173 = vmatprep.subr.bf16.mxu0 0
      %1174 = vmatpush1.bf16.msra.mxu0 0
      %1175 = vmatprep.subr.bf16.mxu0 %v1041
      %1176 = vmatpush1.bf16.msra.mxu0 %v1040
      %1177 = vmatprep.subr.bf16.mxu0 %v1033
      %1178 = vmatpush1.bf16.msra.mxu0 %v1032
      %1179 = vmatprep.subr.bf16.mxu0 %v1025
      %1180 = vmatpush1.bf16.msra.mxu0 %v1024
      %1181 = vmatprep.subr.bf16.mxu0 %v1017
      %1182 = vmatpush1.bf16.msra.mxu0 %v1016
      %1183 = vmatprep.subr.bf16.mxu0 %v1009
      %1184 = vmatpush1.bf16.msra.mxu0 %v1008
      %1185 = vmatprep.subr.bf16.mxu0 0
      %1186 = vmatpush2.bf16.msra.mxu0 0
      %1187 = vmatprep.subr.bf16.mxu0 0
      %1188 = vmatpush2.bf16.msra.mxu0 0
      %1189 = vmatprep.subr.bf16.mxu0 0
      %1190 = vmatpush2.bf16.msra.mxu0 0
      %1191 = vmatprep.subr.bf16.mxu0 0
      %1192 = vmatpush2.bf16.msra.mxu0 0
      %1193 = vmatprep.subr.bf16.mxu0 0
      %1194 = vmatpush2.bf16.msra.mxu0 0
      %1195 = vmatprep.subr.bf16.mxu0 0
      %1196 = vmatpush2.bf16.msra.mxu0 0
      %1197 = vmatprep.subr.bf16.mxu0 0
      %1198 = vmatpush2.bf16.msra.mxu0 0
      %1199 = vmatprep.subr.bf16.mxu0 0
      %1200 = vmatpush2.bf16.msra.mxu0 0
      %1201 = vmatprep.mubr.bf16.mxu0 0
      %1202 = vmatmul.mubr.bf16.gmra.mxu0 %v1044
      %v1203 = vpop.f32.mrf.mxu0
      %v1204 = vadd.f32 0.0, %v1203
      %v1205 = vpop.f32.mrf.mxu0
      %v1206 = vadd.f32 0.0, %v1205
      %v1207 = vpop.f32.mrf.mxu0
      %v1208 = vpop.f32.mrf.mxu0
      %1209 = vdwg.mxu0
      %v1210 = vmax.f32 %v1081, 0.0
      %v1211 = vmax.f32 %v1083, 0.0
      %v1212 = vmax.f32 %v1122, 0.0
      %v1213 = vmax.f32 %v1124, 0.0
      %v1214 = vmax.f32 %v1163, 0.0
      %v1215 = vmax.f32 %v1165, 0.0
      %v1216 = vmax.f32 %v1204, 0.0
      %v1217 = vmax.f32 %v1206, 0.0
      %v1218 = vld [vmem:[%s2] sm:$0xf]
      %1219 = vrot.lane.b32.xlu0 %v1210, 17
      %v1220 = vpop.permute.xlu0 %1219
      %1221 = vrot.lane.b32.xlu0 %v1211, 17
      %v1222 = vpop.permute.xlu0 %1221
      %1223 = vrot.lane.b32.xlu0 %v1212, 17
      %v1224 = vpop.permute.xlu0 %1223
      %1225 = vrot.lane.b32.xlu0 %v1213, 17
      %v1226 = vpop.permute.xlu0 %1225
      %1227 = vrot.lane.b32.xlu0 %v1214, 17
      %v1228 = vpop.permute.xlu0 %1227
      %1229 = vrot.lane.b32.xlu0 %v1215, 17
      %v1230 = vpop.permute.xlu0 %1229
      %1231 = vrot.lane.b32.xlu0 %v1216, 17
      %v1232 = vpop.permute.xlu0 %1231
      %1233 = vrot.lane.b32.xlu0 %v1217, 17
      %v1234 = vpop.permute.xlu0 %1233
      %v1235 = vsel %vm458, %v1232, %v1234
      %v1236 = vsel %vm458, %v1230, %v1232
      %v1237 = vsel %vm458, %v1228, %v1230
      %v1238 = vsel %vm458, %v1226, %v1228
      %v1239 = vsel %vm458, %v1224, %v1226
      %v1240 = vsel %vm458, %v1222, %v1224
      %v1241 = vsel %vm458, %v1220, %v1222
      %v1242 = vsel %vm458, %v1234, %v1220
      %v1243 = vmul.f32 %v1242, %v470
      %v1244 = vmul.f32 %v1241, %v474
      %v1245 = vmul.f32 %v1240, %v478
      %v1246 = vmul.f32 %v1239, %v482
      %v1247 = vmul.f32 %v1238, %v486
      %v1248 = vmul.f32 %v1237, %v490
      %v1249 = vmul.f32 %v1236, %v494
      %v1250 = vmul.f32 %v1235, %v498
      %1251 = vrot.lane.b32.xlu0 %v1210, 16
      %v1252 = vpop.permute.xlu0 %1251
      %1253 = vrot.lane.b32.xlu0 %v1211, 16
      %v1254 = vpop.permute.xlu0 %1253
      %1255 = vrot.lane.b32.xlu0 %v1212, 16
      %v1256 = vpop.permute.xlu0 %1255
      %1257 = vrot.lane.b32.xlu0 %v1213, 16
      %v1258 = vpop.permute.xlu0 %1257
      %1259 = vrot.lane.b32.xlu0 %v1214, 16
      %v1260 = vpop.permute.xlu0 %1259
      %1261 = vrot.lane.b32.xlu0 %v1215, 16
      %v1262 = vpop.permute.xlu0 %1261
      %1263 = vrot.lane.b32.xlu0 %v1216, 16
      %v1264 = vpop.permute.xlu0 %1263
      %1265 = vrot.lane.b32.xlu0 %v1217, 16
      %v1266 = vpop.permute.xlu0 %1265
      %v1267 = vsel %vm523, %v1264, %v1266
      %v1268 = vsel %vm523, %v1262, %v1264
      %v1269 = vsel %vm523, %v1260, %v1262
      %v1270 = vsel %vm523, %v1258, %v1260
      %v1271 = vsel %vm523, %v1256, %v1258
      %v1272 = vsel %vm523, %v1254, %v1256
      %v1273 = vsel %vm523, %v1252, %v1254
      %v1274 = vsel %vm523, %v1266, %v1252
      %v1275 = vmul.f32 %v1274, %v535
      %v1276 = vmul.f32 %v1273, %v539
      %v1277 = vmul.f32 %v1272, %v543
      %v1278 = vmul.f32 %v1271, %v547
      %v1279 = vmul.f32 %v1270, %v551
      %v1280 = vmul.f32 %v1269, %v555
      %v1281 = vmul.f32 %v1268, %v559
      %v1282 = vmul.f32 %v1267, %v563
      %1283 = vrot.lane.b32.xlu0 %v1210, 15
      %v1284 = vpop.permute.xlu0 %1283
      %1285 = vrot.lane.b32.xlu0 %v1211, 15
      %v1286 = vpop.permute.xlu0 %1285
      %1287 = vrot.lane.b32.xlu0 %v1212, 15
      %v1288 = vpop.permute.xlu0 %1287
      %1289 = vrot.lane.b32.xlu0 %v1213, 15
      %v1290 = vpop.permute.xlu0 %1289
      %1291 = vrot.lane.b32.xlu0 %v1214, 15
      %v1292 = vpop.permute.xlu0 %1291
      %1293 = vrot.lane.b32.xlu0 %v1215, 15
      %v1294 = vpop.permute.xlu0 %1293
      %1295 = vrot.lane.b32.xlu0 %v1216, 15
      %v1296 = vpop.permute.xlu0 %1295
      %1297 = vrot.lane.b32.xlu0 %v1217, 15
      %v1298 = vpop.permute.xlu0 %1297
      %v1299 = vsel %vm588, %v1296, %v1298
      %v1300 = vsel %vm588, %v1294, %v1296
      %v1301 = vsel %vm588, %v1292, %v1294
      %v1302 = vsel %vm588, %v1290, %v1292
      %v1303 = vsel %vm588, %v1288, %v1290
      %v1304 = vsel %vm588, %v1286, %v1288
      %v1305 = vsel %vm588, %v1284, %v1286
      %v1306 = vsel %vm588, %v1298, %v1284
      %v1307 = vmul.f32 %v1306, %v600
      %v1308 = vmul.f32 %v1305, %v604
      %v1309 = vmul.f32 %v1304, %v608
      %v1310 = vmul.f32 %v1303, %v612
      %v1311 = vmul.f32 %v1302, %v616
      %v1312 = vmul.f32 %v1301, %v620
      %v1313 = vmul.f32 %v1300, %v624
      %v1314 = vmul.f32 %v1299, %v628
      %1315 = vrot.lane.b32.xlu0 %v1210, 1
      %v1316 = vpop.permute.xlu0 %1315
      %1317 = vrot.lane.b32.xlu0 %v1211, 1
      %v1318 = vpop.permute.xlu0 %1317
      %1319 = vrot.lane.b32.xlu0 %v1212, 1
      %v1320 = vpop.permute.xlu0 %1319
      %1321 = vrot.lane.b32.xlu0 %v1213, 1
      %v1322 = vpop.permute.xlu0 %1321
      %1323 = vrot.lane.b32.xlu0 %v1214, 1
      %v1324 = vpop.permute.xlu0 %1323
      %1325 = vrot.lane.b32.xlu0 %v1215, 1
      %v1326 = vpop.permute.xlu0 %1325
      %1327 = vrot.lane.b32.xlu0 %v1216, 1
      %v1328 = vpop.permute.xlu0 %1327
      %1329 = vrot.lane.b32.xlu0 %v1217, 1
      %v1330 = vpop.permute.xlu0 %1329
      %v1331 = vsel %vm653, %v1328, %v1330
      %v1332 = vsel %vm653, %v1326, %v1328
      %v1333 = vsel %vm653, %v1324, %v1326
      %v1334 = vsel %vm653, %v1322, %v1324
      %v1335 = vsel %vm653, %v1320, %v1322
      %v1336 = vsel %vm653, %v1318, %v1320
      %v1337 = vsel %vm653, %v1316, %v1318
      %v1338 = vsel %vm653, %v1330, %v1316
      %v1339 = vmul.f32 %v1338, %v665
      %v1340 = vmul.f32 %v1337, %v669
      %v1341 = vmul.f32 %v1336, %v673
      %v1342 = vmul.f32 %v1335, %v677
      %v1343 = vmul.f32 %v1334, %v681
      %v1344 = vmul.f32 %v1333, %v685
      %v1345 = vmul.f32 %v1332, %v689
      %v1346 = vmul.f32 %v1331, %v693
      %v1347 = vmul.f32 %v1210, %v705
      %v1348 = vmul.f32 %v1211, %v709
      %v1349 = vmul.f32 %v1212, %v713
      %v1350 = vmul.f32 %v1213, %v717
      %v1351 = vmul.f32 %v1214, %v721
      %v1352 = vmul.f32 %v1215, %v725
      %v1353 = vmul.f32 %v1216, %v729
      %v1354 = vmul.f32 %v1217, %v733
      %1355 = vrot.lane.b32.xlu0 %v1210, 127
      %v1356 = vpop.permute.xlu0 %1355
      %1357 = vrot.lane.b32.xlu0 %v1211, 127
      %v1358 = vpop.permute.xlu0 %1357
      %1359 = vrot.lane.b32.xlu0 %v1212, 127
      %v1360 = vpop.permute.xlu0 %1359
      %1361 = vrot.lane.b32.xlu0 %v1213, 127
      %v1362 = vpop.permute.xlu0 %1361
      %1363 = vrot.lane.b32.xlu0 %v1214, 127
      %v1364 = vpop.permute.xlu0 %1363
      %1365 = vrot.lane.b32.xlu0 %v1215, 127
      %v1366 = vpop.permute.xlu0 %1365
      %1367 = vrot.lane.b32.xlu0 %v1216, 127
      %v1368 = vpop.permute.xlu0 %1367
      %1369 = vrot.lane.b32.xlu0 %v1217, 127
      %v1370 = vpop.permute.xlu0 %1369
      %v1371 = vsel %vm758, %v1368, %v1370
      %v1372 = vsel %vm758, %v1366, %v1368
      %v1373 = vsel %vm758, %v1364, %v1366
      %v1374 = vsel %vm758, %v1362, %v1364
      %v1375 = vsel %vm758, %v1360, %v1362
      %v1376 = vsel %vm758, %v1358, %v1360
      %v1377 = vsel %vm758, %v1356, %v1358
      %v1378 = vsel %vm758, %v1370, %v1356
      %v1379 = vmul.f32 %v1377, %v770
      %v1380 = vmul.f32 %v1376, %v774
      %v1381 = vmul.f32 %v1375, %v778
      %v1382 = vmul.f32 %v1374, %v782
      %v1383 = vmul.f32 %v1373, %v786
      %v1384 = vmul.f32 %v1372, %v790
      %v1385 = vmul.f32 %v1371, %v794
      %v1386 = vmul.f32 %v1378, %v798
      %1387 = vrot.lane.b32.xlu0 %v1210, 113
      %v1388 = vpop.permute.xlu0 %1387
      %1389 = vrot.lane.b32.xlu0 %v1211, 113
      %v1390 = vpop.permute.xlu0 %1389
      %1391 = vrot.lane.b32.xlu0 %v1212, 113
      %v1392 = vpop.permute.xlu0 %1391
      %1393 = vrot.lane.b32.xlu0 %v1213, 113
      %v1394 = vpop.permute.xlu0 %1393
      %1395 = vrot.lane.b32.xlu0 %v1214, 113
      %v1396 = vpop.permute.xlu0 %1395
      %1397 = vrot.lane.b32.xlu0 %v1215, 113
      %v1398 = vpop.permute.xlu0 %1397
      %1399 = vrot.lane.b32.xlu0 %v1216, 113
      %v1400 = vpop.permute.xlu0 %1399
      %1401 = vrot.lane.b32.xlu0 %v1217, 113
      %v1402 = vpop.permute.xlu0 %1401
      %v1403 = vsel %vm823, %v1400, %v1402
      %v1404 = vsel %vm823, %v1398, %v1400
      %v1405 = vsel %vm823, %v1396, %v1398
      %v1406 = vsel %vm823, %v1394, %v1396
      %v1407 = vsel %vm823, %v1392, %v1394
      %v1408 = vsel %vm823, %v1390, %v1392
      %v1409 = vsel %vm823, %v1388, %v1390
      %v1410 = vsel %vm823, %v1402, %v1388
      %v1411 = vmul.f32 %v1409, %v835
      %v1412 = vmul.f32 %v1408, %v839
      %v1413 = vmul.f32 %v1407, %v843
      %v1414 = vmul.f32 %v1406, %v847
      %v1415 = vmul.f32 %v1405, %v851
      %v1416 = vmul.f32 %v1404, %v855
      %v1417 = vmul.f32 %v1403, %v859
      %v1418 = vmul.f32 %v1410, %v863
      %1419 = vrot.lane.b32.xlu0 %v1210, 112
      %v1420 = vpop.permute.xlu0 %1419
      %1421 = vrot.lane.b32.xlu0 %v1211, 112
      %v1422 = vpop.permute.xlu0 %1421
      %1423 = vrot.lane.b32.xlu0 %v1212, 112
      %v1424 = vpop.permute.xlu0 %1423
      %1425 = vrot.lane.b32.xlu0 %v1213, 112
      %v1426 = vpop.permute.xlu0 %1425
      %1427 = vrot.lane.b32.xlu0 %v1214, 112
      %v1428 = vpop.permute.xlu0 %1427
      %1429 = vrot.lane.b32.xlu0 %v1215, 112
      %v1430 = vpop.permute.xlu0 %1429
      %1431 = vrot.lane.b32.xlu0 %v1216, 112
      %v1432 = vpop.permute.xlu0 %1431
      %1433 = vrot.lane.b32.xlu0 %v1217, 112
      %v1434 = vpop.permute.xlu0 %1433
      %v1435 = vsel %vm888, %v1432, %v1434
      %v1436 = vsel %vm888, %v1430, %v1432
      %v1437 = vsel %vm888, %v1428, %v1430
      %v1438 = vsel %vm888, %v1426, %v1428
      %v1439 = vsel %vm888, %v1424, %v1426
      %v1440 = vsel %vm888, %v1422, %v1424
      %v1441 = vsel %vm888, %v1420, %v1422
      %v1442 = vsel %vm888, %v1434, %v1420
      %v1443 = vmul.f32 %v1441, %v900
      %v1444 = vmul.f32 %v1440, %v904
      %v1445 = vmul.f32 %v1439, %v908
      %v1446 = vmul.f32 %v1438, %v912
      %v1447 = vmul.f32 %v1437, %v916
      %v1448 = vmul.f32 %v1436, %v920
      %v1449 = vmul.f32 %v1435, %v924
      %v1450 = vmul.f32 %v1442, %v928
      %1451 = vrot.lane.b32.xlu0 %v1210, 111
      %v1452 = vpop.permute.xlu0 %1451
      %1453 = vrot.lane.b32.xlu0 %v1211, 111
      %v1454 = vpop.permute.xlu0 %1453
      %1455 = vrot.lane.b32.xlu0 %v1212, 111
      %v1456 = vpop.permute.xlu0 %1455
      %1457 = vrot.lane.b32.xlu0 %v1213, 111
      %v1458 = vpop.permute.xlu0 %1457
      %1459 = vrot.lane.b32.xlu0 %v1214, 111
      %v1460 = vpop.permute.xlu0 %1459
      %1461 = vrot.lane.b32.xlu0 %v1215, 111
      %v1462 = vpop.permute.xlu0 %1461
      %1463 = vrot.lane.b32.xlu0 %v1216, 111
      %v1464 = vpop.permute.xlu0 %1463
      %1465 = vrot.lane.b32.xlu0 %v1217, 111
      %v1466 = vpop.permute.xlu0 %1465
      %v1467 = vsel %vm953, %v1464, %v1466
      %v1468 = vsel %vm953, %v1462, %v1464
      %v1469 = vsel %vm953, %v1460, %v1462
      %v1470 = vsel %vm953, %v1458, %v1460
      %v1471 = vsel %vm953, %v1456, %v1458
      %v1472 = vsel %vm953, %v1454, %v1456
      %v1473 = vsel %vm953, %v1452, %v1454
      %v1474 = vsel %vm953, %v1466, %v1452
      %v1475 = vmul.f32 %v1473, %v965
      %v1476 = vmul.f32 %v1472, %v969
      %v1477 = vmul.f32 %v1471, %v973
      %v1478 = vmul.f32 %v1470, %v977
      %v1479 = vmul.f32 %v1469, %v981
      %v1480 = vmul.f32 %v1468, %v985
      %v1481 = vmul.f32 %v1467, %v989
      %v1482 = vmul.f32 %v1474, %v993
      %v1483 = vpack.c.bf16 %v1275, %v1243
      %v1484 = vpack.c.bf16 %v1276, %v1244
      %v1485 = vpack.c.bf16 %v1277, %v1245
      %v1486 = vpack.c.bf16 %v1278, %v1246
      %v1487 = vpack.c.bf16 %v1279, %v1247
      %v1488 = vpack.c.bf16 %v1280, %v1248
      %v1489 = vpack.c.bf16 %v1281, %v1249
      %v1490 = vpack.c.bf16 %v1282, %v1250
      %v1491 = vpack.c.bf16 %v1339, %v1307
      %v1492 = vpack.c.bf16 %v1340, %v1308
      %v1493 = vpack.c.bf16 %v1341, %v1309
      %v1494 = vpack.c.bf16 %v1342, %v1310
      %v1495 = vpack.c.bf16 %v1343, %v1311
      %v1496 = vpack.c.bf16 %v1344, %v1312
      %v1497 = vpack.c.bf16 %v1345, %v1313
      %v1498 = vpack.c.bf16 %v1346, %v1314
      %v1499 = vpack.c.bf16 %v1379, %v1347
      %v1500 = vpack.c.bf16 %v1380, %v1348
      %v1501 = vpack.c.bf16 %v1381, %v1349
      %v1502 = vpack.c.bf16 %v1382, %v1350
      %v1503 = vpack.c.bf16 %v1383, %v1351
      %v1504 = vpack.c.bf16 %v1384, %v1352
      %v1505 = vpack.c.bf16 %v1385, %v1353
      %v1506 = vpack.c.bf16 %v1386, %v1354
      %v1507 = vpack.c.bf16 %v1443, %v1411
      %v1508 = vpack.c.bf16 %v1444, %v1412
      %v1509 = vpack.c.bf16 %v1445, %v1413
      %v1510 = vpack.c.bf16 %v1446, %v1414
      %v1511 = vpack.c.bf16 %v1447, %v1415
      %v1512 = vpack.c.bf16 %v1448, %v1416
      %v1513 = vpack.c.bf16 %v1449, %v1417
      %v1514 = vpack.c.bf16 %v1450, %v1418
      %v1515 = vpack.c.bf16 1.0, %v1475
      %v1516 = vpack.c.bf16 1.0, %v1476
      %v1517 = vpack.c.bf16 1.0, %v1477
      %v1518 = vpack.c.bf16 1.0, %v1478
      %v1519 = vpack.c.bf16 1.0, %v1479
      %v1520 = vpack.c.bf16 1.0, %v1480
      %v1521 = vpack.c.bf16 1.0, %v1481
      %v1522 = vpack.c.bf16 1.0, %v1482
      %v1524 = vsel %vm1042, %v1218, 0
      %1526 = vmatprep.subr.bf16.mxu0 0
      %1527 = vmatpush1.bf16.msra.mxu0 0
      %1528 = vmatprep.subr.bf16.mxu0 0
      %1529 = vmatpush1.bf16.msra.mxu0 0
      %1530 = vmatprep.subr.bf16.mxu0 0
      %1531 = vmatpush1.bf16.msra.mxu0 0
      %1532 = vmatprep.subr.bf16.mxu0 %v1516
      %1533 = vmatpush1.bf16.msra.mxu0 %v1515
      %1534 = vmatprep.subr.bf16.mxu0 %v1508
      %1535 = vmatpush1.bf16.msra.mxu0 %v1507
      %1536 = vmatprep.subr.bf16.mxu0 %v1500
      %1537 = vmatpush1.bf16.msra.mxu0 %v1499
      %1538 = vmatprep.subr.bf16.mxu0 %v1492
      %1539 = vmatpush1.bf16.msra.mxu0 %v1491
      %1540 = vmatprep.subr.bf16.mxu0 %v1484
      %1541 = vmatpush1.bf16.msra.mxu0 %v1483
      %1542 = vmatprep.subr.bf16.mxu0 0
      %1543 = vmatpush2.bf16.msra.mxu0 0
      %1544 = vmatprep.subr.bf16.mxu0 0
      %1545 = vmatpush2.bf16.msra.mxu0 0
      %1546 = vmatprep.subr.bf16.mxu0 0
      %1547 = vmatpush2.bf16.msra.mxu0 0
      %1548 = vmatprep.subr.bf16.mxu0 0
      %1549 = vmatpush2.bf16.msra.mxu0 0
      %1550 = vmatprep.subr.bf16.mxu0 0
      %1551 = vmatpush2.bf16.msra.mxu0 0
      %1552 = vmatprep.subr.bf16.mxu0 0
      %1553 = vmatpush2.bf16.msra.mxu0 0
      %1554 = vmatprep.subr.bf16.mxu0 0
      %1555 = vmatpush2.bf16.msra.mxu0 0
      %1556 = vmatprep.subr.bf16.mxu0 0
      %1557 = vmatpush2.bf16.msra.mxu0 0
      %1558 = vmatprep.mubr.bf16.mxu0 0
      %1559 = vmatmul.mubr.bf16.gmra.mxu0 %v1524
      %v1560 = vpop.f32.mrf.mxu0
      %v1561 = vadd.f32 0.0, %v1560
      %v1562 = vpop.f32.mrf.mxu0
      %v1563 = vadd.f32 0.0, %v1562
      %v1564 = vpop.f32.mrf.mxu0
      %v1565 = vpop.f32.mrf.mxu0
      %1566 = vdwg.mxu0
      %1567 = vmatprep.subr.bf16.mxu0 0
      %1568 = vmatpush1.bf16.msra.mxu0 0
      %1569 = vmatprep.subr.bf16.mxu0 0
      %1570 = vmatpush1.bf16.msra.mxu0 0
      %1571 = vmatprep.subr.bf16.mxu0 0
      %1572 = vmatpush1.bf16.msra.mxu0 0
      %1573 = vmatprep.subr.bf16.mxu0 %v1518
      %1574 = vmatpush1.bf16.msra.mxu0 %v1517
      %1575 = vmatprep.subr.bf16.mxu0 %v1510
      %1576 = vmatpush1.bf16.msra.mxu0 %v1509
      %1577 = vmatprep.subr.bf16.mxu0 %v1502
      %1578 = vmatpush1.bf16.msra.mxu0 %v1501
      %1579 = vmatprep.subr.bf16.mxu0 %v1494
      %1580 = vmatpush1.bf16.msra.mxu0 %v1493
      %1581 = vmatprep.subr.bf16.mxu0 %v1486
      %1582 = vmatpush1.bf16.msra.mxu0 %v1485
      %1583 = vmatprep.subr.bf16.mxu0 0
      %1584 = vmatpush2.bf16.msra.mxu0 0
      %1585 = vmatprep.subr.bf16.mxu0 0
      %1586 = vmatpush2.bf16.msra.mxu0 0
      %1587 = vmatprep.subr.bf16.mxu0 0
      %1588 = vmatpush2.bf16.msra.mxu0 0
      %1589 = vmatprep.subr.bf16.mxu0 0
      %1590 = vmatpush2.bf16.msra.mxu0 0
      %1591 = vmatprep.subr.bf16.mxu0 0
      %1592 = vmatpush2.bf16.msra.mxu0 0
      %1593 = vmatprep.subr.bf16.mxu0 0
      %1594 = vmatpush2.bf16.msra.mxu0 0
      %1595 = vmatprep.subr.bf16.mxu0 0
      %1596 = vmatpush2.bf16.msra.mxu0 0
      %1597 = vmatprep.subr.bf16.mxu0 0
      %1598 = vmatpush2.bf16.msra.mxu0 0
      %1599 = vmatprep.mubr.bf16.mxu0 0
      %1600 = vmatmul.mubr.bf16.gmra.mxu0 %v1524
      %v1601 = vpop.f32.mrf.mxu0
      %v1602 = vadd.f32 0.0, %v1601
      %v1603 = vpop.f32.mrf.mxu0
      %v1604 = vadd.f32 0.0, %v1603
      %v1605 = vpop.f32.mrf.mxu0
      %v1606 = vpop.f32.mrf.mxu0
      %1607 = vdwg.mxu0
      %1608 = vmatprep.subr.bf16.mxu0 0
      %1609 = vmatpush1.bf16.msra.mxu0 0
      %1610 = vmatprep.subr.bf16.mxu0 0
      %1611 = vmatpush1.bf16.msra.mxu0 0
      %1612 = vmatprep.subr.bf16.mxu0 0
      %1613 = vmatpush1.bf16.msra.mxu0 0
      %1614 = vmatprep.subr.bf16.mxu0 %v1520
      %1615 = vmatpush1.bf16.msra.mxu0 %v1519
      %1616 = vmatprep.subr.bf16.mxu0 %v1512
      %1617 = vmatpush1.bf16.msra.mxu0 %v1511
      %1618 = vmatprep.subr.bf16.mxu0 %v1504
      %1619 = vmatpush1.bf16.msra.mxu0 %v1503
      %1620 = vmatprep.subr.bf16.mxu0 %v1496
      %1621 = vmatpush1.bf16.msra.mxu0 %v1495
      %1622 = vmatprep.subr.bf16.mxu0 %v1488
      %1623 = vmatpush1.bf16.msra.mxu0 %v1487
      %1624 = vmatprep.subr.bf16.mxu0 0
      %1625 = vmatpush2.bf16.msra.mxu0 0
      %1626 = vmatprep.subr.bf16.mxu0 0
      %1627 = vmatpush2.bf16.msra.mxu0 0
      %1628 = vmatprep.subr.bf16.mxu0 0
      %1629 = vmatpush2.bf16.msra.mxu0 0
      %1630 = vmatprep.subr.bf16.mxu0 0
      %1631 = vmatpush2.bf16.msra.mxu0 0
      %1632 = vmatprep.subr.bf16.mxu0 0
      %1633 = vmatpush2.bf16.msra.mxu0 0
      %1634 = vmatprep.subr.bf16.mxu0 0
      %1635 = vmatpush2.bf16.msra.mxu0 0
      %1636 = vmatprep.subr.bf16.mxu0 0
      %1637 = vmatpush2.bf16.msra.mxu0 0
      %1638 = vmatprep.subr.bf16.mxu0 0
      %1639 = vmatpush2.bf16.msra.mxu0 0
      %1640 = vmatprep.mubr.bf16.mxu0 0
      %1641 = vmatmul.mubr.bf16.gmra.mxu0 %v1524
      %v1642 = vpop.f32.mrf.mxu0
      %v1643 = vadd.f32 0.0, %v1642
      %v1644 = vpop.f32.mrf.mxu0
      %v1645 = vadd.f32 0.0, %v1644
      %v1646 = vpop.f32.mrf.mxu0
      %v1647 = vpop.f32.mrf.mxu0
      %1648 = vdwg.mxu0
      %1649 = vmatprep.subr.bf16.mxu0 0
      %1650 = vmatpush1.bf16.msra.mxu0 0
      %1651 = vmatprep.subr.bf16.mxu0 0
      %1652 = vmatpush1.bf16.msra.mxu0 0
      %1653 = vmatprep.subr.bf16.mxu0 0
      %1654 = vmatpush1.bf16.msra.mxu0 0
      %1655 = vmatprep.subr.bf16.mxu0 %v1522
      %1656 = vmatpush1.bf16.msra.mxu0 %v1521
      %1657 = vmatprep.subr.bf16.mxu0 %v1514
      %1658 = vmatpush1.bf16.msra.mxu0 %v1513
      %1659 = vmatprep.subr.bf16.mxu0 %v1506
      %1660 = vmatpush1.bf16.msra.mxu0 %v1505
      %1661 = vmatprep.subr.bf16.mxu0 %v1498
      %1662 = vmatpush1.bf16.msra.mxu0 %v1497
      %1663 = vmatprep.subr.bf16.mxu0 %v1490
      %1664 = vmatpush1.bf16.msra.mxu0 %v1489
      %1665 = vmatprep.subr.bf16.mxu0 0
      %1666 = vmatpush2.bf16.msra.mxu0 0
      %1667 = vmatprep.subr.bf16.mxu0 0
      %1668 = vmatpush2.bf16.msra.mxu0 0
      %1669 = vmatprep.subr.bf16.mxu0 0
      %1670 = vmatpush2.bf16.msra.mxu0 0
      %1671 = vmatprep.subr.bf16.mxu0 0
      %1672 = vmatpush2.bf16.msra.mxu0 0
      %1673 = vmatprep.subr.bf16.mxu0 0
      %1674 = vmatpush2.bf16.msra.mxu0 0
      %1675 = vmatprep.subr.bf16.mxu0 0
      %1676 = vmatpush2.bf16.msra.mxu0 0
      %1677 = vmatprep.subr.bf16.mxu0 0
      %1678 = vmatpush2.bf16.msra.mxu0 0
      %1679 = vmatprep.subr.bf16.mxu0 0
      %1680 = vmatpush2.bf16.msra.mxu0 0
      %1681 = vmatprep.mubr.bf16.mxu0 0
      %1682 = vmatmul.mubr.bf16.gmra.mxu0 %v1524
      %v1683 = vpop.f32.mrf.mxu0
      %v1684 = vadd.f32 0.0, %v1683
      %v1685 = vpop.f32.mrf.mxu0
      %v1686 = vadd.f32 0.0, %v1685
      %v1687 = vpop.f32.mrf.mxu0
      %v1688 = vpop.f32.mrf.mxu0
      %1689 = vdwg.mxu0
      %v1690 = vmax.f32 %v1561, 0.0
      %v1691 = vmax.f32 %v1563, 0.0
      %v1692 = vmax.f32 %v1602, 0.0
      %v1693 = vmax.f32 %v1604, 0.0
      %v1694 = vmax.f32 %v1643, 0.0
      %v1695 = vmax.f32 %v1645, 0.0
      %v1696 = vmax.f32 %v1684, 0.0
      %v1697 = vmax.f32 %v1686, 0.0
      %1698 = vrot.lane.b32.xlu0 %v1690, 127
      %v1699 = vpop.permute.xlu0 %1698
      %1700 = vrot.lane.b32.xlu0 %v1691, 127
      %v1701 = vpop.permute.xlu0 %1700
      %1702 = vrot.lane.b32.xlu0 %v1692, 127
      %v1703 = vpop.permute.xlu0 %1702
      %1704 = vrot.lane.b32.xlu0 %v1693, 127
      %v1705 = vpop.permute.xlu0 %1704
      %1706 = vrot.lane.b32.xlu0 %v1694, 127
      %v1707 = vpop.permute.xlu0 %1706
      %1708 = vrot.lane.b32.xlu0 %v1695, 127
      %v1709 = vpop.permute.xlu0 %1708
      %1710 = vrot.lane.b32.xlu0 %v1696, 127
      %v1711 = vpop.permute.xlu0 %1710
      %1712 = vrot.lane.b32.xlu0 %v1697, 127
      %v1713 = vpop.permute.xlu0 %1712
      %v1714 = vsel %vm758, %v1711, %v1713
      %v1715 = vsel %vm758, %v1709, %v1711
      %v1716 = vsel %vm758, %v1707, %v1709
      %v1717 = vsel %vm758, %v1705, %v1707
      %v1718 = vsel %vm758, %v1703, %v1705
      %v1719 = vsel %vm758, %v1701, %v1703
      %v1720 = vsel %vm758, %v1699, %v1701
      %v1721 = vsel %vm758, %v1713, %v1699
      %v1722 = vmax.f32 %v1690, %v1720
      %v1723 = vmax.f32 %v1691, %v1719
      %v1724 = vmax.f32 %v1692, %v1718
      %v1725 = vmax.f32 %v1693, %v1717
      %v1726 = vmax.f32 %v1694, %v1716
      %v1727 = vmax.f32 %v1695, %v1715
      %v1728 = vmax.f32 %v1696, %v1714
      %v1729 = vmax.f32 %v1697, %v1721
      %1730 = vrot.lane.b32.xlu0 %v1722, 112
      %v1731 = vpop.permute.xlu0 %1730
      %1732 = vrot.lane.b32.xlu0 %v1723, 112
      %v1733 = vpop.permute.xlu0 %1732
      %1734 = vrot.lane.b32.xlu0 %v1724, 112
      %v1735 = vpop.permute.xlu0 %1734
      %1736 = vrot.lane.b32.xlu0 %v1725, 112
      %v1737 = vpop.permute.xlu0 %1736
      %1738 = vrot.lane.b32.xlu0 %v1726, 112
      %v1739 = vpop.permute.xlu0 %1738
      %1740 = vrot.lane.b32.xlu0 %v1727, 112
      %v1741 = vpop.permute.xlu0 %1740
      %1742 = vrot.lane.b32.xlu0 %v1728, 112
      %v1743 = vpop.permute.xlu0 %1742
      %1744 = vrot.lane.b32.xlu0 %v1729, 112
      %v1745 = vpop.permute.xlu0 %1744
      %v1746 = vsel %vm888, %v1743, %v1745
      %v1747 = vsel %vm888, %v1741, %v1743
      %v1748 = vsel %vm888, %v1739, %v1741
      %v1749 = vsel %vm888, %v1737, %v1739
      %v1750 = vsel %vm888, %v1735, %v1737
      %v1751 = vsel %vm888, %v1733, %v1735
      %v1752 = vsel %vm888, %v1731, %v1733
      %v1753 = vsel %vm888, %v1745, %v1731
      %v1754 = vmax.f32 %v1722, %v1752
      %v1755 = vmax.f32 %v1723, %v1751
      %v1756 = vmax.f32 %v1724, %v1750
      %v1757 = vmax.f32 %v1725, %v1749
      %v1758 = vmax.f32 %v1726, %v1748
      %v1759 = vmax.f32 %v1727, %v1747
      %v1760 = vmax.f32 %v1728, %v1746
      %v1761 = vmax.f32 %v1729, %v1753
      %v1762 = vld [vmem:[%s9] sm:$0xff]
      %v1763 = vld [vmem:[%s9 + $0x8] sm:$0xff]
      %v1764 = vld [vmem:[%s9 + $0x10] sm:$0xff]
      %v1765 = vld [vmem:[%s9 + $0x18] sm:$0xff]
      %v1766 = vld [vmem:[%s9 + $0x20] sm:$0xff]
      %v1767 = vld [vmem:[%s9 + $0x28] sm:$0xff]
      %v1768 = vld [vmem:[%s9 + $0x30] sm:$0xff]
      %v1769 = vld [vmem:[%s9 + $0x38] sm:$0xff]
      %v1770 = vld [vmem:[%s9 + $0x40] sm:$0x1]
      %v1771 = vld [vmem:[%s9 + $0x48] sm:$0x1]
      %v1772 = vld [vmem:[%s9 + $0x50] sm:$0x1]
      %v1773 = vld [vmem:[%s9 + $0x58] sm:$0x1]
      %v1774 = vld [vmem:[%s9 + $0x60] sm:$0x1]
      %v1775 = vld [vmem:[%s9 + $0x68] sm:$0x1]
      %v1776 = vld [vmem:[%s9 + $0x70] sm:$0x1]
      %v1777 = vld [vmem:[%s9 + $0x78] sm:$0x1]
      %v1778 = vld [vmem:[%s3] sm:$0xf]
      %1779 = vrot.lane.b32.xlu0 %v1754, 34
      %v1780 = vpop.permute.xlu0 %1779
      %1781 = vrot.lane.b32.xlu0 %v1755, 34
      %v1782 = vpop.permute.xlu0 %1781
      %1783 = vrot.lane.b32.xlu0 %v1756, 34
      %v1784 = vpop.permute.xlu0 %1783
      %1785 = vrot.lane.b32.xlu0 %v1757, 34
      %v1786 = vpop.permute.xlu0 %1785
      %1787 = vrot.lane.b32.xlu0 %v1758, 34
      %v1788 = vpop.permute.xlu0 %1787
      %1789 = vrot.lane.b32.xlu0 %v1759, 34
      %v1790 = vpop.permute.xlu0 %1789
      %1791 = vrot.lane.b32.xlu0 %v1760, 34
      %v1792 = vpop.permute.xlu0 %1791
      %1793 = vrot.lane.b32.xlu0 %v1761, 34
      %v1794 = vpop.permute.xlu0 %1793
      %vm1795 = vcmp.lt.s32.totalorder %v457, 34
      %v1796 = vsel %vm1795, %v1792, %v1794
      %v1797 = vsel %vm1795, %v1790, %v1792
      %v1798 = vsel %vm1795, %v1788, %v1790
      %v1799 = vsel %vm1795, %v1786, %v1788
      %v1800 = vsel %vm1795, %v1784, %v1786
      %v1801 = vsel %vm1795, %v1782, %v1784
      %v1802 = vsel %vm1795, %v1780, %v1782
      %v1803 = vsel %vm1795, %v1794, %v1780
      %v1804 = vlaneseq
      %v1805 = vshrl.u32 %v1804, 7
      %v1806 = vsub.s32 0, %v1805
      %v1807 = vrot.slane %v1762, %v1806
      %v1808 = vlaneseq
      %v1809 = vshrl.u32 %v1808, 7
      %v1810 = vsub.s32 0, %v1809
      %v1811 = vrot.slane %v1763, %v1810
      %v1812 = vlaneseq
      %v1813 = vshrl.u32 %v1812, 7
      %v1814 = vsub.s32 0, %v1813
      %v1815 = vrot.slane %v1764, %v1814
      %v1816 = vlaneseq
      %v1817 = vshrl.u32 %v1816, 7
      %v1818 = vsub.s32 0, %v1817
      %v1819 = vrot.slane %v1765, %v1818
      %v1820 = vlaneseq
      %v1821 = vshrl.u32 %v1820, 7
      %v1822 = vsub.s32 0, %v1821
      %v1823 = vrot.slane %v1766, %v1822
      %v1824 = vlaneseq
      %v1825 = vshrl.u32 %v1824, 7
      %v1826 = vsub.s32 0, %v1825
      %v1827 = vrot.slane %v1767, %v1826
      %v1828 = vlaneseq
      %v1829 = vshrl.u32 %v1828, 7
      %v1830 = vsub.s32 0, %v1829
      %v1831 = vrot.slane %v1768, %v1830
      %v1832 = vlaneseq
      %v1833 = vshrl.u32 %v1832, 7
      %v1834 = vsub.s32 0, %v1833
      %v1835 = vrot.slane %v1769, %v1834
      %v1836 = vmul.f32 %v1803, %v1807
      %v1837 = vmul.f32 %v1802, %v1811
      %v1838 = vmul.f32 %v1801, %v1815
      %v1839 = vmul.f32 %v1800, %v1819
      %v1840 = vmul.f32 %v1799, %v1823
      %v1841 = vmul.f32 %v1798, %v1827
      %v1842 = vmul.f32 %v1797, %v1831
      %v1843 = vmul.f32 %v1796, %v1835
      %1844 = vrot.lane.b32.xlu0 %v1754, 32
      %v1845 = vpop.permute.xlu0 %1844
      %1846 = vrot.lane.b32.xlu0 %v1755, 32
      %v1847 = vpop.permute.xlu0 %1846
      %1848 = vrot.lane.b32.xlu0 %v1756, 32
      %v1849 = vpop.permute.xlu0 %1848
      %1850 = vrot.lane.b32.xlu0 %v1757, 32
      %v1851 = vpop.permute.xlu0 %1850
      %1852 = vrot.lane.b32.xlu0 %v1758, 32
      %v1853 = vpop.permute.xlu0 %1852
      %1854 = vrot.lane.b32.xlu0 %v1759, 32
      %v1855 = vpop.permute.xlu0 %1854
      %1856 = vrot.lane.b32.xlu0 %v1760, 32
      %v1857 = vpop.permute.xlu0 %1856
      %1858 = vrot.lane.b32.xlu0 %v1761, 32
      %v1859 = vpop.permute.xlu0 %1858
      %vm1860 = vcmp.lt.s32.totalorder %v457, 32
      %v1861 = vsel %vm1860, %v1857, %v1859
      %v1862 = vsel %vm1860, %v1855, %v1857
      %v1863 = vsel %vm1860, %v1853, %v1855
      %v1864 = vsel %vm1860, %v1851, %v1853
      %v1865 = vsel %vm1860, %v1849, %v1851
      %v1866 = vsel %vm1860, %v1847, %v1849
      %v1867 = vsel %vm1860, %v1845, %v1847
      %v1868 = vsel %vm1860, %v1859, %v1845
      %v1869 = vlaneseq
      %v1870 = vshrl.u32 %v1869, 7
      %v1871 = vsub.s32 1, %v1870
      %v1872 = vrot.slane %v1762, %v1871
      %v1873 = vlaneseq
      %v1874 = vshrl.u32 %v1873, 7
      %v1875 = vsub.s32 1, %v1874
      %v1876 = vrot.slane %v1763, %v1875
      %v1877 = vlaneseq
      %v1878 = vshrl.u32 %v1877, 7
      %v1879 = vsub.s32 1, %v1878
      %v1880 = vrot.slane %v1764, %v1879
      %v1881 = vlaneseq
      %v1882 = vshrl.u32 %v1881, 7
      %v1883 = vsub.s32 1, %v1882
      %v1884 = vrot.slane %v1765, %v1883
      %v1885 = vlaneseq
      %v1886 = vshrl.u32 %v1885, 7
      %v1887 = vsub.s32 1, %v1886
      %v1888 = vrot.slane %v1766, %v1887
      %v1889 = vlaneseq
      %v1890 = vshrl.u32 %v1889, 7
      %v1891 = vsub.s32 1, %v1890
      %v1892 = vrot.slane %v1767, %v1891
      %v1893 = vlaneseq
      %v1894 = vshrl.u32 %v1893, 7
      %v1895 = vsub.s32 1, %v1894
      %v1896 = vrot.slane %v1768, %v1895
      %v1897 = vlaneseq
      %v1898 = vshrl.u32 %v1897, 7
      %v1899 = vsub.s32 1, %v1898
      %v1900 = vrot.slane %v1769, %v1899
      %v1901 = vmul.f32 %v1868, %v1872
      %v1902 = vmul.f32 %v1867, %v1876
      %v1903 = vmul.f32 %v1866, %v1880
      %v1904 = vmul.f32 %v1865, %v1884
      %v1905 = vmul.f32 %v1864, %v1888
      %v1906 = vmul.f32 %v1863, %v1892
      %v1907 = vmul.f32 %v1862, %v1896
      %v1908 = vmul.f32 %v1861, %v1900
      %1909 = vrot.lane.b32.xlu0 %v1754, 30
      %v1910 = vpop.permute.xlu0 %1909
      %1911 = vrot.lane.b32.xlu0 %v1755, 30
      %v1912 = vpop.permute.xlu0 %1911
      %1913 = vrot.lane.b32.xlu0 %v1756, 30
      %v1914 = vpop.permute.xlu0 %1913
      %1915 = vrot.lane.b32.xlu0 %v1757, 30
      %v1916 = vpop.permute.xlu0 %1915
      %1917 = vrot.lane.b32.xlu0 %v1758, 30
      %v1918 = vpop.permute.xlu0 %1917
      %1919 = vrot.lane.b32.xlu0 %v1759, 30
      %v1920 = vpop.permute.xlu0 %1919
      %1921 = vrot.lane.b32.xlu0 %v1760, 30
      %v1922 = vpop.permute.xlu0 %1921
      %1923 = vrot.lane.b32.xlu0 %v1761, 30
      %v1924 = vpop.permute.xlu0 %1923
      %vm1925 = vcmp.lt.s32.totalorder %v457, 30
      %v1926 = vsel %vm1925, %v1922, %v1924
      %v1927 = vsel %vm1925, %v1920, %v1922
      %v1928 = vsel %vm1925, %v1918, %v1920
      %v1929 = vsel %vm1925, %v1916, %v1918
      %v1930 = vsel %vm1925, %v1914, %v1916
      %v1931 = vsel %vm1925, %v1912, %v1914
      %v1932 = vsel %vm1925, %v1910, %v1912
      %v1933 = vsel %vm1925, %v1924, %v1910
      %v1934 = vlaneseq
      %v1935 = vshrl.u32 %v1934, 7
      %v1936 = vsub.s32 2, %v1935
      %v1937 = vrot.slane %v1762, %v1936
      %v1938 = vlaneseq
      %v1939 = vshrl.u32 %v1938, 7
      %v1940 = vsub.s32 2, %v1939
      %v1941 = vrot.slane %v1763, %v1940
      %v1942 = vlaneseq
      %v1943 = vshrl.u32 %v1942, 7
      %v1944 = vsub.s32 2, %v1943
      %v1945 = vrot.slane %v1764, %v1944
      %v1946 = vlaneseq
      %v1947 = vshrl.u32 %v1946, 7
      %v1948 = vsub.s32 2, %v1947
      %v1949 = vrot.slane %v1765, %v1948
      %v1950 = vlaneseq
      %v1951 = vshrl.u32 %v1950, 7
      %v1952 = vsub.s32 2, %v1951
      %v1953 = vrot.slane %v1766, %v1952
      %v1954 = vlaneseq
      %v1955 = vshrl.u32 %v1954, 7
      %v1956 = vsub.s32 2, %v1955
      %v1957 = vrot.slane %v1767, %v1956
      %v1958 = vlaneseq
      %v1959 = vshrl.u32 %v1958, 7
      %v1960 = vsub.s32 2, %v1959
      %v1961 = vrot.slane %v1768, %v1960
      %v1962 = vlaneseq
      %v1963 = vshrl.u32 %v1962, 7
      %v1964 = vsub.s32 2, %v1963
      %v1965 = vrot.slane %v1769, %v1964
      %v1966 = vmul.f32 %v1933, %v1937
      %v1967 = vmul.f32 %v1932, %v1941
      %v1968 = vmul.f32 %v1931, %v1945
      %v1969 = vmul.f32 %v1930, %v1949
      %v1970 = vmul.f32 %v1929, %v1953
      %v1971 = vmul.f32 %v1928, %v1957
      %v1972 = vmul.f32 %v1927, %v1961
      %v1973 = vmul.f32 %v1926, %v1965
      %1974 = vrot.lane.b32.xlu0 %v1754, 2
      %v1975 = vpop.permute.xlu0 %1974
      %1976 = vrot.lane.b32.xlu0 %v1755, 2
      %v1977 = vpop.permute.xlu0 %1976
      %1978 = vrot.lane.b32.xlu0 %v1756, 2
      %v1979 = vpop.permute.xlu0 %1978
      %1980 = vrot.lane.b32.xlu0 %v1757, 2
      %v1981 = vpop.permute.xlu0 %1980
      %1982 = vrot.lane.b32.xlu0 %v1758, 2
      %v1983 = vpop.permute.xlu0 %1982
      %1984 = vrot.lane.b32.xlu0 %v1759, 2
      %v1985 = vpop.permute.xlu0 %1984
      %1986 = vrot.lane.b32.xlu0 %v1760, 2
      %v1987 = vpop.permute.xlu0 %1986
      %1988 = vrot.lane.b32.xlu0 %v1761, 2
      %v1989 = vpop.permute.xlu0 %1988
      %vm1990 = vcmp.lt.s32.totalorder %v457, 2
      %v1991 = vsel %vm1990, %v1987, %v1989
      %v1992 = vsel %vm1990, %v1985, %v1987
      %v1993 = vsel %vm1990, %v1983, %v1985
      %v1994 = vsel %vm1990, %v1981, %v1983
      %v1995 = vsel %vm1990, %v1979, %v1981
      %v1996 = vsel %vm1990, %v1977, %v1979
      %v1997 = vsel %vm1990, %v1975, %v1977
      %v1998 = vsel %vm1990, %v1989, %v1975
      %v1999 = vlaneseq
      %v2000 = vshrl.u32 %v1999, 7
      %v2001 = vsub.s32 3, %v2000
      %v2002 = vrot.slane %v1762, %v2001
      %v2003 = vlaneseq
      %v2004 = vshrl.u32 %v2003, 7
      %v2005 = vsub.s32 3, %v2004
      %v2006 = vrot.slane %v1763, %v2005
      %v2007 = vlaneseq
      %v2008 = vshrl.u32 %v2007, 7
      %v2009 = vsub.s32 3, %v2008
      %v2010 = vrot.slane %v1764, %v2009
      %v2011 = vlaneseq
      %v2012 = vshrl.u32 %v2011, 7
      %v2013 = vsub.s32 3, %v2012
      %v2014 = vrot.slane %v1765, %v2013
      %v2015 = vlaneseq
      %v2016 = vshrl.u32 %v2015, 7
      %v2017 = vsub.s32 3, %v2016
      %v2018 = vrot.slane %v1766, %v2017
      %v2019 = vlaneseq
      %v2020 = vshrl.u32 %v2019, 7
      %v2021 = vsub.s32 3, %v2020
      %v2022 = vrot.slane %v1767, %v2021
      %v2023 = vlaneseq
      %v2024 = vshrl.u32 %v2023, 7
      %v2025 = vsub.s32 3, %v2024
      %v2026 = vrot.slane %v1768, %v2025
      %v2027 = vlaneseq
      %v2028 = vshrl.u32 %v2027, 7
      %v2029 = vsub.s32 3, %v2028
      %v2030 = vrot.slane %v1769, %v2029
      %v2031 = vmul.f32 %v1998, %v2002
      %v2032 = vmul.f32 %v1997, %v2006
      %v2033 = vmul.f32 %v1996, %v2010
      %v2034 = vmul.f32 %v1995, %v2014
      %v2035 = vmul.f32 %v1994, %v2018
      %v2036 = vmul.f32 %v1993, %v2022
      %v2037 = vmul.f32 %v1992, %v2026
      %v2038 = vmul.f32 %v1991, %v2030
      %v2039 = vlaneseq
      %v2040 = vshrl.u32 %v2039, 7
      %v2041 = vsub.s32 4, %v2040
      %v2042 = vrot.slane %v1762, %v2041
      %v2043 = vlaneseq
      %v2044 = vshrl.u32 %v2043, 7
      %v2045 = vsub.s32 4, %v2044
      %v2046 = vrot.slane %v1763, %v2045
      %v2047 = vlaneseq
      %v2048 = vshrl.u32 %v2047, 7
      %v2049 = vsub.s32 4, %v2048
      %v2050 = vrot.slane %v1764, %v2049
      %v2051 = vlaneseq
      %v2052 = vshrl.u32 %v2051, 7
      %v2053 = vsub.s32 4, %v2052
      %v2054 = vrot.slane %v1765, %v2053
      %v2055 = vlaneseq
      %v2056 = vshrl.u32 %v2055, 7
      %v2057 = vsub.s32 4, %v2056
      %v2058 = vrot.slane %v1766, %v2057
      %v2059 = vlaneseq
      %v2060 = vshrl.u32 %v2059, 7
      %v2061 = vsub.s32 4, %v2060
      %v2062 = vrot.slane %v1767, %v2061
      %v2063 = vlaneseq
      %v2064 = vshrl.u32 %v2063, 7
      %v2065 = vsub.s32 4, %v2064
      %v2066 = vrot.slane %v1768, %v2065
      %v2067 = vlaneseq
      %v2068 = vshrl.u32 %v2067, 7
      %v2069 = vsub.s32 4, %v2068
      %v2070 = vrot.slane %v1769, %v2069
      %v2071 = vmul.f32 %v1754, %v2042
      %v2072 = vmul.f32 %v1755, %v2046
      %v2073 = vmul.f32 %v1756, %v2050
      %v2074 = vmul.f32 %v1757, %v2054
      %v2075 = vmul.f32 %v1758, %v2058
      %v2076 = vmul.f32 %v1759, %v2062
      %v2077 = vmul.f32 %v1760, %v2066
      %v2078 = vmul.f32 %v1761, %v2070
      %2079 = vrot.lane.b32.xlu0 %v1754, 126
      %v2080 = vpop.permute.xlu0 %2079
      %2081 = vrot.lane.b32.xlu0 %v1755, 126
      %v2082 = vpop.permute.xlu0 %2081
      %2083 = vrot.lane.b32.xlu0 %v1756, 126
      %v2084 = vpop.permute.xlu0 %2083
      %2085 = vrot.lane.b32.xlu0 %v1757, 126
      %v2086 = vpop.permute.xlu0 %2085
      %2087 = vrot.lane.b32.xlu0 %v1758, 126
      %v2088 = vpop.permute.xlu0 %2087
      %2089 = vrot.lane.b32.xlu0 %v1759, 126
      %v2090 = vpop.permute.xlu0 %2089
      %2091 = vrot.lane.b32.xlu0 %v1760, 126
      %v2092 = vpop.permute.xlu0 %2091
      %2093 = vrot.lane.b32.xlu0 %v1761, 126
      %v2094 = vpop.permute.xlu0 %2093
      %vm2095 = vcmp.lt.s32.totalorder %v457, 126
      %v2096 = vsel %vm2095, %v2092, %v2094
      %v2097 = vsel %vm2095, %v2090, %v2092
      %v2098 = vsel %vm2095, %v2088, %v2090
      %v2099 = vsel %vm2095, %v2086, %v2088
      %v2100 = vsel %vm2095, %v2084, %v2086
      %v2101 = vsel %vm2095, %v2082, %v2084
      %v2102 = vsel %vm2095, %v2080, %v2082
      %v2103 = vsel %vm2095, %v2094, %v2080
      %v2104 = vlaneseq
      %v2105 = vshrl.u32 %v2104, 7
      %v2106 = vsub.s32 5, %v2105
      %v2107 = vrot.slane %v1762, %v2106
      %v2108 = vlaneseq
      %v2109 = vshrl.u32 %v2108, 7
      %v2110 = vsub.s32 5, %v2109
      %v2111 = vrot.slane %v1763, %v2110
      %v2112 = vlaneseq
      %v2113 = vshrl.u32 %v2112, 7
      %v2114 = vsub.s32 5, %v2113
      %v2115 = vrot.slane %v1764, %v2114
      %v2116 = vlaneseq
      %v2117 = vshrl.u32 %v2116, 7
      %v2118 = vsub.s32 5, %v2117
      %v2119 = vrot.slane %v1765, %v2118
      %v2120 = vlaneseq
      %v2121 = vshrl.u32 %v2120, 7
      %v2122 = vsub.s32 5, %v2121
      %v2123 = vrot.slane %v1766, %v2122
      %v2124 = vlaneseq
      %v2125 = vshrl.u32 %v2124, 7
      %v2126 = vsub.s32 5, %v2125
      %v2127 = vrot.slane %v1767, %v2126
      %v2128 = vlaneseq
      %v2129 = vshrl.u32 %v2128, 7
      %v2130 = vsub.s32 5, %v2129
      %v2131 = vrot.slane %v1768, %v2130
      %v2132 = vlaneseq
      %v2133 = vshrl.u32 %v2132, 7
      %v2134 = vsub.s32 5, %v2133
      %v2135 = vrot.slane %v1769, %v2134
      %v2136 = vmul.f32 %v2102, %v2107
      %v2137 = vmul.f32 %v2101, %v2111
      %v2138 = vmul.f32 %v2100, %v2115
      %v2139 = vmul.f32 %v2099, %v2119
      %v2140 = vmul.f32 %v2098, %v2123
      %v2141 = vmul.f32 %v2097, %v2127
      %v2142 = vmul.f32 %v2096, %v2131
      %v2143 = vmul.f32 %v2103, %v2135
      %2144 = vrot.lane.b32.xlu0 %v1754, 98
      %v2145 = vpop.permute.xlu0 %2144
      %2146 = vrot.lane.b32.xlu0 %v1755, 98
      %v2147 = vpop.permute.xlu0 %2146
      %2148 = vrot.lane.b32.xlu0 %v1756, 98
      %v2149 = vpop.permute.xlu0 %2148
      %2150 = vrot.lane.b32.xlu0 %v1757, 98
      %v2151 = vpop.permute.xlu0 %2150
      %2152 = vrot.lane.b32.xlu0 %v1758, 98
      %v2153 = vpop.permute.xlu0 %2152
      %2154 = vrot.lane.b32.xlu0 %v1759, 98
      %v2155 = vpop.permute.xlu0 %2154
      %2156 = vrot.lane.b32.xlu0 %v1760, 98
      %v2157 = vpop.permute.xlu0 %2156
      %2158 = vrot.lane.b32.xlu0 %v1761, 98
      %v2159 = vpop.permute.xlu0 %2158
      %vm2160 = vcmp.lt.s32.totalorder %v457, 98
      %v2161 = vsel %vm2160, %v2157, %v2159
      %v2162 = vsel %vm2160, %v2155, %v2157
      %v2163 = vsel %vm2160, %v2153, %v2155
      %v2164 = vsel %vm2160, %v2151, %v2153
      %v2165 = vsel %vm2160, %v2149, %v2151
      %v2166 = vsel %vm2160, %v2147, %v2149
      %v2167 = vsel %vm2160, %v2145, %v2147
      %v2168 = vsel %vm2160, %v2159, %v2145
      %v2169 = vlaneseq
      %v2170 = vshrl.u32 %v2169, 7
      %v2171 = vsub.s32 6, %v2170
      %v2172 = vrot.slane %v1762, %v2171
      %v2173 = vlaneseq
      %v2174 = vshrl.u32 %v2173, 7
      %v2175 = vsub.s32 6, %v2174
      %v2176 = vrot.slane %v1763, %v2175
      %v2177 = vlaneseq
      %v2178 = vshrl.u32 %v2177, 7
      %v2179 = vsub.s32 6, %v2178
      %v2180 = vrot.slane %v1764, %v2179
      %v2181 = vlaneseq
      %v2182 = vshrl.u32 %v2181, 7
      %v2183 = vsub.s32 6, %v2182
      %v2184 = vrot.slane %v1765, %v2183
      %v2185 = vlaneseq
      %v2186 = vshrl.u32 %v2185, 7
      %v2187 = vsub.s32 6, %v2186
      %v2188 = vrot.slane %v1766, %v2187
      %v2189 = vlaneseq
      %v2190 = vshrl.u32 %v2189, 7
      %v2191 = vsub.s32 6, %v2190
      %v2192 = vrot.slane %v1767, %v2191
      %v2193 = vlaneseq
      %v2194 = vshrl.u32 %v2193, 7
      %v2195 = vsub.s32 6, %v2194
      %v2196 = vrot.slane %v1768, %v2195
      %v2197 = vlaneseq
      %v2198 = vshrl.u32 %v2197, 7
      %v2199 = vsub.s32 6, %v2198
      %v2200 = vrot.slane %v1769, %v2199
      %v2201 = vmul.f32 %v2167, %v2172
      %v2202 = vmul.f32 %v2166, %v2176
      %v2203 = vmul.f32 %v2165, %v2180
      %v2204 = vmul.f32 %v2164, %v2184
      %v2205 = vmul.f32 %v2163, %v2188
      %v2206 = vmul.f32 %v2162, %v2192
      %v2207 = vmul.f32 %v2161, %v2196
      %v2208 = vmul.f32 %v2168, %v2200
      %2209 = vrot.lane.b32.xlu0 %v1754, 96
      %v2210 = vpop.permute.xlu0 %2209
      %2211 = vrot.lane.b32.xlu0 %v1755, 96
      %v2212 = vpop.permute.xlu0 %2211
      %2213 = vrot.lane.b32.xlu0 %v1756, 96
      %v2214 = vpop.permute.xlu0 %2213
      %2215 = vrot.lane.b32.xlu0 %v1757, 96
      %v2216 = vpop.permute.xlu0 %2215
      %2217 = vrot.lane.b32.xlu0 %v1758, 96
      %v2218 = vpop.permute.xlu0 %2217
      %2219 = vrot.lane.b32.xlu0 %v1759, 96
      %v2220 = vpop.permute.xlu0 %2219
      %2221 = vrot.lane.b32.xlu0 %v1760, 96
      %v2222 = vpop.permute.xlu0 %2221
      %2223 = vrot.lane.b32.xlu0 %v1761, 96
      %v2224 = vpop.permute.xlu0 %2223
      %vm2225 = vcmp.lt.s32.totalorder %v457, 96
      %v2226 = vsel %vm2225, %v2222, %v2224
      %v2227 = vsel %vm2225, %v2220, %v2222
      %v2228 = vsel %vm2225, %v2218, %v2220
      %v2229 = vsel %vm2225, %v2216, %v2218
      %v2230 = vsel %vm2225, %v2214, %v2216
      %v2231 = vsel %vm2225, %v2212, %v2214
      %v2232 = vsel %vm2225, %v2210, %v2212
      %v2233 = vsel %vm2225, %v2224, %v2210
      %v2234 = vlaneseq
      %v2235 = vshrl.u32 %v2234, 7
      %v2236 = vsub.s32 7, %v2235
      %v2237 = vrot.slane %v1762, %v2236
      %v2238 = vlaneseq
      %v2239 = vshrl.u32 %v2238, 7
      %v2240 = vsub.s32 7, %v2239
      %v2241 = vrot.slane %v1763, %v2240
      %v2242 = vlaneseq
      %v2243 = vshrl.u32 %v2242, 7
      %v2244 = vsub.s32 7, %v2243
      %v2245 = vrot.slane %v1764, %v2244
      %v2246 = vlaneseq
      %v2247 = vshrl.u32 %v2246, 7
      %v2248 = vsub.s32 7, %v2247
      %v2249 = vrot.slane %v1765, %v2248
      %v2250 = vlaneseq
      %v2251 = vshrl.u32 %v2250, 7
      %v2252 = vsub.s32 7, %v2251
      %v2253 = vrot.slane %v1766, %v2252
      %v2254 = vlaneseq
      %v2255 = vshrl.u32 %v2254, 7
      %v2256 = vsub.s32 7, %v2255
      %v2257 = vrot.slane %v1767, %v2256
      %v2258 = vlaneseq
      %v2259 = vshrl.u32 %v2258, 7
      %v2260 = vsub.s32 7, %v2259
      %v2261 = vrot.slane %v1768, %v2260
      %v2262 = vlaneseq
      %v2263 = vshrl.u32 %v2262, 7
      %v2264 = vsub.s32 7, %v2263
      %v2265 = vrot.slane %v1769, %v2264
      %v2266 = vmul.f32 %v2232, %v2237
      %v2267 = vmul.f32 %v2231, %v2241
      %v2268 = vmul.f32 %v2230, %v2245
      %v2269 = vmul.f32 %v2229, %v2249
      %v2270 = vmul.f32 %v2228, %v2253
      %v2271 = vmul.f32 %v2227, %v2257
      %v2272 = vmul.f32 %v2226, %v2261
      %v2273 = vmul.f32 %v2233, %v2265
      %2274 = vrot.lane.b32.xlu0 %v1754, 94
      %v2275 = vpop.permute.xlu0 %2274
      %2276 = vrot.lane.b32.xlu0 %v1755, 94
      %v2277 = vpop.permute.xlu0 %2276
      %2278 = vrot.lane.b32.xlu0 %v1756, 94
      %v2279 = vpop.permute.xlu0 %2278
      %2280 = vrot.lane.b32.xlu0 %v1757, 94
      %v2281 = vpop.permute.xlu0 %2280
      %2282 = vrot.lane.b32.xlu0 %v1758, 94
      %v2283 = vpop.permute.xlu0 %2282
      %2284 = vrot.lane.b32.xlu0 %v1759, 94
      %v2285 = vpop.permute.xlu0 %2284
      %2286 = vrot.lane.b32.xlu0 %v1760, 94
      %v2287 = vpop.permute.xlu0 %2286
      %2288 = vrot.lane.b32.xlu0 %v1761, 94
      %v2289 = vpop.permute.xlu0 %2288
      %vm2290 = vcmp.lt.s32.totalorder %v457, 94
      %v2291 = vsel %vm2290, %v2287, %v2289
      %v2292 = vsel %vm2290, %v2285, %v2287
      %v2293 = vsel %vm2290, %v2283, %v2285
      %v2294 = vsel %vm2290, %v2281, %v2283
      %v2295 = vsel %vm2290, %v2279, %v2281
      %v2296 = vsel %vm2290, %v2277, %v2279
      %v2297 = vsel %vm2290, %v2275, %v2277
      %v2298 = vsel %vm2290, %v2289, %v2275
      %v2299 = vlaneseq
      %v2300 = vshrl.u32 %v2299, 7
      %v2301 = vsub.s32 0, %v2300
      %v2302 = vrot.slane %v1770, %v2301
      %v2303 = vlaneseq
      %v2304 = vshrl.u32 %v2303, 7
      %v2305 = vsub.s32 0, %v2304
      %v2306 = vrot.slane %v1771, %v2305
      %v2307 = vlaneseq
      %v2308 = vshrl.u32 %v2307, 7
      %v2309 = vsub.s32 0, %v2308
      %v2310 = vrot.slane %v1772, %v2309
      %v2311 = vlaneseq
      %v2312 = vshrl.u32 %v2311, 7
      %v2313 = vsub.s32 0, %v2312
      %v2314 = vrot.slane %v1773, %v2313
      %v2315 = vlaneseq
      %v2316 = vshrl.u32 %v2315, 7
      %v2317 = vsub.s32 0, %v2316
      %v2318 = vrot.slane %v1774, %v2317
      %v2319 = vlaneseq
      %v2320 = vshrl.u32 %v2319, 7
      %v2321 = vsub.s32 0, %v2320
      %v2322 = vrot.slane %v1775, %v2321
      %v2323 = vlaneseq
      %v2324 = vshrl.u32 %v2323, 7
      %v2325 = vsub.s32 0, %v2324
      %v2326 = vrot.slane %v1776, %v2325
      %v2327 = vlaneseq
      %v2328 = vshrl.u32 %v2327, 7
      %v2329 = vsub.s32 0, %v2328
      %v2330 = vrot.slane %v1777, %v2329
      %v2331 = vmul.f32 %v2297, %v2302
      %v2332 = vmul.f32 %v2296, %v2306
      %v2333 = vmul.f32 %v2295, %v2310
      %v2334 = vmul.f32 %v2294, %v2314
      %v2335 = vmul.f32 %v2293, %v2318
      %v2336 = vmul.f32 %v2292, %v2322
      %v2337 = vmul.f32 %v2291, %v2326
      %v2338 = vmul.f32 %v2298, %v2330
      %v2339 = vpack.c.bf16 %v1901, %v1836
      %v2340 = vpack.c.bf16 %v1902, %v1837
      %v2341 = vpack.c.bf16 %v1903, %v1838
      %v2342 = vpack.c.bf16 %v1904, %v1839
      %v2343 = vpack.c.bf16 %v1905, %v1840
      %v2344 = vpack.c.bf16 %v1906, %v1841
      %v2345 = vpack.c.bf16 %v1907, %v1842
      %v2346 = vpack.c.bf16 %v1908, %v1843
      %v2347 = vpack.c.bf16 %v2031, %v1966
      %v2348 = vpack.c.bf16 %v2032, %v1967
      %v2349 = vpack.c.bf16 %v2033, %v1968
      %v2350 = vpack.c.bf16 %v2034, %v1969
      %v2351 = vpack.c.bf16 %v2035, %v1970
      %v2352 = vpack.c.bf16 %v2036, %v1971
      %v2353 = vpack.c.bf16 %v2037, %v1972
      %v2354 = vpack.c.bf16 %v2038, %v1973
      %v2355 = vpack.c.bf16 %v2136, %v2071
      %v2356 = vpack.c.bf16 %v2137, %v2072
      %v2357 = vpack.c.bf16 %v2138, %v2073
      %v2358 = vpack.c.bf16 %v2139, %v2074
      %v2359 = vpack.c.bf16 %v2140, %v2075
      %v2360 = vpack.c.bf16 %v2141, %v2076
      %v2361 = vpack.c.bf16 %v2142, %v2077
      %v2362 = vpack.c.bf16 %v2143, %v2078
      %v2363 = vpack.c.bf16 %v2266, %v2201
      %v2364 = vpack.c.bf16 %v2267, %v2202
      %v2365 = vpack.c.bf16 %v2268, %v2203
      %v2366 = vpack.c.bf16 %v2269, %v2204
      %v2367 = vpack.c.bf16 %v2270, %v2205
      %v2368 = vpack.c.bf16 %v2271, %v2206
      %v2369 = vpack.c.bf16 %v2272, %v2207
      %v2370 = vpack.c.bf16 %v2273, %v2208
      %v2371 = vpack.c.bf16 1.0, %v2331
      %v2372 = vpack.c.bf16 1.0, %v2332
      %v2373 = vpack.c.bf16 1.0, %v2333
      %v2374 = vpack.c.bf16 1.0, %v2334
      %v2375 = vpack.c.bf16 1.0, %v2335
      %v2376 = vpack.c.bf16 1.0, %v2336
      %v2377 = vpack.c.bf16 1.0, %v2337
      %v2378 = vpack.c.bf16 1.0, %v2338
      %v2380 = vsel %vm1042, %v1778, 0
      %2382 = vmatprep.subr.bf16.mxu0 0
      %2383 = vmatpush1.bf16.msra.mxu0 0
      %2384 = vmatprep.subr.bf16.mxu0 0
      %2385 = vmatpush1.bf16.msra.mxu0 0
      %2386 = vmatprep.subr.bf16.mxu0 0
      %2387 = vmatpush1.bf16.msra.mxu0 0
      %2388 = vmatprep.subr.bf16.mxu0 %v2372
      %2389 = vmatpush1.bf16.msra.mxu0 %v2371
      %2390 = vmatprep.subr.bf16.mxu0 %v2364
      %2391 = vmatpush1.bf16.msra.mxu0 %v2363
      %2392 = vmatprep.subr.bf16.mxu0 %v2356
      %2393 = vmatpush1.bf16.msra.mxu0 %v2355
      %2394 = vmatprep.subr.bf16.mxu0 %v2348
      %2395 = vmatpush1.bf16.msra.mxu0 %v2347
      %2396 = vmatprep.subr.bf16.mxu0 %v2340
      %2397 = vmatpush1.bf16.msra.mxu0 %v2339
      %2398 = vmatprep.subr.bf16.mxu0 0
      %2399 = vmatpush2.bf16.msra.mxu0 0
      %2400 = vmatprep.subr.bf16.mxu0 0
      %2401 = vmatpush2.bf16.msra.mxu0 0
      %2402 = vmatprep.subr.bf16.mxu0 0
      %2403 = vmatpush2.bf16.msra.mxu0 0
      %2404 = vmatprep.subr.bf16.mxu0 0
      %2405 = vmatpush2.bf16.msra.mxu0 0
      %2406 = vmatprep.subr.bf16.mxu0 0
      %2407 = vmatpush2.bf16.msra.mxu0 0
      %2408 = vmatprep.subr.bf16.mxu0 0
      %2409 = vmatpush2.bf16.msra.mxu0 0
      %2410 = vmatprep.subr.bf16.mxu0 0
      %2411 = vmatpush2.bf16.msra.mxu0 0
      %2412 = vmatprep.subr.bf16.mxu0 0
      %2413 = vmatpush2.bf16.msra.mxu0 0
      %2414 = vmatprep.mubr.bf16.mxu0 0
      %2415 = vmatmul.mubr.bf16.gmra.mxu0 %v2380
      %v2416 = vpop.f32.mrf.mxu0
      %v2417 = vadd.f32 0.0, %v2416
      %v2418 = vpop.f32.mrf.mxu0
      %v2419 = vadd.f32 0.0, %v2418
      %v2420 = vpop.f32.mrf.mxu0
      %v2421 = vpop.f32.mrf.mxu0
      %2422 = vdwg.mxu0
      %2423 = vmatprep.subr.bf16.mxu0 0
      %2424 = vmatpush1.bf16.msra.mxu0 0
      %2425 = vmatprep.subr.bf16.mxu0 0
      %2426 = vmatpush1.bf16.msra.mxu0 0
      %2427 = vmatprep.subr.bf16.mxu0 0
      %2428 = vmatpush1.bf16.msra.mxu0 0
      %2429 = vmatprep.subr.bf16.mxu0 %v2374
      %2430 = vmatpush1.bf16.msra.mxu0 %v2373
      %2431 = vmatprep.subr.bf16.mxu0 %v2366
      %2432 = vmatpush1.bf16.msra.mxu0 %v2365
      %2433 = vmatprep.subr.bf16.mxu0 %v2358
      %2434 = vmatpush1.bf16.msra.mxu0 %v2357
      %2435 = vmatprep.subr.bf16.mxu0 %v2350
      %2436 = vmatpush1.bf16.msra.mxu0 %v2349
      %2437 = vmatprep.subr.bf16.mxu0 %v2342
      %2438 = vmatpush1.bf16.msra.mxu0 %v2341
      %2439 = vmatprep.subr.bf16.mxu0 0
      %2440 = vmatpush2.bf16.msra.mxu0 0
      %2441 = vmatprep.subr.bf16.mxu0 0
      %2442 = vmatpush2.bf16.msra.mxu0 0
      %2443 = vmatprep.subr.bf16.mxu0 0
      %2444 = vmatpush2.bf16.msra.mxu0 0
      %2445 = vmatprep.subr.bf16.mxu0 0
      %2446 = vmatpush2.bf16.msra.mxu0 0
      %2447 = vmatprep.subr.bf16.mxu0 0
      %2448 = vmatpush2.bf16.msra.mxu0 0
      %2449 = vmatprep.subr.bf16.mxu0 0
      %2450 = vmatpush2.bf16.msra.mxu0 0
      %2451 = vmatprep.subr.bf16.mxu0 0
      %2452 = vmatpush2.bf16.msra.mxu0 0
      %2453 = vmatprep.subr.bf16.mxu0 0
      %2454 = vmatpush2.bf16.msra.mxu0 0
      %2455 = vmatprep.mubr.bf16.mxu0 0
      %2456 = vmatmul.mubr.bf16.gmra.mxu0 %v2380
      %v2457 = vpop.f32.mrf.mxu0
      %v2458 = vadd.f32 0.0, %v2457
      %v2459 = vpop.f32.mrf.mxu0
      %v2460 = vadd.f32 0.0, %v2459
      %v2461 = vpop.f32.mrf.mxu0
      %v2462 = vpop.f32.mrf.mxu0
      %2463 = vdwg.mxu0
      %2464 = vmatprep.subr.bf16.mxu0 0
      %2465 = vmatpush1.bf16.msra.mxu0 0
      %2466 = vmatprep.subr.bf16.mxu0 0
      %2467 = vmatpush1.bf16.msra.mxu0 0
      %2468 = vmatprep.subr.bf16.mxu0 0
      %2469 = vmatpush1.bf16.msra.mxu0 0
      %2470 = vmatprep.subr.bf16.mxu0 %v2376
      %2471 = vmatpush1.bf16.msra.mxu0 %v2375
      %2472 = vmatprep.subr.bf16.mxu0 %v2368
      %2473 = vmatpush1.bf16.msra.mxu0 %v2367
      %2474 = vmatprep.subr.bf16.mxu0 %v2360
      %2475 = vmatpush1.bf16.msra.mxu0 %v2359
      %2476 = vmatprep.subr.bf16.mxu0 %v2352
      %2477 = vmatpush1.bf16.msra.mxu0 %v2351
      %2478 = vmatprep.subr.bf16.mxu0 %v2344
      %2479 = vmatpush1.bf16.msra.mxu0 %v2343
      %2480 = vmatprep.subr.bf16.mxu0 0
      %2481 = vmatpush2.bf16.msra.mxu0 0
      %2482 = vmatprep.subr.bf16.mxu0 0
      %2483 = vmatpush2.bf16.msra.mxu0 0
      %2484 = vmatprep.subr.bf16.mxu0 0
      %2485 = vmatpush2.bf16.msra.mxu0 0
      %2486 = vmatprep.subr.bf16.mxu0 0
      %2487 = vmatpush2.bf16.msra.mxu0 0
      %2488 = vmatprep.subr.bf16.mxu0 0
      %2489 = vmatpush2.bf16.msra.mxu0 0
      %2490 = vmatprep.subr.bf16.mxu0 0
      %2491 = vmatpush2.bf16.msra.mxu0 0
      %2492 = vmatprep.subr.bf16.mxu0 0
      %2493 = vmatpush2.bf16.msra.mxu0 0
      %2494 = vmatprep.subr.bf16.mxu0 0
      %2495 = vmatpush2.bf16.msra.mxu0 0
      %2496 = vmatprep.mubr.bf16.mxu0 0
      %2497 = vmatmul.mubr.bf16.gmra.mxu0 %v2380
      %v2498 = vpop.f32.mrf.mxu0
      %v2499 = vadd.f32 0.0, %v2498
      %v2500 = vpop.f32.mrf.mxu0
      %v2501 = vadd.f32 0.0, %v2500
      %v2502 = vpop.f32.mrf.mxu0
      %v2503 = vpop.f32.mrf.mxu0
      %2504 = vdwg.mxu0
      %2505 = vmatprep.subr.bf16.mxu0 0
      %2506 = vmatpush1.bf16.msra.mxu0 0
      %2507 = vmatprep.subr.bf16.mxu0 0
      %2508 = vmatpush1.bf16.msra.mxu0 0
      %2509 = vmatprep.subr.bf16.mxu0 0
      %2510 = vmatpush1.bf16.msra.mxu0 0
      %2511 = vmatprep.subr.bf16.mxu0 %v2378
      %2512 = vmatpush1.bf16.msra.mxu0 %v2377
      %2513 = vmatprep.subr.bf16.mxu0 %v2370
      %2514 = vmatpush1.bf16.msra.mxu0 %v2369
      %2515 = vmatprep.subr.bf16.mxu0 %v2362
      %2516 = vmatpush1.bf16.msra.mxu0 %v2361
      %2517 = vmatprep.subr.bf16.mxu0 %v2354
      %2518 = vmatpush1.bf16.msra.mxu0 %v2353
      %2519 = vmatprep.subr.bf16.mxu0 %v2346
      %2520 = vmatpush1.bf16.msra.mxu0 %v2345
      %2521 = vmatprep.subr.bf16.mxu0 0
      %2522 = vmatpush2.bf16.msra.mxu0 0
      %2523 = vmatprep.subr.bf16.mxu0 0
      %2524 = vmatpush2.bf16.msra.mxu0 0
      %2525 = vmatprep.subr.bf16.mxu0 0
      %2526 = vmatpush2.bf16.msra.mxu0 0
      %2527 = vmatprep.subr.bf16.mxu0 0
      %2528 = vmatpush2.bf16.msra.mxu0 0
      %2529 = vmatprep.subr.bf16.mxu0 0
      %2530 = vmatpush2.bf16.msra.mxu0 0
      %2531 = vmatprep.subr.bf16.mxu0 0
      %2532 = vmatpush2.bf16.msra.mxu0 0
      %2533 = vmatprep.subr.bf16.mxu0 0
      %2534 = vmatpush2.bf16.msra.mxu0 0
      %2535 = vmatprep.subr.bf16.mxu0 0
      %2536 = vmatpush2.bf16.msra.mxu0 0
      %2537 = vmatprep.mubr.bf16.mxu0 0
      %2538 = vmatmul.mubr.bf16.gmra.mxu0 %v2380
      %v2539 = vpop.f32.mrf.mxu0
      %v2540 = vadd.f32 0.0, %v2539
      %v2541 = vpop.f32.mrf.mxu0
      %v2542 = vadd.f32 0.0, %v2541
      %v2543 = vpop.f32.mrf.mxu0
      %v2544 = vpop.f32.mrf.mxu0
      %2545 = vdwg.mxu0
      %v2546 = vmax.f32 %v2417, 0.0
      %v2547 = vmax.f32 %v2419, 0.0
      %v2548 = vmax.f32 %v2458, 0.0
      %v2549 = vmax.f32 %v2460, 0.0
      %v2550 = vmax.f32 %v2499, 0.0
      %v2551 = vmax.f32 %v2501, 0.0
      %v2552 = vmax.f32 %v2540, 0.0
      %v2553 = vmax.f32 %v2542, 0.0
      %v2554 = vld [vmem:[%s4] sm:$0xf]
      %2555 = vrot.lane.b32.xlu0 %v2546, 34
      %v2556 = vpop.permute.xlu0 %2555
      %2557 = vrot.lane.b32.xlu0 %v2547, 34
      %v2558 = vpop.permute.xlu0 %2557
      %2559 = vrot.lane.b32.xlu0 %v2548, 34
      %v2560 = vpop.permute.xlu0 %2559
      %2561 = vrot.lane.b32.xlu0 %v2549, 34
      %v2562 = vpop.permute.xlu0 %2561
      %2563 = vrot.lane.b32.xlu0 %v2550, 34
      %v2564 = vpop.permute.xlu0 %2563
      %2565 = vrot.lane.b32.xlu0 %v2551, 34
      %v2566 = vpop.permute.xlu0 %2565
      %2567 = vrot.lane.b32.xlu0 %v2552, 34
      %v2568 = vpop.permute.xlu0 %2567
      %2569 = vrot.lane.b32.xlu0 %v2553, 34
      %v2570 = vpop.permute.xlu0 %2569
      %v2571 = vsel %vm1795, %v2568, %v2570
      %v2572 = vsel %vm1795, %v2566, %v2568
      %v2573 = vsel %vm1795, %v2564, %v2566
      %v2574 = vsel %vm1795, %v2562, %v2564
      %v2575 = vsel %vm1795, %v2560, %v2562
      %v2576 = vsel %vm1795, %v2558, %v2560
      %v2577 = vsel %vm1795, %v2556, %v2558
      %v2578 = vsel %vm1795, %v2570, %v2556
      %v2579 = vmul.f32 %v2578, %v1807
      %v2580 = vmul.f32 %v2577, %v1811
      %v2581 = vmul.f32 %v2576, %v1815
      %v2582 = vmul.f32 %v2575, %v1819
      %v2583 = vmul.f32 %v2574, %v1823
      %v2584 = vmul.f32 %v2573, %v1827
      %v2585 = vmul.f32 %v2572, %v1831
      %v2586 = vmul.f32 %v2571, %v1835
      %2587 = vrot.lane.b32.xlu0 %v2546, 32
      %v2588 = vpop.permute.xlu0 %2587
      %2589 = vrot.lane.b32.xlu0 %v2547, 32
      %v2590 = vpop.permute.xlu0 %2589
      %2591 = vrot.lane.b32.xlu0 %v2548, 32
      %v2592 = vpop.permute.xlu0 %2591
      %2593 = vrot.lane.b32.xlu0 %v2549, 32
      %v2594 = vpop.permute.xlu0 %2593
      %2595 = vrot.lane.b32.xlu0 %v2550, 32
      %v2596 = vpop.permute.xlu0 %2595
      %2597 = vrot.lane.b32.xlu0 %v2551, 32
      %v2598 = vpop.permute.xlu0 %2597
      %2599 = vrot.lane.b32.xlu0 %v2552, 32
      %v2600 = vpop.permute.xlu0 %2599
      %2601 = vrot.lane.b32.xlu0 %v2553, 32
      %v2602 = vpop.permute.xlu0 %2601
      %v2603 = vsel %vm1860, %v2600, %v2602
      %v2604 = vsel %vm1860, %v2598, %v2600
      %v2605 = vsel %vm1860, %v2596, %v2598
      %v2606 = vsel %vm1860, %v2594, %v2596
      %v2607 = vsel %vm1860, %v2592, %v2594
      %v2608 = vsel %vm1860, %v2590, %v2592
      %v2609 = vsel %vm1860, %v2588, %v2590
      %v2610 = vsel %vm1860, %v2602, %v2588
      %v2611 = vmul.f32 %v2610, %v1872
      %v2612 = vmul.f32 %v2609, %v1876
      %v2613 = vmul.f32 %v2608, %v1880
      %v2614 = vmul.f32 %v2607, %v1884
      %v2615 = vmul.f32 %v2606, %v1888
      %v2616 = vmul.f32 %v2605, %v1892
      %v2617 = vmul.f32 %v2604, %v1896
      %v2618 = vmul.f32 %v2603, %v1900
      %2619 = vrot.lane.b32.xlu0 %v2546, 30
      %v2620 = vpop.permute.xlu0 %2619
      %2621 = vrot.lane.b32.xlu0 %v2547, 30
      %v2622 = vpop.permute.xlu0 %2621
      %2623 = vrot.lane.b32.xlu0 %v2548, 30
      %v2624 = vpop.permute.xlu0 %2623
      %2625 = vrot.lane.b32.xlu0 %v2549, 30
      %v2626 = vpop.permute.xlu0 %2625
      %2627 = vrot.lane.b32.xlu0 %v2550, 30
      %v2628 = vpop.permute.xlu0 %2627
      %2629 = vrot.lane.b32.xlu0 %v2551, 30
      %v2630 = vpop.permute.xlu0 %2629
      %2631 = vrot.lane.b32.xlu0 %v2552, 30
      %v2632 = vpop.permute.xlu0 %2631
      %2633 = vrot.lane.b32.xlu0 %v2553, 30
      %v2634 = vpop.permute.xlu0 %2633
      %v2635 = vsel %vm1925, %v2632, %v2634
      %v2636 = vsel %vm1925, %v2630, %v2632
      %v2637 = vsel %vm1925, %v2628, %v2630
      %v2638 = vsel %vm1925, %v2626, %v2628
      %v2639 = vsel %vm1925, %v2624, %v2626
      %v2640 = vsel %vm1925, %v2622, %v2624
      %v2641 = vsel %vm1925, %v2620, %v2622
      %v2642 = vsel %vm1925, %v2634, %v2620
      %v2643 = vmul.f32 %v2642, %v1937
      %v2644 = vmul.f32 %v2641, %v1941
      %v2645 = vmul.f32 %v2640, %v1945
      %v2646 = vmul.f32 %v2639, %v1949
      %v2647 = vmul.f32 %v2638, %v1953
      %v2648 = vmul.f32 %v2637, %v1957
      %v2649 = vmul.f32 %v2636, %v1961
      %v2650 = vmul.f32 %v2635, %v1965
      %2651 = vrot.lane.b32.xlu0 %v2546, 2
      %v2652 = vpop.permute.xlu0 %2651
      %2653 = vrot.lane.b32.xlu0 %v2547, 2
      %v2654 = vpop.permute.xlu0 %2653
      %2655 = vrot.lane.b32.xlu0 %v2548, 2
      %v2656 = vpop.permute.xlu0 %2655
      %2657 = vrot.lane.b32.xlu0 %v2549, 2
      %v2658 = vpop.permute.xlu0 %2657
      %2659 = vrot.lane.b32.xlu0 %v2550, 2
      %v2660 = vpop.permute.xlu0 %2659
      %2661 = vrot.lane.b32.xlu0 %v2551, 2
      %v2662 = vpop.permute.xlu0 %2661
      %2663 = vrot.lane.b32.xlu0 %v2552, 2
      %v2664 = vpop.permute.xlu0 %2663
      %2665 = vrot.lane.b32.xlu0 %v2553, 2
      %v2666 = vpop.permute.xlu0 %2665
      %v2667 = vsel %vm1990, %v2664, %v2666
      %v2668 = vsel %vm1990, %v2662, %v2664
      %v2669 = vsel %vm1990, %v2660, %v2662
      %v2670 = vsel %vm1990, %v2658, %v2660
      %v2671 = vsel %vm1990, %v2656, %v2658
      %v2672 = vsel %vm1990, %v2654, %v2656
      %v2673 = vsel %vm1990, %v2652, %v2654
      %v2674 = vsel %vm1990, %v2666, %v2652
      %v2675 = vmul.f32 %v2674, %v2002
      %v2676 = vmul.f32 %v2673, %v2006
      %v2677 = vmul.f32 %v2672, %v2010
      %v2678 = vmul.f32 %v2671, %v2014
      %v2679 = vmul.f32 %v2670, %v2018
      %v2680 = vmul.f32 %v2669, %v2022
      %v2681 = vmul.f32 %v2668, %v2026
      %v2682 = vmul.f32 %v2667, %v2030
      %v2683 = vmul.f32 %v2546, %v2042
      %v2684 = vmul.f32 %v2547, %v2046
      %v2685 = vmul.f32 %v2548, %v2050
      %v2686 = vmul.f32 %v2549, %v2054
      %v2687 = vmul.f32 %v2550, %v2058
      %v2688 = vmul.f32 %v2551, %v2062
      %v2689 = vmul.f32 %v2552, %v2066
      %v2690 = vmul.f32 %v2553, %v2070
      %2691 = vrot.lane.b32.xlu0 %v2546, 126
      %v2692 = vpop.permute.xlu0 %2691
      %2693 = vrot.lane.b32.xlu0 %v2547, 126
      %v2694 = vpop.permute.xlu0 %2693
      %2695 = vrot.lane.b32.xlu0 %v2548, 126
      %v2696 = vpop.permute.xlu0 %2695
      %2697 = vrot.lane.b32.xlu0 %v2549, 126
      %v2698 = vpop.permute.xlu0 %2697
      %2699 = vrot.lane.b32.xlu0 %v2550, 126
      %v2700 = vpop.permute.xlu0 %2699
      %2701 = vrot.lane.b32.xlu0 %v2551, 126
      %v2702 = vpop.permute.xlu0 %2701
      %2703 = vrot.lane.b32.xlu0 %v2552, 126
      %v2704 = vpop.permute.xlu0 %2703
      %2705 = vrot.lane.b32.xlu0 %v2553, 126
      %v2706 = vpop.permute.xlu0 %2705
      %v2707 = vsel %vm2095, %v2704, %v2706
      %v2708 = vsel %vm2095, %v2702, %v2704
      %v2709 = vsel %vm2095, %v2700, %v2702
      %v2710 = vsel %vm2095, %v2698, %v2700
      %v2711 = vsel %vm2095, %v2696, %v2698
      %v2712 = vsel %vm2095, %v2694, %v2696
      %v2713 = vsel %vm2095, %v2692, %v2694
      %v2714 = vsel %vm2095, %v2706, %v2692
      %v2715 = vmul.f32 %v2713, %v2107
      %v2716 = vmul.f32 %v2712, %v2111
      %v2717 = vmul.f32 %v2711, %v2115
      %v2718 = vmul.f32 %v2710, %v2119
      %v2719 = vmul.f32 %v2709, %v2123
      %v2720 = vmul.f32 %v2708, %v2127
      %v2721 = vmul.f32 %v2707, %v2131
      %v2722 = vmul.f32 %v2714, %v2135
      %2723 = vrot.lane.b32.xlu0 %v2546, 98
      %v2724 = vpop.permute.xlu0 %2723
      %2725 = vrot.lane.b32.xlu0 %v2547, 98
      %v2726 = vpop.permute.xlu0 %2725
      %2727 = vrot.lane.b32.xlu0 %v2548, 98
      %v2728 = vpop.permute.xlu0 %2727
      %2729 = vrot.lane.b32.xlu0 %v2549, 98
      %v2730 = vpop.permute.xlu0 %2729
      %2731 = vrot.lane.b32.xlu0 %v2550, 98
      %v2732 = vpop.permute.xlu0 %2731
      %2733 = vrot.lane.b32.xlu0 %v2551, 98
      %v2734 = vpop.permute.xlu0 %2733
      %2735 = vrot.lane.b32.xlu0 %v2552, 98
      %v2736 = vpop.permute.xlu0 %2735
      %2737 = vrot.lane.b32.xlu0 %v2553, 98
      %v2738 = vpop.permute.xlu0 %2737
      %v2739 = vsel %vm2160, %v2736, %v2738
      %v2740 = vsel %vm2160, %v2734, %v2736
      %v2741 = vsel %vm2160, %v2732, %v2734
      %v2742 = vsel %vm2160, %v2730, %v2732
      %v2743 = vsel %vm2160, %v2728, %v2730
      %v2744 = vsel %vm2160, %v2726, %v2728
      %v2745 = vsel %vm2160, %v2724, %v2726
      %v2746 = vsel %vm2160, %v2738, %v2724
      %v2747 = vmul.f32 %v2745, %v2172
      %v2748 = vmul.f32 %v2744, %v2176
      %v2749 = vmul.f32 %v2743, %v2180
      %v2750 = vmul.f32 %v2742, %v2184
      %v2751 = vmul.f32 %v2741, %v2188
      %v2752 = vmul.f32 %v2740, %v2192
      %v2753 = vmul.f32 %v2739, %v2196
      %v2754 = vmul.f32 %v2746, %v2200
      %2755 = vrot.lane.b32.xlu0 %v2546, 96
      %v2756 = vpop.permute.xlu0 %2755
      %2757 = vrot.lane.b32.xlu0 %v2547, 96
      %v2758 = vpop.permute.xlu0 %2757
      %2759 = vrot.lane.b32.xlu0 %v2548, 96
      %v2760 = vpop.permute.xlu0 %2759
      %2761 = vrot.lane.b32.xlu0 %v2549, 96
      %v2762 = vpop.permute.xlu0 %2761
      %2763 = vrot.lane.b32.xlu0 %v2550, 96
      %v2764 = vpop.permute.xlu0 %2763
      %2765 = vrot.lane.b32.xlu0 %v2551, 96
      %v2766 = vpop.permute.xlu0 %2765
      %2767 = vrot.lane.b32.xlu0 %v2552, 96
      %v2768 = vpop.permute.xlu0 %2767
      %2769 = vrot.lane.b32.xlu0 %v2553, 96
      %v2770 = vpop.permute.xlu0 %2769
      %v2771 = vsel %vm2225, %v2768, %v2770
      %v2772 = vsel %vm2225, %v2766, %v2768
      %v2773 = vsel %vm2225, %v2764, %v2766
      %v2774 = vsel %vm2225, %v2762, %v2764
      %v2775 = vsel %vm2225, %v2760, %v2762
      %v2776 = vsel %vm2225, %v2758, %v2760
      %v2777 = vsel %vm2225, %v2756, %v2758
      %v2778 = vsel %vm2225, %v2770, %v2756
      %v2779 = vmul.f32 %v2777, %v2237
      %v2780 = vmul.f32 %v2776, %v2241
      %v2781 = vmul.f32 %v2775, %v2245
      %v2782 = vmul.f32 %v2774, %v2249
      %v2783 = vmul.f32 %v2773, %v2253
      %v2784 = vmul.f32 %v2772, %v2257
      %v2785 = vmul.f32 %v2771, %v2261
      %v2786 = vmul.f32 %v2778, %v2265
      %2787 = vrot.lane.b32.xlu0 %v2546, 94
      %v2788 = vpop.permute.xlu0 %2787
      %2789 = vrot.lane.b32.xlu0 %v2547, 94
      %v2790 = vpop.permute.xlu0 %2789
      %2791 = vrot.lane.b32.xlu0 %v2548, 94
      %v2792 = vpop.permute.xlu0 %2791
      %2793 = vrot.lane.b32.xlu0 %v2549, 94
      %v2794 = vpop.permute.xlu0 %2793
      %2795 = vrot.lane.b32.xlu0 %v2550, 94
      %v2796 = vpop.permute.xlu0 %2795
      %2797 = vrot.lane.b32.xlu0 %v2551, 94
      %v2798 = vpop.permute.xlu0 %2797
      %2799 = vrot.lane.b32.xlu0 %v2552, 94
      %v2800 = vpop.permute.xlu0 %2799
      %2801 = vrot.lane.b32.xlu0 %v2553, 94
      %v2802 = vpop.permute.xlu0 %2801
      %v2803 = vsel %vm2290, %v2800, %v2802
      %v2804 = vsel %vm2290, %v2798, %v2800
      %v2805 = vsel %vm2290, %v2796, %v2798
      %v2806 = vsel %vm2290, %v2794, %v2796
      %v2807 = vsel %vm2290, %v2792, %v2794
      %v2808 = vsel %vm2290, %v2790, %v2792
      %v2809 = vsel %vm2290, %v2788, %v2790
      %v2810 = vsel %vm2290, %v2802, %v2788
      %v2811 = vmul.f32 %v2809, %v2302
      %v2812 = vmul.f32 %v2808, %v2306
      %v2813 = vmul.f32 %v2807, %v2310
      %v2814 = vmul.f32 %v2806, %v2314
      %v2815 = vmul.f32 %v2805, %v2318
      %v2816 = vmul.f32 %v2804, %v2322
      %v2817 = vmul.f32 %v2803, %v2326
      %v2818 = vmul.f32 %v2810, %v2330
      %v2819 = vpack.c.bf16 %v2611, %v2579
      %v2820 = vpack.c.bf16 %v2612, %v2580
      %v2821 = vpack.c.bf16 %v2613, %v2581
      %v2822 = vpack.c.bf16 %v2614, %v2582
      %v2823 = vpack.c.bf16 %v2615, %v2583
      %v2824 = vpack.c.bf16 %v2616, %v2584
      %v2825 = vpack.c.bf16 %v2617, %v2585
      %v2826 = vpack.c.bf16 %v2618, %v2586
      %v2827 = vpack.c.bf16 %v2675, %v2643
      %v2828 = vpack.c.bf16 %v2676, %v2644
      %v2829 = vpack.c.bf16 %v2677, %v2645
      %v2830 = vpack.c.bf16 %v2678, %v2646
      %v2831 = vpack.c.bf16 %v2679, %v2647
      %v2832 = vpack.c.bf16 %v2680, %v2648
      %v2833 = vpack.c.bf16 %v2681, %v2649
      %v2834 = vpack.c.bf16 %v2682, %v2650
      %v2835 = vpack.c.bf16 %v2715, %v2683
      %v2836 = vpack.c.bf16 %v2716, %v2684
      %v2837 = vpack.c.bf16 %v2717, %v2685
      %v2838 = vpack.c.bf16 %v2718, %v2686
      %v2839 = vpack.c.bf16 %v2719, %v2687
      %v2840 = vpack.c.bf16 %v2720, %v2688
      %v2841 = vpack.c.bf16 %v2721, %v2689
      %v2842 = vpack.c.bf16 %v2722, %v2690
      %v2843 = vpack.c.bf16 %v2779, %v2747
      %v2844 = vpack.c.bf16 %v2780, %v2748
      %v2845 = vpack.c.bf16 %v2781, %v2749
      %v2846 = vpack.c.bf16 %v2782, %v2750
      %v2847 = vpack.c.bf16 %v2783, %v2751
      %v2848 = vpack.c.bf16 %v2784, %v2752
      %v2849 = vpack.c.bf16 %v2785, %v2753
      %v2850 = vpack.c.bf16 %v2786, %v2754
      %v2851 = vpack.c.bf16 1.0, %v2811
      %v2852 = vpack.c.bf16 1.0, %v2812
      %v2853 = vpack.c.bf16 1.0, %v2813
      %v2854 = vpack.c.bf16 1.0, %v2814
      %v2855 = vpack.c.bf16 1.0, %v2815
      %v2856 = vpack.c.bf16 1.0, %v2816
      %v2857 = vpack.c.bf16 1.0, %v2817
      %v2858 = vpack.c.bf16 1.0, %v2818
      %v2860 = vsel %vm1042, %v2554, 0
      %2862 = vmatprep.subr.bf16.mxu0 0
      %2863 = vmatpush1.bf16.msra.mxu0 0
      %2864 = vmatprep.subr.bf16.mxu0 0
      %2865 = vmatpush1.bf16.msra.mxu0 0
      %2866 = vmatprep.subr.bf16.mxu0 0
      %2867 = vmatpush1.bf16.msra.mxu0 0
      %2868 = vmatprep.subr.bf16.mxu0 %v2852
      %2869 = vmatpush1.bf16.msra.mxu0 %v2851
      %2870 = vmatprep.subr.bf16.mxu0 %v2844
      %2871 = vmatpush1.bf16.msra.mxu0 %v2843
      %2872 = vmatprep.subr.bf16.mxu0 %v2836
      %2873 = vmatpush1.bf16.msra.mxu0 %v2835
      %2874 = vmatprep.subr.bf16.mxu0 %v2828
      %2875 = vmatpush1.bf16.msra.mxu0 %v2827
      %2876 = vmatprep.subr.bf16.mxu0 %v2820
      %2877 = vmatpush1.bf16.msra.mxu0 %v2819
      %2878 = vmatprep.subr.bf16.mxu0 0
      %2879 = vmatpush2.bf16.msra.mxu0 0
      %2880 = vmatprep.subr.bf16.mxu0 0
      %2881 = vmatpush2.bf16.msra.mxu0 0
      %2882 = vmatprep.subr.bf16.mxu0 0
      %2883 = vmatpush2.bf16.msra.mxu0 0
      %2884 = vmatprep.subr.bf16.mxu0 0
      %2885 = vmatpush2.bf16.msra.mxu0 0
      %2886 = vmatprep.subr.bf16.mxu0 0
      %2887 = vmatpush2.bf16.msra.mxu0 0
      %2888 = vmatprep.subr.bf16.mxu0 0
      %2889 = vmatpush2.bf16.msra.mxu0 0
      %2890 = vmatprep.subr.bf16.mxu0 0
      %2891 = vmatpush2.bf16.msra.mxu0 0
      %2892 = vmatprep.subr.bf16.mxu0 0
      %2893 = vmatpush2.bf16.msra.mxu0 0
      %2894 = vmatprep.mubr.bf16.mxu0 0
      %2895 = vmatmul.mubr.bf16.gmra.mxu0 %v2860
      %v2896 = vpop.f32.mrf.mxu0
      %v2897 = vadd.f32 0.0, %v2896
      %v2898 = vpop.f32.mrf.mxu0
      %v2899 = vadd.f32 0.0, %v2898
      %v2900 = vpop.f32.mrf.mxu0
      %v2901 = vpop.f32.mrf.mxu0
      %2902 = vdwg.mxu0
      %2903 = vmatprep.subr.bf16.mxu0 0
      %2904 = vmatpush1.bf16.msra.mxu0 0
      %2905 = vmatprep.subr.bf16.mxu0 0
      %2906 = vmatpush1.bf16.msra.mxu0 0
      %2907 = vmatprep.subr.bf16.mxu0 0
      %2908 = vmatpush1.bf16.msra.mxu0 0
      %2909 = vmatprep.subr.bf16.mxu0 %v2854
      %2910 = vmatpush1.bf16.msra.mxu0 %v2853
      %2911 = vmatprep.subr.bf16.mxu0 %v2846
      %2912 = vmatpush1.bf16.msra.mxu0 %v2845
      %2913 = vmatprep.subr.bf16.mxu0 %v2838
      %2914 = vmatpush1.bf16.msra.mxu0 %v2837
      %2915 = vmatprep.subr.bf16.mxu0 %v2830
      %2916 = vmatpush1.bf16.msra.mxu0 %v2829
      %2917 = vmatprep.subr.bf16.mxu0 %v2822
      %2918 = vmatpush1.bf16.msra.mxu0 %v2821
      %2919 = vmatprep.subr.bf16.mxu0 0
      %2920 = vmatpush2.bf16.msra.mxu0 0
      %2921 = vmatprep.subr.bf16.mxu0 0
      %2922 = vmatpush2.bf16.msra.mxu0 0
      %2923 = vmatprep.subr.bf16.mxu0 0
      %2924 = vmatpush2.bf16.msra.mxu0 0
      %2925 = vmatprep.subr.bf16.mxu0 0
      %2926 = vmatpush2.bf16.msra.mxu0 0
      %2927 = vmatprep.subr.bf16.mxu0 0
      %2928 = vmatpush2.bf16.msra.mxu0 0
      %2929 = vmatprep.subr.bf16.mxu0 0
      %2930 = vmatpush2.bf16.msra.mxu0 0
      %2931 = vmatprep.subr.bf16.mxu0 0
      %2932 = vmatpush2.bf16.msra.mxu0 0
      %2933 = vmatprep.subr.bf16.mxu0 0
      %2934 = vmatpush2.bf16.msra.mxu0 0
      %2935 = vmatprep.mubr.bf16.mxu0 0
      %2936 = vmatmul.mubr.bf16.gmra.mxu0 %v2860
      %v2937 = vpop.f32.mrf.mxu0
      %v2938 = vadd.f32 0.0, %v2937
      %v2939 = vpop.f32.mrf.mxu0
      %v2940 = vadd.f32 0.0, %v2939
      %v2941 = vpop.f32.mrf.mxu0
      %v2942 = vpop.f32.mrf.mxu0
      %2943 = vdwg.mxu0
      %2944 = vmatprep.subr.bf16.mxu0 0
      %2945 = vmatpush1.bf16.msra.mxu0 0
      %2946 = vmatprep.subr.bf16.mxu0 0
      %2947 = vmatpush1.bf16.msra.mxu0 0
      %2948 = vmatprep.subr.bf16.mxu0 0
      %2949 = vmatpush1.bf16.msra.mxu0 0
      %2950 = vmatprep.subr.bf16.mxu0 %v2856
      %2951 = vmatpush1.bf16.msra.mxu0 %v2855
      %2952 = vmatprep.subr.bf16.mxu0 %v2848
      %2953 = vmatpush1.bf16.msra.mxu0 %v2847
      %2954 = vmatprep.subr.bf16.mxu0 %v2840
      %2955 = vmatpush1.bf16.msra.mxu0 %v2839
      %2956 = vmatprep.subr.bf16.mxu0 %v2832
      %2957 = vmatpush1.bf16.msra.mxu0 %v2831
      %2958 = vmatprep.subr.bf16.mxu0 %v2824
      %2959 = vmatpush1.bf16.msra.mxu0 %v2823
      %2960 = vmatprep.subr.bf16.mxu0 0
      %2961 = vmatpush2.bf16.msra.mxu0 0
      %2962 = vmatprep.subr.bf16.mxu0 0
      %2963 = vmatpush2.bf16.msra.mxu0 0
      %2964 = vmatprep.subr.bf16.mxu0 0
      %2965 = vmatpush2.bf16.msra.mxu0 0
      %2966 = vmatprep.subr.bf16.mxu0 0
      %2967 = vmatpush2.bf16.msra.mxu0 0
      %2968 = vmatprep.subr.bf16.mxu0 0
      %2969 = vmatpush2.bf16.msra.mxu0 0
      %2970 = vmatprep.subr.bf16.mxu0 0
      %2971 = vmatpush2.bf16.msra.mxu0 0
      %2972 = vmatprep.subr.bf16.mxu0 0
      %2973 = vmatpush2.bf16.msra.mxu0 0
      %2974 = vmatprep.subr.bf16.mxu0 0
      %2975 = vmatpush2.bf16.msra.mxu0 0
      %2976 = vmatprep.mubr.bf16.mxu0 0
      %2977 = vmatmul.mubr.bf16.gmra.mxu0 %v2860
      %v2978 = vpop.f32.mrf.mxu0
      %v2979 = vadd.f32 0.0, %v2978
      %v2980 = vpop.f32.mrf.mxu0
      %v2981 = vadd.f32 0.0, %v2980
      %v2982 = vpop.f32.mrf.mxu0
      %v2983 = vpop.f32.mrf.mxu0
      %2984 = vdwg.mxu0
      %2985 = vmatprep.subr.bf16.mxu0 0
      %2986 = vmatpush1.bf16.msra.mxu0 0
      %2987 = vmatprep.subr.bf16.mxu0 0
      %2988 = vmatpush1.bf16.msra.mxu0 0
      %2989 = vmatprep.subr.bf16.mxu0 0
      %2990 = vmatpush1.bf16.msra.mxu0 0
      %2991 = vmatprep.subr.bf16.mxu0 %v2858
      %2992 = vmatpush1.bf16.msra.mxu0 %v2857
      %2993 = vmatprep.subr.bf16.mxu0 %v2850
      %2994 = vmatpush1.bf16.msra.mxu0 %v2849
      %2995 = vmatprep.subr.bf16.mxu0 %v2842
      %2996 = vmatpush1.bf16.msra.mxu0 %v2841
      %2997 = vmatprep.subr.bf16.mxu0 %v2834
      %2998 = vmatpush1.bf16.msra.mxu0 %v2833
      %2999 = vmatprep.subr.bf16.mxu0 %v2826
      %3000 = vmatpush1.bf16.msra.mxu0 %v2825
      %3001 = vmatprep.subr.bf16.mxu0 0
      %3002 = vmatpush2.bf16.msra.mxu0 0
      %3003 = vmatprep.subr.bf16.mxu0 0
      %3004 = vmatpush2.bf16.msra.mxu0 0
      %3005 = vmatprep.subr.bf16.mxu0 0
      %3006 = vmatpush2.bf16.msra.mxu0 0
      %3007 = vmatprep.subr.bf16.mxu0 0
      %3008 = vmatpush2.bf16.msra.mxu0 0
      %3009 = vmatprep.subr.bf16.mxu0 0
      %3010 = vmatpush2.bf16.msra.mxu0 0
      %3011 = vmatprep.subr.bf16.mxu0 0
      %3012 = vmatpush2.bf16.msra.mxu0 0
      %3013 = vmatprep.subr.bf16.mxu0 0
      %3014 = vmatpush2.bf16.msra.mxu0 0
      %3015 = vmatprep.subr.bf16.mxu0 0
      %3016 = vmatpush2.bf16.msra.mxu0 0
      %3017 = vmatprep.mubr.bf16.mxu0 0
      %3018 = vmatmul.mubr.bf16.gmra.mxu0 %v2860
      %v3019 = vpop.f32.mrf.mxu0
      %v3020 = vadd.f32 0.0, %v3019
      %v3021 = vpop.f32.mrf.mxu0
      %v3022 = vadd.f32 0.0, %v3021
      %v3023 = vpop.f32.mrf.mxu0
      %v3024 = vpop.f32.mrf.mxu0
      %3025 = vdwg.mxu0
      %v3026 = vmax.f32 %v2897, 0.0
      %v3027 = vmax.f32 %v2899, 0.0
      %v3028 = vmax.f32 %v2938, 0.0
      %v3029 = vmax.f32 %v2940, 0.0
      %v3030 = vmax.f32 %v2979, 0.0
      %v3031 = vmax.f32 %v2981, 0.0
      %v3032 = vmax.f32 %v3020, 0.0
      %v3033 = vmax.f32 %v3022, 0.0
      %3034 = vrot.lane.b32.xlu0 %v3026, 126
      %v3035 = vpop.permute.xlu0 %3034
      %3036 = vrot.lane.b32.xlu0 %v3027, 126
      %v3037 = vpop.permute.xlu0 %3036
      %3038 = vrot.lane.b32.xlu0 %v3028, 126
      %v3039 = vpop.permute.xlu0 %3038
      %3040 = vrot.lane.b32.xlu0 %v3029, 126
      %v3041 = vpop.permute.xlu0 %3040
      %3042 = vrot.lane.b32.xlu0 %v3030, 126
      %v3043 = vpop.permute.xlu0 %3042
      %3044 = vrot.lane.b32.xlu0 %v3031, 126
      %v3045 = vpop.permute.xlu0 %3044
      %3046 = vrot.lane.b32.xlu0 %v3032, 126
      %v3047 = vpop.permute.xlu0 %3046
      %3048 = vrot.lane.b32.xlu0 %v3033, 126
      %v3049 = vpop.permute.xlu0 %3048
      %v3050 = vsel %vm2095, %v3047, %v3049
      %v3051 = vsel %vm2095, %v3045, %v3047
      %v3052 = vsel %vm2095, %v3043, %v3045
      %v3053 = vsel %vm2095, %v3041, %v3043
      %v3054 = vsel %vm2095, %v3039, %v3041
      %v3055 = vsel %vm2095, %v3037, %v3039
      %v3056 = vsel %vm2095, %v3035, %v3037
      %v3057 = vsel %vm2095, %v3049, %v3035
      %v3058 = vmax.f32 %v3026, %v3056
      %v3059 = vmax.f32 %v3027, %v3055
      %v3060 = vmax.f32 %v3028, %v3054
      %v3061 = vmax.f32 %v3029, %v3053
      %v3062 = vmax.f32 %v3030, %v3052
      %v3063 = vmax.f32 %v3031, %v3051
      %v3064 = vmax.f32 %v3032, %v3050
      %v3065 = vmax.f32 %v3033, %v3057
      %3066 = vrot.lane.b32.xlu0 %v3058, 96
      %v3067 = vpop.permute.xlu0 %3066
      %3068 = vrot.lane.b32.xlu0 %v3059, 96
      %v3069 = vpop.permute.xlu0 %3068
      %3070 = vrot.lane.b32.xlu0 %v3060, 96
      %v3071 = vpop.permute.xlu0 %3070
      %3072 = vrot.lane.b32.xlu0 %v3061, 96
      %v3073 = vpop.permute.xlu0 %3072
      %3074 = vrot.lane.b32.xlu0 %v3062, 96
      %v3075 = vpop.permute.xlu0 %3074
      %3076 = vrot.lane.b32.xlu0 %v3063, 96
      %v3077 = vpop.permute.xlu0 %3076
      %3078 = vrot.lane.b32.xlu0 %v3064, 96
      %v3079 = vpop.permute.xlu0 %3078
      %3080 = vrot.lane.b32.xlu0 %v3065, 96
      %v3081 = vpop.permute.xlu0 %3080
      %v3082 = vsel %vm2225, %v3079, %v3081
      %v3083 = vsel %vm2225, %v3077, %v3079
      %v3084 = vsel %vm2225, %v3075, %v3077
      %v3085 = vsel %vm2225, %v3073, %v3075
      %v3086 = vsel %vm2225, %v3071, %v3073
      %v3087 = vsel %vm2225, %v3069, %v3071
      %v3088 = vsel %vm2225, %v3067, %v3069
      %v3089 = vsel %vm2225, %v3081, %v3067
      %v3090 = vmax.f32 %v3058, %v3088
      %v3091 = vmax.f32 %v3059, %v3087
      %v3092 = vmax.f32 %v3060, %v3086
      %v3093 = vmax.f32 %v3061, %v3085
      %v3094 = vmax.f32 %v3062, %v3084
      %v3095 = vmax.f32 %v3063, %v3083
      %v3096 = vmax.f32 %v3064, %v3082
      %v3097 = vmax.f32 %v3065, %v3089
      %v3098 = vld [vmem:[%s10] sm:$0xff]
      %v3099 = vld [vmem:[%s10 + $0x8] sm:$0xff]
      %v3100 = vld [vmem:[%s10 + $0x10] sm:$0xff]
      %v3101 = vld [vmem:[%s10 + $0x18] sm:$0xff]
      %v3102 = vld [vmem:[%s10 + $0x20] sm:$0xff]
      %v3103 = vld [vmem:[%s10 + $0x28] sm:$0xff]
      %v3104 = vld [vmem:[%s10 + $0x30] sm:$0xff]
      %v3105 = vld [vmem:[%s10 + $0x38] sm:$0xff]
      %v3106 = vld [vmem:[%s10 + $0x40] sm:$0x1]
      %v3107 = vld [vmem:[%s10 + $0x48] sm:$0x1]
      %v3108 = vld [vmem:[%s10 + $0x50] sm:$0x1]
      %v3109 = vld [vmem:[%s10 + $0x58] sm:$0x1]
      %v3110 = vld [vmem:[%s10 + $0x60] sm:$0x1]
      %v3111 = vld [vmem:[%s10 + $0x68] sm:$0x1]
      %v3112 = vld [vmem:[%s10 + $0x70] sm:$0x1]
      %v3113 = vld [vmem:[%s10 + $0x78] sm:$0x1]
      %v3114 = vld [vmem:[%s5] sm:$0xf]
      %3115 = vrot.lane.b32.xlu0 %v3090, 68
      %v3116 = vpop.permute.xlu0 %3115
      %3117 = vrot.lane.b32.xlu0 %v3091, 68
      %v3118 = vpop.permute.xlu0 %3117
      %3119 = vrot.lane.b32.xlu0 %v3092, 68
      %v3120 = vpop.permute.xlu0 %3119
      %3121 = vrot.lane.b32.xlu0 %v3093, 68
      %v3122 = vpop.permute.xlu0 %3121
      %3123 = vrot.lane.b32.xlu0 %v3094, 68
      %v3124 = vpop.permute.xlu0 %3123
      %3125 = vrot.lane.b32.xlu0 %v3095, 68
      %v3126 = vpop.permute.xlu0 %3125
      %3127 = vrot.lane.b32.xlu0 %v3096, 68
      %v3128 = vpop.permute.xlu0 %3127
      %3129 = vrot.lane.b32.xlu0 %v3097, 68
      %v3130 = vpop.permute.xlu0 %3129
      %vm3131 = vcmp.lt.s32.totalorder %v457, 68
      %v3132 = vsel %vm3131, %v3128, %v3130
      %v3133 = vsel %vm3131, %v3126, %v3128
      %v3134 = vsel %vm3131, %v3124, %v3126
      %v3135 = vsel %vm3131, %v3122, %v3124
      %v3136 = vsel %vm3131, %v3120, %v3122
      %v3137 = vsel %vm3131, %v3118, %v3120
      %v3138 = vsel %vm3131, %v3116, %v3118
      %v3139 = vsel %vm3131, %v3130, %v3116
      %v3140 = vlaneseq
      %v3141 = vshrl.u32 %v3140, 7
      %v3142 = vsub.s32 0, %v3141
      %v3143 = vrot.slane %v3098, %v3142
      %v3144 = vlaneseq
      %v3145 = vshrl.u32 %v3144, 7
      %v3146 = vsub.s32 0, %v3145
      %v3147 = vrot.slane %v3099, %v3146
      %v3148 = vlaneseq
      %v3149 = vshrl.u32 %v3148, 7
      %v3150 = vsub.s32 0, %v3149
      %v3151 = vrot.slane %v3100, %v3150
      %v3152 = vlaneseq
      %v3153 = vshrl.u32 %v3152, 7
      %v3154 = vsub.s32 0, %v3153
      %v3155 = vrot.slane %v3101, %v3154
      %v3156 = vlaneseq
      %v3157 = vshrl.u32 %v3156, 7
      %v3158 = vsub.s32 0, %v3157
      %v3159 = vrot.slane %v3102, %v3158
      %v3160 = vlaneseq
      %v3161 = vshrl.u32 %v3160, 7
      %v3162 = vsub.s32 0, %v3161
      %v3163 = vrot.slane %v3103, %v3162
      %v3164 = vlaneseq
      %v3165 = vshrl.u32 %v3164, 7
      %v3166 = vsub.s32 0, %v3165
      %v3167 = vrot.slane %v3104, %v3166
      %v3168 = vlaneseq
      %v3169 = vshrl.u32 %v3168, 7
      %v3170 = vsub.s32 0, %v3169
      %v3171 = vrot.slane %v3105, %v3170
      %v3172 = vmul.f32 %v3139, %v3143
      %v3173 = vmul.f32 %v3138, %v3147
      %v3174 = vmul.f32 %v3137, %v3151
      %v3175 = vmul.f32 %v3136, %v3155
      %v3176 = vmul.f32 %v3135, %v3159
      %v3177 = vmul.f32 %v3134, %v3163
      %v3178 = vmul.f32 %v3133, %v3167
      %v3179 = vmul.f32 %v3132, %v3171
      %3180 = vrot.lane.b32.xlu0 %v3090, 64
      %v3181 = vpop.permute.xlu0 %3180
      %3182 = vrot.lane.b32.xlu0 %v3091, 64
      %v3183 = vpop.permute.xlu0 %3182
      %3184 = vrot.lane.b32.xlu0 %v3092, 64
      %v3185 = vpop.permute.xlu0 %3184
      %3186 = vrot.lane.b32.xlu0 %v3093, 64
      %v3187 = vpop.permute.xlu0 %3186
      %3188 = vrot.lane.b32.xlu0 %v3094, 64
      %v3189 = vpop.permute.xlu0 %3188
      %3190 = vrot.lane.b32.xlu0 %v3095, 64
      %v3191 = vpop.permute.xlu0 %3190
      %3192 = vrot.lane.b32.xlu0 %v3096, 64
      %v3193 = vpop.permute.xlu0 %3192
      %3194 = vrot.lane.b32.xlu0 %v3097, 64
      %v3195 = vpop.permute.xlu0 %3194
      %vm3196 = vcmp.lt.s32.totalorder %v457, 64
      %v3197 = vsel %vm3196, %v3193, %v3195
      %v3198 = vsel %vm3196, %v3191, %v3193
      %v3199 = vsel %vm3196, %v3189, %v3191
      %v3200 = vsel %vm3196, %v3187, %v3189
      %v3201 = vsel %vm3196, %v3185, %v3187
      %v3202 = vsel %vm3196, %v3183, %v3185
      %v3203 = vsel %vm3196, %v3181, %v3183
      %v3204 = vsel %vm3196, %v3195, %v3181
      %v3205 = vlaneseq
      %v3206 = vshrl.u32 %v3205, 7
      %v3207 = vsub.s32 1, %v3206
      %v3208 = vrot.slane %v3098, %v3207
      %v3209 = vlaneseq
      %v3210 = vshrl.u32 %v3209, 7
      %v3211 = vsub.s32 1, %v3210
      %v3212 = vrot.slane %v3099, %v3211
      %v3213 = vlaneseq
      %v3214 = vshrl.u32 %v3213, 7
      %v3215 = vsub.s32 1, %v3214
      %v3216 = vrot.slane %v3100, %v3215
      %v3217 = vlaneseq
      %v3218 = vshrl.u32 %v3217, 7
      %v3219 = vsub.s32 1, %v3218
      %v3220 = vrot.slane %v3101, %v3219
      %v3221 = vlaneseq
      %v3222 = vshrl.u32 %v3221, 7
      %v3223 = vsub.s32 1, %v3222
      %v3224 = vrot.slane %v3102, %v3223
      %v3225 = vlaneseq
      %v3226 = vshrl.u32 %v3225, 7
      %v3227 = vsub.s32 1, %v3226
      %v3228 = vrot.slane %v3103, %v3227
      %v3229 = vlaneseq
      %v3230 = vshrl.u32 %v3229, 7
      %v3231 = vsub.s32 1, %v3230
      %v3232 = vrot.slane %v3104, %v3231
      %v3233 = vlaneseq
      %v3234 = vshrl.u32 %v3233, 7
      %v3235 = vsub.s32 1, %v3234
      %v3236 = vrot.slane %v3105, %v3235
      %v3237 = vmul.f32 %v3204, %v3208
      %v3238 = vmul.f32 %v3203, %v3212
      %v3239 = vmul.f32 %v3202, %v3216
      %v3240 = vmul.f32 %v3201, %v3220
      %v3241 = vmul.f32 %v3200, %v3224
      %v3242 = vmul.f32 %v3199, %v3228
      %v3243 = vmul.f32 %v3198, %v3232
      %v3244 = vmul.f32 %v3197, %v3236
      %3245 = vrot.lane.b32.xlu0 %v3090, 60
      %v3246 = vpop.permute.xlu0 %3245
      %3247 = vrot.lane.b32.xlu0 %v3091, 60
      %v3248 = vpop.permute.xlu0 %3247
      %3249 = vrot.lane.b32.xlu0 %v3092, 60
      %v3250 = vpop.permute.xlu0 %3249
      %3251 = vrot.lane.b32.xlu0 %v3093, 60
      %v3252 = vpop.permute.xlu0 %3251
      %3253 = vrot.lane.b32.xlu0 %v3094, 60
      %v3254 = vpop.permute.xlu0 %3253
      %3255 = vrot.lane.b32.xlu0 %v3095, 60
      %v3256 = vpop.permute.xlu0 %3255
      %3257 = vrot.lane.b32.xlu0 %v3096, 60
      %v3258 = vpop.permute.xlu0 %3257
      %3259 = vrot.lane.b32.xlu0 %v3097, 60
      %v3260 = vpop.permute.xlu0 %3259
      %vm3261 = vcmp.lt.s32.totalorder %v457, 60
      %v3262 = vsel %vm3261, %v3258, %v3260
      %v3263 = vsel %vm3261, %v3256, %v3258
      %v3264 = vsel %vm3261, %v3254, %v3256
      %v3265 = vsel %vm3261, %v3252, %v3254
      %v3266 = vsel %vm3261, %v3250, %v3252
      %v3267 = vsel %vm3261, %v3248, %v3250
      %v3268 = vsel %vm3261, %v3246, %v3248
      %v3269 = vsel %vm3261, %v3260, %v3246
      %v3270 = vlaneseq
      %v3271 = vshrl.u32 %v3270, 7
      %v3272 = vsub.s32 2, %v3271
      %v3273 = vrot.slane %v3098, %v3272
      %v3274 = vlaneseq
      %v3275 = vshrl.u32 %v3274, 7
      %v3276 = vsub.s32 2, %v3275
      %v3277 = vrot.slane %v3099, %v3276
      %v3278 = vlaneseq
      %v3279 = vshrl.u32 %v3278, 7
      %v3280 = vsub.s32 2, %v3279
      %v3281 = vrot.slane %v3100, %v3280
      %v3282 = vlaneseq
      %v3283 = vshrl.u32 %v3282, 7
      %v3284 = vsub.s32 2, %v3283
      %v3285 = vrot.slane %v3101, %v3284
      %v3286 = vlaneseq
      %v3287 = vshrl.u32 %v3286, 7
      %v3288 = vsub.s32 2, %v3287
      %v3289 = vrot.slane %v3102, %v3288
      %v3290 = vlaneseq
      %v3291 = vshrl.u32 %v3290, 7
      %v3292 = vsub.s32 2, %v3291
      %v3293 = vrot.slane %v3103, %v3292
      %v3294 = vlaneseq
      %v3295 = vshrl.u32 %v3294, 7
      %v3296 = vsub.s32 2, %v3295
      %v3297 = vrot.slane %v3104, %v3296
      %v3298 = vlaneseq
      %v3299 = vshrl.u32 %v3298, 7
      %v3300 = vsub.s32 2, %v3299
      %v3301 = vrot.slane %v3105, %v3300
      %v3302 = vmul.f32 %v3269, %v3273
      %v3303 = vmul.f32 %v3268, %v3277
      %v3304 = vmul.f32 %v3267, %v3281
      %v3305 = vmul.f32 %v3266, %v3285
      %v3306 = vmul.f32 %v3265, %v3289
      %v3307 = vmul.f32 %v3264, %v3293
      %v3308 = vmul.f32 %v3263, %v3297
      %v3309 = vmul.f32 %v3262, %v3301
      %3310 = vrot.lane.b32.xlu0 %v3090, 4
      %v3311 = vpop.permute.xlu0 %3310
      %3312 = vrot.lane.b32.xlu0 %v3091, 4
      %v3313 = vpop.permute.xlu0 %3312
      %3314 = vrot.lane.b32.xlu0 %v3092, 4
      %v3315 = vpop.permute.xlu0 %3314
      %3316 = vrot.lane.b32.xlu0 %v3093, 4
      %v3317 = vpop.permute.xlu0 %3316
      %3318 = vrot.lane.b32.xlu0 %v3094, 4
      %v3319 = vpop.permute.xlu0 %3318
      %3320 = vrot.lane.b32.xlu0 %v3095, 4
      %v3321 = vpop.permute.xlu0 %3320
      %3322 = vrot.lane.b32.xlu0 %v3096, 4
      %v3323 = vpop.permute.xlu0 %3322
      %3324 = vrot.lane.b32.xlu0 %v3097, 4
      %v3325 = vpop.permute.xlu0 %3324
      %vm3326 = vcmp.lt.s32.totalorder %v457, 4
      %v3327 = vsel %vm3326, %v3323, %v3325
      %v3328 = vsel %vm3326, %v3321, %v3323
      %v3329 = vsel %vm3326, %v3319, %v3321
      %v3330 = vsel %vm3326, %v3317, %v3319
      %v3331 = vsel %vm3326, %v3315, %v3317
      %v3332 = vsel %vm3326, %v3313, %v3315
      %v3333 = vsel %vm3326, %v3311, %v3313
      %v3334 = vsel %vm3326, %v3325, %v3311
      %v3335 = vlaneseq
      %v3336 = vshrl.u32 %v3335, 7
      %v3337 = vsub.s32 3, %v3336
      %v3338 = vrot.slane %v3098, %v3337
      %v3339 = vlaneseq
      %v3340 = vshrl.u32 %v3339, 7
      %v3341 = vsub.s32 3, %v3340
      %v3342 = vrot.slane %v3099, %v3341
      %v3343 = vlaneseq
      %v3344 = vshrl.u32 %v3343, 7
      %v3345 = vsub.s32 3, %v3344
      %v3346 = vrot.slane %v3100, %v3345
      %v3347 = vlaneseq
      %v3348 = vshrl.u32 %v3347, 7
      %v3349 = vsub.s32 3, %v3348
      %v3350 = vrot.slane %v3101, %v3349
      %v3351 = vlaneseq
      %v3352 = vshrl.u32 %v3351, 7
      %v3353 = vsub.s32 3, %v3352
      %v3354 = vrot.slane %v3102, %v3353
      %v3355 = vlaneseq
      %v3356 = vshrl.u32 %v3355, 7
      %v3357 = vsub.s32 3, %v3356
      %v3358 = vrot.slane %v3103, %v3357
      %v3359 = vlaneseq
      %v3360 = vshrl.u32 %v3359, 7
      %v3361 = vsub.s32 3, %v3360
      %v3362 = vrot.slane %v3104, %v3361
      %v3363 = vlaneseq
      %v3364 = vshrl.u32 %v3363, 7
      %v3365 = vsub.s32 3, %v3364
      %v3366 = vrot.slane %v3105, %v3365
      %v3367 = vmul.f32 %v3334, %v3338
      %v3368 = vmul.f32 %v3333, %v3342
      %v3369 = vmul.f32 %v3332, %v3346
      %v3370 = vmul.f32 %v3331, %v3350
      %v3371 = vmul.f32 %v3330, %v3354
      %v3372 = vmul.f32 %v3329, %v3358
      %v3373 = vmul.f32 %v3328, %v3362
      %v3374 = vmul.f32 %v3327, %v3366
      %v3375 = vlaneseq
      %v3376 = vshrl.u32 %v3375, 7
      %v3377 = vsub.s32 4, %v3376
      %v3378 = vrot.slane %v3098, %v3377
      %v3379 = vlaneseq
      %v3380 = vshrl.u32 %v3379, 7
      %v3381 = vsub.s32 4, %v3380
      %v3382 = vrot.slane %v3099, %v3381
      %v3383 = vlaneseq
      %v3384 = vshrl.u32 %v3383, 7
      %v3385 = vsub.s32 4, %v3384
      %v3386 = vrot.slane %v3100, %v3385
      %v3387 = vlaneseq
      %v3388 = vshrl.u32 %v3387, 7
      %v3389 = vsub.s32 4, %v3388
      %v3390 = vrot.slane %v3101, %v3389
      %v3391 = vlaneseq
      %v3392 = vshrl.u32 %v3391, 7
      %v3393 = vsub.s32 4, %v3392
      %v3394 = vrot.slane %v3102, %v3393
      %v3395 = vlaneseq
      %v3396 = vshrl.u32 %v3395, 7
      %v3397 = vsub.s32 4, %v3396
      %v3398 = vrot.slane %v3103, %v3397
      %v3399 = vlaneseq
      %v3400 = vshrl.u32 %v3399, 7
      %v3401 = vsub.s32 4, %v3400
      %v3402 = vrot.slane %v3104, %v3401
      %v3403 = vlaneseq
      %v3404 = vshrl.u32 %v3403, 7
      %v3405 = vsub.s32 4, %v3404
      %v3406 = vrot.slane %v3105, %v3405
      %v3407 = vmul.f32 %v3090, %v3378
      %v3408 = vmul.f32 %v3091, %v3382
      %v3409 = vmul.f32 %v3092, %v3386
      %v3410 = vmul.f32 %v3093, %v3390
      %v3411 = vmul.f32 %v3094, %v3394
      %v3412 = vmul.f32 %v3095, %v3398
      %v3413 = vmul.f32 %v3096, %v3402
      %v3414 = vmul.f32 %v3097, %v3406
      %3415 = vrot.lane.b32.xlu0 %v3090, 124
      %v3416 = vpop.permute.xlu0 %3415
      %3417 = vrot.lane.b32.xlu0 %v3091, 124
      %v3418 = vpop.permute.xlu0 %3417
      %3419 = vrot.lane.b32.xlu0 %v3092, 124
      %v3420 = vpop.permute.xlu0 %3419
      %3421 = vrot.lane.b32.xlu0 %v3093, 124
      %v3422 = vpop.permute.xlu0 %3421
      %3423 = vrot.lane.b32.xlu0 %v3094, 124
      %v3424 = vpop.permute.xlu0 %3423
      %3425 = vrot.lane.b32.xlu0 %v3095, 124
      %v3426 = vpop.permute.xlu0 %3425
      %3427 = vrot.lane.b32.xlu0 %v3096, 124
      %v3428 = vpop.permute.xlu0 %3427
      %3429 = vrot.lane.b32.xlu0 %v3097, 124
      %v3430 = vpop.permute.xlu0 %3429
      %vm3431 = vcmp.lt.s32.totalorder %v457, 124
      %v3432 = vsel %vm3431, %v3428, %v3430
      %v3433 = vsel %vm3431, %v3426, %v3428
      %v3434 = vsel %vm3431, %v3424, %v3426
      %v3435 = vsel %vm3431, %v3422, %v3424
      %v3436 = vsel %vm3431, %v3420, %v3422
      %v3437 = vsel %vm3431, %v3418, %v3420
      %v3438 = vsel %vm3431, %v3416, %v3418
      %v3439 = vsel %vm3431, %v3430, %v3416
      %v3440 = vlaneseq
      %v3441 = vshrl.u32 %v3440, 7
      %v3442 = vsub.s32 5, %v3441
      %v3443 = vrot.slane %v3098, %v3442
      %v3444 = vlaneseq
      %v3445 = vshrl.u32 %v3444, 7
      %v3446 = vsub.s32 5, %v3445
      %v3447 = vrot.slane %v3099, %v3446
      %v3448 = vlaneseq
      %v3449 = vshrl.u32 %v3448, 7
      %v3450 = vsub.s32 5, %v3449
      %v3451 = vrot.slane %v3100, %v3450
      %v3452 = vlaneseq
      %v3453 = vshrl.u32 %v3452, 7
      %v3454 = vsub.s32 5, %v3453
      %v3455 = vrot.slane %v3101, %v3454
      %v3456 = vlaneseq
      %v3457 = vshrl.u32 %v3456, 7
      %v3458 = vsub.s32 5, %v3457
      %v3459 = vrot.slane %v3102, %v3458
      %v3460 = vlaneseq
      %v3461 = vshrl.u32 %v3460, 7
      %v3462 = vsub.s32 5, %v3461
      %v3463 = vrot.slane %v3103, %v3462
      %v3464 = vlaneseq
      %v3465 = vshrl.u32 %v3464, 7
      %v3466 = vsub.s32 5, %v3465
      %v3467 = vrot.slane %v3104, %v3466
      %v3468 = vlaneseq
      %v3469 = vshrl.u32 %v3468, 7
      %v3470 = vsub.s32 5, %v3469
      %v3471 = vrot.slane %v3105, %v3470
      %v3472 = vmul.f32 %v3438, %v3443
      %v3473 = vmul.f32 %v3437, %v3447
      %v3474 = vmul.f32 %v3436, %v3451
      %v3475 = vmul.f32 %v3435, %v3455
      %v3476 = vmul.f32 %v3434, %v3459
      %v3477 = vmul.f32 %v3433, %v3463
      %v3478 = vmul.f32 %v3432, %v3467
      %v3479 = vmul.f32 %v3439, %v3471
      %v3480 = vlaneseq
      %v3481 = vshrl.u32 %v3480, 7
      %v3482 = vsub.s32 6, %v3481
      %v3483 = vrot.slane %v3098, %v3482
      %v3484 = vlaneseq
      %v3485 = vshrl.u32 %v3484, 7
      %v3486 = vsub.s32 6, %v3485
      %v3487 = vrot.slane %v3099, %v3486
      %v3488 = vlaneseq
      %v3489 = vshrl.u32 %v3488, 7
      %v3490 = vsub.s32 6, %v3489
      %v3491 = vrot.slane %v3100, %v3490
      %v3492 = vlaneseq
      %v3493 = vshrl.u32 %v3492, 7
      %v3494 = vsub.s32 6, %v3493
      %v3495 = vrot.slane %v3101, %v3494
      %v3496 = vlaneseq
      %v3497 = vshrl.u32 %v3496, 7
      %v3498 = vsub.s32 6, %v3497
      %v3499 = vrot.slane %v3102, %v3498
      %v3500 = vlaneseq
      %v3501 = vshrl.u32 %v3500, 7
      %v3502 = vsub.s32 6, %v3501
      %v3503 = vrot.slane %v3103, %v3502
      %v3504 = vlaneseq
      %v3505 = vshrl.u32 %v3504, 7
      %v3506 = vsub.s32 6, %v3505
      %v3507 = vrot.slane %v3104, %v3506
      %v3508 = vlaneseq
      %v3509 = vshrl.u32 %v3508, 7
      %v3510 = vsub.s32 6, %v3509
      %v3511 = vrot.slane %v3105, %v3510
      %v3512 = vmul.f32 %v3138, %v3483
      %v3513 = vmul.f32 %v3137, %v3487
      %v3514 = vmul.f32 %v3136, %v3491
      %v3515 = vmul.f32 %v3135, %v3495
      %v3516 = vmul.f32 %v3134, %v3499
      %v3517 = vmul.f32 %v3133, %v3503
      %v3518 = vmul.f32 %v3132, %v3507
      %v3519 = vmul.f32 %v3139, %v3511
      %v3520 = vlaneseq
      %v3521 = vshrl.u32 %v3520, 7
      %v3522 = vsub.s32 7, %v3521
      %v3523 = vrot.slane %v3098, %v3522
      %v3524 = vlaneseq
      %v3525 = vshrl.u32 %v3524, 7
      %v3526 = vsub.s32 7, %v3525
      %v3527 = vrot.slane %v3099, %v3526
      %v3528 = vlaneseq
      %v3529 = vshrl.u32 %v3528, 7
      %v3530 = vsub.s32 7, %v3529
      %v3531 = vrot.slane %v3100, %v3530
      %v3532 = vlaneseq
      %v3533 = vshrl.u32 %v3532, 7
      %v3534 = vsub.s32 7, %v3533
      %v3535 = vrot.slane %v3101, %v3534
      %v3536 = vlaneseq
      %v3537 = vshrl.u32 %v3536, 7
      %v3538 = vsub.s32 7, %v3537
      %v3539 = vrot.slane %v3102, %v3538
      %v3540 = vlaneseq
      %v3541 = vshrl.u32 %v3540, 7
      %v3542 = vsub.s32 7, %v3541
      %v3543 = vrot.slane %v3103, %v3542
      %v3544 = vlaneseq
      %v3545 = vshrl.u32 %v3544, 7
      %v3546 = vsub.s32 7, %v3545
      %v3547 = vrot.slane %v3104, %v3546
      %v3548 = vlaneseq
      %v3549 = vshrl.u32 %v3548, 7
      %v3550 = vsub.s32 7, %v3549
      %v3551 = vrot.slane %v3105, %v3550
      %v3552 = vmul.f32 %v3203, %v3523
      %v3553 = vmul.f32 %v3202, %v3527
      %v3554 = vmul.f32 %v3201, %v3531
      %v3555 = vmul.f32 %v3200, %v3535
      %v3556 = vmul.f32 %v3199, %v3539
      %v3557 = vmul.f32 %v3198, %v3543
      %v3558 = vmul.f32 %v3197, %v3547
      %v3559 = vmul.f32 %v3204, %v3551
      %v3560 = vlaneseq
      %v3561 = vshrl.u32 %v3560, 7
      %v3562 = vsub.s32 0, %v3561
      %v3563 = vrot.slane %v3106, %v3562
      %v3564 = vlaneseq
      %v3565 = vshrl.u32 %v3564, 7
      %v3566 = vsub.s32 0, %v3565
      %v3567 = vrot.slane %v3107, %v3566
      %v3568 = vlaneseq
      %v3569 = vshrl.u32 %v3568, 7
      %v3570 = vsub.s32 0, %v3569
      %v3571 = vrot.slane %v3108, %v3570
      %v3572 = vlaneseq
      %v3573 = vshrl.u32 %v3572, 7
      %v3574 = vsub.s32 0, %v3573
      %v3575 = vrot.slane %v3109, %v3574
      %v3576 = vlaneseq
      %v3577 = vshrl.u32 %v3576, 7
      %v3578 = vsub.s32 0, %v3577
      %v3579 = vrot.slane %v3110, %v3578
      %v3580 = vlaneseq
      %v3581 = vshrl.u32 %v3580, 7
      %v3582 = vsub.s32 0, %v3581
      %v3583 = vrot.slane %v3111, %v3582
      %v3584 = vlaneseq
      %v3585 = vshrl.u32 %v3584, 7
      %v3586 = vsub.s32 0, %v3585
      %v3587 = vrot.slane %v3112, %v3586
      %v3588 = vlaneseq
      %v3589 = vshrl.u32 %v3588, 7
      %v3590 = vsub.s32 0, %v3589
      %v3591 = vrot.slane %v3113, %v3590
      %v3592 = vmul.f32 %v3268, %v3563
      %v3593 = vmul.f32 %v3267, %v3567
      %v3594 = vmul.f32 %v3266, %v3571
      %v3595 = vmul.f32 %v3265, %v3575
      %v3596 = vmul.f32 %v3264, %v3579
      %v3597 = vmul.f32 %v3263, %v3583
      %v3598 = vmul.f32 %v3262, %v3587
      %v3599 = vmul.f32 %v3269, %v3591
      %v3600 = vpack.c.bf16 %v3237, %v3172
      %v3601 = vpack.c.bf16 %v3238, %v3173
      %v3602 = vpack.c.bf16 %v3239, %v3174
      %v3603 = vpack.c.bf16 %v3240, %v3175
      %v3604 = vpack.c.bf16 %v3241, %v3176
      %v3605 = vpack.c.bf16 %v3242, %v3177
      %v3606 = vpack.c.bf16 %v3243, %v3178
      %v3607 = vpack.c.bf16 %v3244, %v3179
      %v3608 = vpack.c.bf16 %v3367, %v3302
      %v3609 = vpack.c.bf16 %v3368, %v3303
      %v3610 = vpack.c.bf16 %v3369, %v3304
      %v3611 = vpack.c.bf16 %v3370, %v3305
      %v3612 = vpack.c.bf16 %v3371, %v3306
      %v3613 = vpack.c.bf16 %v3372, %v3307
      %v3614 = vpack.c.bf16 %v3373, %v3308
      %v3615 = vpack.c.bf16 %v3374, %v3309
      %v3616 = vpack.c.bf16 %v3472, %v3407
      %v3617 = vpack.c.bf16 %v3473, %v3408
      %v3618 = vpack.c.bf16 %v3474, %v3409
      %v3619 = vpack.c.bf16 %v3475, %v3410
      %v3620 = vpack.c.bf16 %v3476, %v3411
      %v3621 = vpack.c.bf16 %v3477, %v3412
      %v3622 = vpack.c.bf16 %v3478, %v3413
      %v3623 = vpack.c.bf16 %v3479, %v3414
      %v3624 = vpack.c.bf16 %v3552, %v3512
      %v3625 = vpack.c.bf16 %v3553, %v3513
      %v3626 = vpack.c.bf16 %v3554, %v3514
      %v3627 = vpack.c.bf16 %v3555, %v3515
      %v3628 = vpack.c.bf16 %v3556, %v3516
      %v3629 = vpack.c.bf16 %v3557, %v3517
      %v3630 = vpack.c.bf16 %v3558, %v3518
      %v3631 = vpack.c.bf16 %v3559, %v3519
      %v3632 = vpack.c.bf16 1.0, %v3592
      %v3633 = vpack.c.bf16 1.0, %v3593
      %v3634 = vpack.c.bf16 1.0, %v3594
      %v3635 = vpack.c.bf16 1.0, %v3595
      %v3636 = vpack.c.bf16 1.0, %v3596
      %v3637 = vpack.c.bf16 1.0, %v3597
      %v3638 = vpack.c.bf16 1.0, %v3598
      %v3639 = vpack.c.bf16 1.0, %v3599
      %v3641 = vsel %vm1042, %v3114, 0
      %3643 = vmatprep.subr.bf16.mxu0 0
      %3644 = vmatpush1.bf16.msra.mxu0 0
      %3645 = vmatprep.subr.bf16.mxu0 0
      %3646 = vmatpush1.bf16.msra.mxu0 0
      %3647 = vmatprep.subr.bf16.mxu0 0
      %3648 = vmatpush1.bf16.msra.mxu0 0
      %3649 = vmatprep.subr.bf16.mxu0 %v3633
      %3650 = vmatpush1.bf16.msra.mxu0 %v3632
      %3651 = vmatprep.subr.bf16.mxu0 %v3625
      %3652 = vmatpush1.bf16.msra.mxu0 %v3624
      %3653 = vmatprep.subr.bf16.mxu0 %v3617
      %3654 = vmatpush1.bf16.msra.mxu0 %v3616
      %3655 = vmatprep.subr.bf16.mxu0 %v3609
      %3656 = vmatpush1.bf16.msra.mxu0 %v3608
      %3657 = vmatprep.subr.bf16.mxu0 %v3601
      %3658 = vmatpush1.bf16.msra.mxu0 %v3600
      %3659 = vmatprep.subr.bf16.mxu0 0
      %3660 = vmatpush2.bf16.msra.mxu0 0
      %3661 = vmatprep.subr.bf16.mxu0 0
      %3662 = vmatpush2.bf16.msra.mxu0 0
      %3663 = vmatprep.subr.bf16.mxu0 0
      %3664 = vmatpush2.bf16.msra.mxu0 0
      %3665 = vmatprep.subr.bf16.mxu0 0
      %3666 = vmatpush2.bf16.msra.mxu0 0
      %3667 = vmatprep.subr.bf16.mxu0 0
      %3668 = vmatpush2.bf16.msra.mxu0 0
      %3669 = vmatprep.subr.bf16.mxu0 0
      %3670 = vmatpush2.bf16.msra.mxu0 0
      %3671 = vmatprep.subr.bf16.mxu0 0
      %3672 = vmatpush2.bf16.msra.mxu0 0
      %3673 = vmatprep.subr.bf16.mxu0 0
      %3674 = vmatpush2.bf16.msra.mxu0 0
      %3675 = vmatprep.mubr.bf16.mxu0 0
      %3676 = vmatmul.mubr.bf16.gmra.mxu0 %v3641
      %v3677 = vpop.f32.mrf.mxu0
      %v3678 = vadd.f32 0.0, %v3677
      %v3679 = vpop.f32.mrf.mxu0
      %v3680 = vadd.f32 0.0, %v3679
      %v3681 = vpop.f32.mrf.mxu0
      %v3682 = vpop.f32.mrf.mxu0
      %3683 = vdwg.mxu0
      %3684 = vmatprep.subr.bf16.mxu0 0
      %3685 = vmatpush1.bf16.msra.mxu0 0
      %3686 = vmatprep.subr.bf16.mxu0 0
      %3687 = vmatpush1.bf16.msra.mxu0 0
      %3688 = vmatprep.subr.bf16.mxu0 0
      %3689 = vmatpush1.bf16.msra.mxu0 0
      %3690 = vmatprep.subr.bf16.mxu0 %v3635
      %3691 = vmatpush1.bf16.msra.mxu0 %v3634
      %3692 = vmatprep.subr.bf16.mxu0 %v3627
      %3693 = vmatpush1.bf16.msra.mxu0 %v3626
      %3694 = vmatprep.subr.bf16.mxu0 %v3619
      %3695 = vmatpush1.bf16.msra.mxu0 %v3618
      %3696 = vmatprep.subr.bf16.mxu0 %v3611
      %3697 = vmatpush1.bf16.msra.mxu0 %v3610
      %3698 = vmatprep.subr.bf16.mxu0 %v3603
      %3699 = vmatpush1.bf16.msra.mxu0 %v3602
      %3700 = vmatprep.subr.bf16.mxu0 0
      %3701 = vmatpush2.bf16.msra.mxu0 0
      %3702 = vmatprep.subr.bf16.mxu0 0
      %3703 = vmatpush2.bf16.msra.mxu0 0
      %3704 = vmatprep.subr.bf16.mxu0 0
      %3705 = vmatpush2.bf16.msra.mxu0 0
      %3706 = vmatprep.subr.bf16.mxu0 0
      %3707 = vmatpush2.bf16.msra.mxu0 0
      %3708 = vmatprep.subr.bf16.mxu0 0
      %3709 = vmatpush2.bf16.msra.mxu0 0
      %3710 = vmatprep.subr.bf16.mxu0 0
      %3711 = vmatpush2.bf16.msra.mxu0 0
      %3712 = vmatprep.subr.bf16.mxu0 0
      %3713 = vmatpush2.bf16.msra.mxu0 0
      %3714 = vmatprep.subr.bf16.mxu0 0
      %3715 = vmatpush2.bf16.msra.mxu0 0
      %3716 = vmatprep.mubr.bf16.mxu0 0
      %3717 = vmatmul.mubr.bf16.gmra.mxu0 %v3641
      %v3718 = vpop.f32.mrf.mxu0
      %v3719 = vadd.f32 0.0, %v3718
      %v3720 = vpop.f32.mrf.mxu0
      %v3721 = vadd.f32 0.0, %v3720
      %v3722 = vpop.f32.mrf.mxu0
      %v3723 = vpop.f32.mrf.mxu0
      %3724 = vdwg.mxu0
      %3725 = vmatprep.subr.bf16.mxu0 0
      %3726 = vmatpush1.bf16.msra.mxu0 0
      %3727 = vmatprep.subr.bf16.mxu0 0
      %3728 = vmatpush1.bf16.msra.mxu0 0
      %3729 = vmatprep.subr.bf16.mxu0 0
      %3730 = vmatpush1.bf16.msra.mxu0 0
      %3731 = vmatprep.subr.bf16.mxu0 %v3637
      %3732 = vmatpush1.bf16.msra.mxu0 %v3636
      %3733 = vmatprep.subr.bf16.mxu0 %v3629
      %3734 = vmatpush1.bf16.msra.mxu0 %v3628
      %3735 = vmatprep.subr.bf16.mxu0 %v3621
      %3736 = vmatpush1.bf16.msra.mxu0 %v3620
      %3737 = vmatprep.subr.bf16.mxu0 %v3613
      %3738 = vmatpush1.bf16.msra.mxu0 %v3612
      %3739 = vmatprep.subr.bf16.mxu0 %v3605
      %3740 = vmatpush1.bf16.msra.mxu0 %v3604
      %3741 = vmatprep.subr.bf16.mxu0 0
      %3742 = vmatpush2.bf16.msra.mxu0 0
      %3743 = vmatprep.subr.bf16.mxu0 0
      %3744 = vmatpush2.bf16.msra.mxu0 0
      %3745 = vmatprep.subr.bf16.mxu0 0
      %3746 = vmatpush2.bf16.msra.mxu0 0
      %3747 = vmatprep.subr.bf16.mxu0 0
      %3748 = vmatpush2.bf16.msra.mxu0 0
      %3749 = vmatprep.subr.bf16.mxu0 0
      %3750 = vmatpush2.bf16.msra.mxu0 0
      %3751 = vmatprep.subr.bf16.mxu0 0
      %3752 = vmatpush2.bf16.msra.mxu0 0
      %3753 = vmatprep.subr.bf16.mxu0 0
      %3754 = vmatpush2.bf16.msra.mxu0 0
      %3755 = vmatprep.subr.bf16.mxu0 0
      %3756 = vmatpush2.bf16.msra.mxu0 0
      %3757 = vmatprep.mubr.bf16.mxu0 0
      %3758 = vmatmul.mubr.bf16.gmra.mxu0 %v3641
      %v3759 = vpop.f32.mrf.mxu0
      %v3760 = vadd.f32 0.0, %v3759
      %v3761 = vpop.f32.mrf.mxu0
      %v3762 = vadd.f32 0.0, %v3761
      %v3763 = vpop.f32.mrf.mxu0
      %v3764 = vpop.f32.mrf.mxu0
      %3765 = vdwg.mxu0
      %3766 = vmatprep.subr.bf16.mxu0 0
      %3767 = vmatpush1.bf16.msra.mxu0 0
      %3768 = vmatprep.subr.bf16.mxu0 0
      %3769 = vmatpush1.bf16.msra.mxu0 0
      %3770 = vmatprep.subr.bf16.mxu0 0
      %3771 = vmatpush1.bf16.msra.mxu0 0
      %3772 = vmatprep.subr.bf16.mxu0 %v3639
      %3773 = vmatpush1.bf16.msra.mxu0 %v3638
      %3774 = vmatprep.subr.bf16.mxu0 %v3631
      %3775 = vmatpush1.bf16.msra.mxu0 %v3630
      %3776 = vmatprep.subr.bf16.mxu0 %v3623
      %3777 = vmatpush1.bf16.msra.mxu0 %v3622
      %3778 = vmatprep.subr.bf16.mxu0 %v3615
      %3779 = vmatpush1.bf16.msra.mxu0 %v3614
      %3780 = vmatprep.subr.bf16.mxu0 %v3607
      %3781 = vmatpush1.bf16.msra.mxu0 %v3606
      %3782 = vmatprep.subr.bf16.mxu0 0
      %3783 = vmatpush2.bf16.msra.mxu0 0
      %3784 = vmatprep.subr.bf16.mxu0 0
      %3785 = vmatpush2.bf16.msra.mxu0 0
      %3786 = vmatprep.subr.bf16.mxu0 0
      %3787 = vmatpush2.bf16.msra.mxu0 0
      %3788 = vmatprep.subr.bf16.mxu0 0
      %3789 = vmatpush2.bf16.msra.mxu0 0
      %3790 = vmatprep.subr.bf16.mxu0 0
      %3791 = vmatpush2.bf16.msra.mxu0 0
      %3792 = vmatprep.subr.bf16.mxu0 0
      %3793 = vmatpush2.bf16.msra.mxu0 0
      %3794 = vmatprep.subr.bf16.mxu0 0
      %3795 = vmatpush2.bf16.msra.mxu0 0
      %3796 = vmatprep.subr.bf16.mxu0 0
      %3797 = vmatpush2.bf16.msra.mxu0 0
      %3798 = vmatprep.mubr.bf16.mxu0 0
      %3799 = vmatmul.mubr.bf16.gmra.mxu0 %v3641
      %v3800 = vpop.f32.mrf.mxu0
      %v3801 = vadd.f32 0.0, %v3800
      %v3802 = vpop.f32.mrf.mxu0
      %v3803 = vadd.f32 0.0, %v3802
      %v3804 = vpop.f32.mrf.mxu0
      %v3805 = vpop.f32.mrf.mxu0
      %3806 = vdwg.mxu0
      %v3807 = vmax.f32 %v3678, 0.0
      %v3808 = vmax.f32 %v3680, 0.0
      %v3809 = vmax.f32 %v3719, 0.0
      %v3810 = vmax.f32 %v3721, 0.0
      %v3811 = vmax.f32 %v3760, 0.0
      %v3812 = vmax.f32 %v3762, 0.0
      %v3813 = vmax.f32 %v3801, 0.0
      %v3814 = vmax.f32 %v3803, 0.0
      %v3815 = vld [vmem:[%s6] sm:$0xf]
      %3816 = vrot.lane.b32.xlu0 %v3807, 68
      %v3817 = vpop.permute.xlu0 %3816
      %3818 = vrot.lane.b32.xlu0 %v3808, 68
      %v3819 = vpop.permute.xlu0 %3818
      %3820 = vrot.lane.b32.xlu0 %v3809, 68
      %v3821 = vpop.permute.xlu0 %3820
      %3822 = vrot.lane.b32.xlu0 %v3810, 68
      %v3823 = vpop.permute.xlu0 %3822
      %3824 = vrot.lane.b32.xlu0 %v3811, 68
      %v3825 = vpop.permute.xlu0 %3824
      %3826 = vrot.lane.b32.xlu0 %v3812, 68
      %v3827 = vpop.permute.xlu0 %3826
      %3828 = vrot.lane.b32.xlu0 %v3813, 68
      %v3829 = vpop.permute.xlu0 %3828
      %3830 = vrot.lane.b32.xlu0 %v3814, 68
      %v3831 = vpop.permute.xlu0 %3830
      %v3832 = vsel %vm3131, %v3829, %v3831
      %v3833 = vsel %vm3131, %v3827, %v3829
      %v3834 = vsel %vm3131, %v3825, %v3827
      %v3835 = vsel %vm3131, %v3823, %v3825
      %v3836 = vsel %vm3131, %v3821, %v3823
      %v3837 = vsel %vm3131, %v3819, %v3821
      %v3838 = vsel %vm3131, %v3817, %v3819
      %v3839 = vsel %vm3131, %v3831, %v3817
      %v3840 = vmul.f32 %v3839, %v3143
      %v3841 = vmul.f32 %v3838, %v3147
      %v3842 = vmul.f32 %v3837, %v3151
      %v3843 = vmul.f32 %v3836, %v3155
      %v3844 = vmul.f32 %v3835, %v3159
      %v3845 = vmul.f32 %v3834, %v3163
      %v3846 = vmul.f32 %v3833, %v3167
      %v3847 = vmul.f32 %v3832, %v3171
      %3848 = vrot.lane.b32.xlu0 %v3807, 64
      %v3849 = vpop.permute.xlu0 %3848
      %3850 = vrot.lane.b32.xlu0 %v3808, 64
      %v3851 = vpop.permute.xlu0 %3850
      %3852 = vrot.lane.b32.xlu0 %v3809, 64
      %v3853 = vpop.permute.xlu0 %3852
      %3854 = vrot.lane.b32.xlu0 %v3810, 64
      %v3855 = vpop.permute.xlu0 %3854
      %3856 = vrot.lane.b32.xlu0 %v3811, 64
      %v3857 = vpop.permute.xlu0 %3856
      %3858 = vrot.lane.b32.xlu0 %v3812, 64
      %v3859 = vpop.permute.xlu0 %3858
      %3860 = vrot.lane.b32.xlu0 %v3813, 64
      %v3861 = vpop.permute.xlu0 %3860
      %3862 = vrot.lane.b32.xlu0 %v3814, 64
      %v3863 = vpop.permute.xlu0 %3862
      %v3864 = vsel %vm3196, %v3861, %v3863
      %v3865 = vsel %vm3196, %v3859, %v3861
      %v3866 = vsel %vm3196, %v3857, %v3859
      %v3867 = vsel %vm3196, %v3855, %v3857
      %v3868 = vsel %vm3196, %v3853, %v3855
      %v3869 = vsel %vm3196, %v3851, %v3853
      %v3870 = vsel %vm3196, %v3849, %v3851
      %v3871 = vsel %vm3196, %v3863, %v3849
      %v3872 = vmul.f32 %v3871, %v3208
      %v3873 = vmul.f32 %v3870, %v3212
      %v3874 = vmul.f32 %v3869, %v3216
      %v3875 = vmul.f32 %v3868, %v3220
      %v3876 = vmul.f32 %v3867, %v3224
      %v3877 = vmul.f32 %v3866, %v3228
      %v3878 = vmul.f32 %v3865, %v3232
      %v3879 = vmul.f32 %v3864, %v3236
      %3880 = vrot.lane.b32.xlu0 %v3807, 60
      %v3881 = vpop.permute.xlu0 %3880
      %3882 = vrot.lane.b32.xlu0 %v3808, 60
      %v3883 = vpop.permute.xlu0 %3882
      %3884 = vrot.lane.b32.xlu0 %v3809, 60
      %v3885 = vpop.permute.xlu0 %3884
      %3886 = vrot.lane.b32.xlu0 %v3810, 60
      %v3887 = vpop.permute.xlu0 %3886
      %3888 = vrot.lane.b32.xlu0 %v3811, 60
      %v3889 = vpop.permute.xlu0 %3888
      %3890 = vrot.lane.b32.xlu0 %v3812, 60
      %v3891 = vpop.permute.xlu0 %3890
      %3892 = vrot.lane.b32.xlu0 %v3813, 60
      %v3893 = vpop.permute.xlu0 %3892
      %3894 = vrot.lane.b32.xlu0 %v3814, 60
      %v3895 = vpop.permute.xlu0 %3894
      %v3896 = vsel %vm3261, %v3893, %v3895
      %v3897 = vsel %vm3261, %v3891, %v3893
      %v3898 = vsel %vm3261, %v3889, %v3891
      %v3899 = vsel %vm3261, %v3887, %v3889
      %v3900 = vsel %vm3261, %v3885, %v3887
      %v3901 = vsel %vm3261, %v3883, %v3885
      %v3902 = vsel %vm3261, %v3881, %v3883
      %v3903 = vsel %vm3261, %v3895, %v3881
      %v3904 = vmul.f32 %v3903, %v3273
      %v3905 = vmul.f32 %v3902, %v3277
      %v3906 = vmul.f32 %v3901, %v3281
      %v3907 = vmul.f32 %v3900, %v3285
      %v3908 = vmul.f32 %v3899, %v3289
      %v3909 = vmul.f32 %v3898, %v3293
      %v3910 = vmul.f32 %v3897, %v3297
      %v3911 = vmul.f32 %v3896, %v3301
      %3912 = vrot.lane.b32.xlu0 %v3807, 4
      %v3913 = vpop.permute.xlu0 %3912
      %3914 = vrot.lane.b32.xlu0 %v3808, 4
      %v3915 = vpop.permute.xlu0 %3914
      %3916 = vrot.lane.b32.xlu0 %v3809, 4
      %v3917 = vpop.permute.xlu0 %3916
      %3918 = vrot.lane.b32.xlu0 %v3810, 4
      %v3919 = vpop.permute.xlu0 %3918
      %3920 = vrot.lane.b32.xlu0 %v3811, 4
      %v3921 = vpop.permute.xlu0 %3920
      %3922 = vrot.lane.b32.xlu0 %v3812, 4
      %v3923 = vpop.permute.xlu0 %3922
      %3924 = vrot.lane.b32.xlu0 %v3813, 4
      %v3925 = vpop.permute.xlu0 %3924
      %3926 = vrot.lane.b32.xlu0 %v3814, 4
      %v3927 = vpop.permute.xlu0 %3926
      %v3928 = vsel %vm3326, %v3925, %v3927
      %v3929 = vsel %vm3326, %v3923, %v3925
      %v3930 = vsel %vm3326, %v3921, %v3923
      %v3931 = vsel %vm3326, %v3919, %v3921
      %v3932 = vsel %vm3326, %v3917, %v3919
      %v3933 = vsel %vm3326, %v3915, %v3917
      %v3934 = vsel %vm3326, %v3913, %v3915
      %v3935 = vsel %vm3326, %v3927, %v3913
      %v3936 = vmul.f32 %v3935, %v3338
      %v3937 = vmul.f32 %v3934, %v3342
      %v3938 = vmul.f32 %v3933, %v3346
      %v3939 = vmul.f32 %v3932, %v3350
      %v3940 = vmul.f32 %v3931, %v3354
      %v3941 = vmul.f32 %v3930, %v3358
      %v3942 = vmul.f32 %v3929, %v3362
      %v3943 = vmul.f32 %v3928, %v3366
      %v3944 = vmul.f32 %v3807, %v3378
      %v3945 = vmul.f32 %v3808, %v3382
      %v3946 = vmul.f32 %v3809, %v3386
      %v3947 = vmul.f32 %v3810, %v3390
      %v3948 = vmul.f32 %v3811, %v3394
      %v3949 = vmul.f32 %v3812, %v3398
      %v3950 = vmul.f32 %v3813, %v3402
      %v3951 = vmul.f32 %v3814, %v3406
      %3952 = vrot.lane.b32.xlu0 %v3807, 124
      %v3953 = vpop.permute.xlu0 %3952
      %3954 = vrot.lane.b32.xlu0 %v3808, 124
      %v3955 = vpop.permute.xlu0 %3954
      %3956 = vrot.lane.b32.xlu0 %v3809, 124
      %v3957 = vpop.permute.xlu0 %3956
      %3958 = vrot.lane.b32.xlu0 %v3810, 124
      %v3959 = vpop.permute.xlu0 %3958
      %3960 = vrot.lane.b32.xlu0 %v3811, 124
      %v3961 = vpop.permute.xlu0 %3960
      %3962 = vrot.lane.b32.xlu0 %v3812, 124
      %v3963 = vpop.permute.xlu0 %3962
      %3964 = vrot.lane.b32.xlu0 %v3813, 124
      %v3965 = vpop.permute.xlu0 %3964
      %3966 = vrot.lane.b32.xlu0 %v3814, 124
      %v3967 = vpop.permute.xlu0 %3966
      %v3968 = vsel %vm3431, %v3965, %v3967
      %v3969 = vsel %vm3431, %v3963, %v3965
      %v3970 = vsel %vm3431, %v3961, %v3963
      %v3971 = vsel %vm3431, %v3959, %v3961
      %v3972 = vsel %vm3431, %v3957, %v3959
      %v3973 = vsel %vm3431, %v3955, %v3957
      %v3974 = vsel %vm3431, %v3953, %v3955
      %v3975 = vsel %vm3431, %v3967, %v3953
      %v3976 = vmul.f32 %v3974, %v3443
      %v3977 = vmul.f32 %v3973, %v3447
      %v3978 = vmul.f32 %v3972, %v3451
      %v3979 = vmul.f32 %v3971, %v3455
      %v3980 = vmul.f32 %v3970, %v3459
      %v3981 = vmul.f32 %v3969, %v3463
      %v3982 = vmul.f32 %v3968, %v3467
      %v3983 = vmul.f32 %v3975, %v3471
      %v3984 = vmul.f32 %v3838, %v3483
      %v3985 = vmul.f32 %v3837, %v3487
      %v3986 = vmul.f32 %v3836, %v3491
      %v3987 = vmul.f32 %v3835, %v3495
      %v3988 = vmul.f32 %v3834, %v3499
      %v3989 = vmul.f32 %v3833, %v3503
      %v3990 = vmul.f32 %v3832, %v3507
      %v3991 = vmul.f32 %v3839, %v3511
      %v3992 = vmul.f32 %v3870, %v3523
      %v3993 = vmul.f32 %v3869, %v3527
      %v3994 = vmul.f32 %v3868, %v3531
      %v3995 = vmul.f32 %v3867, %v3535
      %v3996 = vmul.f32 %v3866, %v3539
      %v3997 = vmul.f32 %v3865, %v3543
      %v3998 = vmul.f32 %v3864, %v3547
      %v3999 = vmul.f32 %v3871, %v3551
      %v4000 = vmul.f32 %v3902, %v3563
      %v4001 = vmul.f32 %v3901, %v3567
      %v4002 = vmul.f32 %v3900, %v3571
      %v4003 = vmul.f32 %v3899, %v3575
      %v4004 = vmul.f32 %v3898, %v3579
      %v4005 = vmul.f32 %v3897, %v3583
      %v4006 = vmul.f32 %v3896, %v3587
      %v4007 = vmul.f32 %v3903, %v3591
      %v4008 = vpack.c.bf16 %v3872, %v3840
      %v4009 = vpack.c.bf16 %v3873, %v3841
      %v4010 = vpack.c.bf16 %v3874, %v3842
      %v4011 = vpack.c.bf16 %v3875, %v3843
      %v4012 = vpack.c.bf16 %v3876, %v3844
      %v4013 = vpack.c.bf16 %v3877, %v3845
      %v4014 = vpack.c.bf16 %v3878, %v3846
      %v4015 = vpack.c.bf16 %v3879, %v3847
      %v4016 = vpack.c.bf16 %v3936, %v3904
      %v4017 = vpack.c.bf16 %v3937, %v3905
      %v4018 = vpack.c.bf16 %v3938, %v3906
      %v4019 = vpack.c.bf16 %v3939, %v3907
      %v4020 = vpack.c.bf16 %v3940, %v3908
      %v4021 = vpack.c.bf16 %v3941, %v3909
      %v4022 = vpack.c.bf16 %v3942, %v3910
      %v4023 = vpack.c.bf16 %v3943, %v3911
      %v4024 = vpack.c.bf16 %v3976, %v3944
      %v4025 = vpack.c.bf16 %v3977, %v3945
      %v4026 = vpack.c.bf16 %v3978, %v3946
      %v4027 = vpack.c.bf16 %v3979, %v3947
      %v4028 = vpack.c.bf16 %v3980, %v3948
      %v4029 = vpack.c.bf16 %v3981, %v3949
      %v4030 = vpack.c.bf16 %v3982, %v3950
      %v4031 = vpack.c.bf16 %v3983, %v3951
      %v4032 = vpack.c.bf16 %v3992, %v3984
      %v4033 = vpack.c.bf16 %v3993, %v3985
      %v4034 = vpack.c.bf16 %v3994, %v3986
      %v4035 = vpack.c.bf16 %v3995, %v3987
      %v4036 = vpack.c.bf16 %v3996, %v3988
      %v4037 = vpack.c.bf16 %v3997, %v3989
      %v4038 = vpack.c.bf16 %v3998, %v3990
      %v4039 = vpack.c.bf16 %v3999, %v3991
      %v4040 = vpack.c.bf16 1.0, %v4000
      %v4041 = vpack.c.bf16 1.0, %v4001
      %v4042 = vpack.c.bf16 1.0, %v4002
      %v4043 = vpack.c.bf16 1.0, %v4003
      %v4044 = vpack.c.bf16 1.0, %v4004
      %v4045 = vpack.c.bf16 1.0, %v4005
      %v4046 = vpack.c.bf16 1.0, %v4006
      %v4047 = vpack.c.bf16 1.0, %v4007
      %v4049 = vsel %vm1042, %v3815, 0
      %4051 = vmatprep.subr.bf16.mxu0 0
      %4052 = vmatpush1.bf16.msra.mxu0 0
      %4053 = vmatprep.subr.bf16.mxu0 0
      %4054 = vmatpush1.bf16.msra.mxu0 0
      %4055 = vmatprep.subr.bf16.mxu0 0
      %4056 = vmatpush1.bf16.msra.mxu0 0
      %4057 = vmatprep.subr.bf16.mxu0 %v4041
      %4058 = vmatpush1.bf16.msra.mxu0 %v4040
      %4059 = vmatprep.subr.bf16.mxu0 %v4033
      %4060 = vmatpush1.bf16.msra.mxu0 %v4032
      %4061 = vmatprep.subr.bf16.mxu0 %v4025
      %4062 = vmatpush1.bf16.msra.mxu0 %v4024
      %4063 = vmatprep.subr.bf16.mxu0 %v4017
      %4064 = vmatpush1.bf16.msra.mxu0 %v4016
      %4065 = vmatprep.subr.bf16.mxu0 %v4009
      %4066 = vmatpush1.bf16.msra.mxu0 %v4008
      %4067 = vmatprep.subr.bf16.mxu0 0
      %4068 = vmatpush2.bf16.msra.mxu0 0
      %4069 = vmatprep.subr.bf16.mxu0 0
      %4070 = vmatpush2.bf16.msra.mxu0 0
      %4071 = vmatprep.subr.bf16.mxu0 0
      %4072 = vmatpush2.bf16.msra.mxu0 0
      %4073 = vmatprep.subr.bf16.mxu0 0
      %4074 = vmatpush2.bf16.msra.mxu0 0
      %4075 = vmatprep.subr.bf16.mxu0 0
      %4076 = vmatpush2.bf16.msra.mxu0 0
      %4077 = vmatprep.subr.bf16.mxu0 0
      %4078 = vmatpush2.bf16.msra.mxu0 0
      %4079 = vmatprep.subr.bf16.mxu0 0
      %4080 = vmatpush2.bf16.msra.mxu0 0
      %4081 = vmatprep.subr.bf16.mxu0 0
      %4082 = vmatpush2.bf16.msra.mxu0 0
      %4083 = vmatprep.mubr.bf16.mxu0 0
      %4084 = vmatmul.mubr.bf16.gmra.mxu0 %v4049
      %v4085 = vpop.f32.mrf.mxu0
      %v4086 = vadd.f32 0.0, %v4085
      %v4087 = vpop.f32.mrf.mxu0
      %v4088 = vadd.f32 0.0, %v4087
      %v4089 = vpop.f32.mrf.mxu0
      %v4090 = vpop.f32.mrf.mxu0
      %4091 = vdwg.mxu0
      %4092 = vmatprep.subr.bf16.mxu0 0
      %4093 = vmatpush1.bf16.msra.mxu0 0
      %4094 = vmatprep.subr.bf16.mxu0 0
      %4095 = vmatpush1.bf16.msra.mxu0 0
      %4096 = vmatprep.subr.bf16.mxu0 0
      %4097 = vmatpush1.bf16.msra.mxu0 0
      %4098 = vmatprep.subr.bf16.mxu0 %v4043
      %4099 = vmatpush1.bf16.msra.mxu0 %v4042
      %4100 = vmatprep.subr.bf16.mxu0 %v4035
      %4101 = vmatpush1.bf16.msra.mxu0 %v4034
      %4102 = vmatprep.subr.bf16.mxu0 %v4027
      %4103 = vmatpush1.bf16.msra.mxu0 %v4026
      %4104 = vmatprep.subr.bf16.mxu0 %v4019
      %4105 = vmatpush1.bf16.msra.mxu0 %v4018
      %4106 = vmatprep.subr.bf16.mxu0 %v4011
      %4107 = vmatpush1.bf16.msra.mxu0 %v4010
      %4108 = vmatprep.subr.bf16.mxu0 0
      %4109 = vmatpush2.bf16.msra.mxu0 0
      %4110 = vmatprep.subr.bf16.mxu0 0
      %4111 = vmatpush2.bf16.msra.mxu0 0
      %4112 = vmatprep.subr.bf16.mxu0 0
      %4113 = vmatpush2.bf16.msra.mxu0 0
      %4114 = vmatprep.subr.bf16.mxu0 0
      %4115 = vmatpush2.bf16.msra.mxu0 0
      %4116 = vmatprep.subr.bf16.mxu0 0
      %4117 = vmatpush2.bf16.msra.mxu0 0
      %4118 = vmatprep.subr.bf16.mxu0 0
      %4119 = vmatpush2.bf16.msra.mxu0 0
      %4120 = vmatprep.subr.bf16.mxu0 0
      %4121 = vmatpush2.bf16.msra.mxu0 0
      %4122 = vmatprep.subr.bf16.mxu0 0
      %4123 = vmatpush2.bf16.msra.mxu0 0
      %4124 = vmatprep.mubr.bf16.mxu0 0
      %4125 = vmatmul.mubr.bf16.gmra.mxu0 %v4049
      %v4126 = vpop.f32.mrf.mxu0
      %v4127 = vadd.f32 0.0, %v4126
      %v4128 = vpop.f32.mrf.mxu0
      %v4129 = vadd.f32 0.0, %v4128
      %v4130 = vpop.f32.mrf.mxu0
      %v4131 = vpop.f32.mrf.mxu0
      %4132 = vdwg.mxu0
      %4133 = vmatprep.subr.bf16.mxu0 0
      %4134 = vmatpush1.bf16.msra.mxu0 0
      %4135 = vmatprep.subr.bf16.mxu0 0
      %4136 = vmatpush1.bf16.msra.mxu0 0
      %4137 = vmatprep.subr.bf16.mxu0 0
      %4138 = vmatpush1.bf16.msra.mxu0 0
      %4139 = vmatprep.subr.bf16.mxu0 %v4045
      %4140 = vmatpush1.bf16.msra.mxu0 %v4044
      %4141 = vmatprep.subr.bf16.mxu0 %v4037
      %4142 = vmatpush1.bf16.msra.mxu0 %v4036
      %4143 = vmatprep.subr.bf16.mxu0 %v4029
      %4144 = vmatpush1.bf16.msra.mxu0 %v4028
      %4145 = vmatprep.subr.bf16.mxu0 %v4021
      %4146 = vmatpush1.bf16.msra.mxu0 %v4020
      %4147 = vmatprep.subr.bf16.mxu0 %v4013
      %4148 = vmatpush1.bf16.msra.mxu0 %v4012
      %4149 = vmatprep.subr.bf16.mxu0 0
      %4150 = vmatpush2.bf16.msra.mxu0 0
      %4151 = vmatprep.subr.bf16.mxu0 0
      %4152 = vmatpush2.bf16.msra.mxu0 0
      %4153 = vmatprep.subr.bf16.mxu0 0
      %4154 = vmatpush2.bf16.msra.mxu0 0
      %4155 = vmatprep.subr.bf16.mxu0 0
      %4156 = vmatpush2.bf16.msra.mxu0 0
      %4157 = vmatprep.subr.bf16.mxu0 0
      %4158 = vmatpush2.bf16.msra.mxu0 0
      %4159 = vmatprep.subr.bf16.mxu0 0
      %4160 = vmatpush2.bf16.msra.mxu0 0
      %4161 = vmatprep.subr.bf16.mxu0 0
      %4162 = vmatpush2.bf16.msra.mxu0 0
      %4163 = vmatprep.subr.bf16.mxu0 0
      %4164 = vmatpush2.bf16.msra.mxu0 0
      %4165 = vmatprep.mubr.bf16.mxu0 0
      %4166 = vmatmul.mubr.bf16.gmra.mxu0 %v4049
      %v4167 = vpop.f32.mrf.mxu0
      %v4168 = vadd.f32 0.0, %v4167
      %v4169 = vpop.f32.mrf.mxu0
      %v4170 = vadd.f32 0.0, %v4169
      %v4171 = vpop.f32.mrf.mxu0
      %v4172 = vpop.f32.mrf.mxu0
      %4173 = vdwg.mxu0
      %4174 = vmatprep.subr.bf16.mxu0 0
      %4175 = vmatpush1.bf16.msra.mxu0 0
      %4176 = vmatprep.subr.bf16.mxu0 0
      %4177 = vmatpush1.bf16.msra.mxu0 0
      %4178 = vmatprep.subr.bf16.mxu0 0
      %4179 = vmatpush1.bf16.msra.mxu0 0
      %4180 = vmatprep.subr.bf16.mxu0 %v4047
      %4181 = vmatpush1.bf16.msra.mxu0 %v4046
      %4182 = vmatprep.subr.bf16.mxu0 %v4039
      %4183 = vmatpush1.bf16.msra.mxu0 %v4038
      %4184 = vmatprep.subr.bf16.mxu0 %v4031
      %4185 = vmatpush1.bf16.msra.mxu0 %v4030
      %4186 = vmatprep.subr.bf16.mxu0 %v4023
      %4187 = vmatpush1.bf16.msra.mxu0 %v4022
      %4188 = vmatprep.subr.bf16.mxu0 %v4015
      %4189 = vmatpush1.bf16.msra.mxu0 %v4014
      %4190 = vmatprep.subr.bf16.mxu0 0
      %4191 = vmatpush2.bf16.msra.mxu0 0
      %4192 = vmatprep.subr.bf16.mxu0 0
      %4193 = vmatpush2.bf16.msra.mxu0 0
      %4194 = vmatprep.subr.bf16.mxu0 0
      %4195 = vmatpush2.bf16.msra.mxu0 0
      %4196 = vmatprep.subr.bf16.mxu0 0
      %4197 = vmatpush2.bf16.msra.mxu0 0
      %4198 = vmatprep.subr.bf16.mxu0 0
      %4199 = vmatpush2.bf16.msra.mxu0 0
      %4200 = vmatprep.subr.bf16.mxu0 0
      %4201 = vmatpush2.bf16.msra.mxu0 0
      %4202 = vmatprep.subr.bf16.mxu0 0
      %4203 = vmatpush2.bf16.msra.mxu0 0
      %4204 = vmatprep.subr.bf16.mxu0 0
      %4205 = vmatpush2.bf16.msra.mxu0 0
      %4206 = vmatprep.mubr.bf16.mxu0 0
      %4207 = vmatmul.mubr.bf16.gmra.mxu0 %v4049
      %v4208 = vpop.f32.mrf.mxu0
      %v4209 = vadd.f32 0.0, %v4208
      %v4210 = vpop.f32.mrf.mxu0
      %v4211 = vadd.f32 0.0, %v4210
      %v4212 = vpop.f32.mrf.mxu0
      %v4213 = vpop.f32.mrf.mxu0
      %4214 = vdwg.mxu0
      %v4215 = vmax.f32 %v4086, 0.0
      %v4216 = vmax.f32 %v4088, 0.0
      %v4217 = vmax.f32 %v4127, 0.0
      %v4218 = vmax.f32 %v4129, 0.0
      %v4219 = vmax.f32 %v4168, 0.0
      %v4220 = vmax.f32 %v4170, 0.0
      %v4221 = vmax.f32 %v4209, 0.0
      %v4222 = vmax.f32 %v4211, 0.0
      %v4223 = vld [vmem:[%s7] sm:$0xf]
      %v4224 = vld [vmem:[%s11] sm:$0xff]
      %v4225 = vld [vmem:[%s11 + $0x8] sm:$0xff]
      %v4226 = vld [vmem:[%s11 + $0x10] sm:$0xff]
      %v4227 = vld [vmem:[%s11 + $0x18] sm:$0xff]
      %v4228 = vld [vmem:[%s11 + $0x20] sm:$0xff]
      %v4229 = vld [vmem:[%s11 + $0x28] sm:$0xff]
      %v4230 = vld [vmem:[%s11 + $0x30] sm:$0xff]
      %v4231 = vld [vmem:[%s11 + $0x38] sm:$0xff]
      %v4232 = vld [vmem:[%s11 + $0x40] sm:$0x1]
      %v4233 = vld [vmem:[%s11 + $0x48] sm:$0x1]
      %v4234 = vld [vmem:[%s11 + $0x50] sm:$0x1]
      %v4235 = vld [vmem:[%s11 + $0x58] sm:$0x1]
      %v4236 = vld [vmem:[%s11 + $0x60] sm:$0x1]
      %v4237 = vld [vmem:[%s11 + $0x68] sm:$0x1]
      %v4238 = vld [vmem:[%s11 + $0x70] sm:$0x1]
      %v4239 = vld [vmem:[%s11 + $0x78] sm:$0x1]
      %4240 = vrot.lane.b32.xlu0 %v4215, 68
      %v4241 = vpop.permute.xlu0 %4240
      %4242 = vrot.lane.b32.xlu0 %v4216, 68
      %v4243 = vpop.permute.xlu0 %4242
      %4244 = vrot.lane.b32.xlu0 %v4217, 68
      %v4245 = vpop.permute.xlu0 %4244
      %4246 = vrot.lane.b32.xlu0 %v4218, 68
      %v4247 = vpop.permute.xlu0 %4246
      %4248 = vrot.lane.b32.xlu0 %v4219, 68
      %v4249 = vpop.permute.xlu0 %4248
      %4250 = vrot.lane.b32.xlu0 %v4220, 68
      %v4251 = vpop.permute.xlu0 %4250
      %4252 = vrot.lane.b32.xlu0 %v4221, 68
      %v4253 = vpop.permute.xlu0 %4252
      %4254 = vrot.lane.b32.xlu0 %v4222, 68
      %v4255 = vpop.permute.xlu0 %4254
      %v4256 = vsel %vm3131, %v4253, %v4255
      %v4257 = vsel %vm3131, %v4251, %v4253
      %v4258 = vsel %vm3131, %v4249, %v4251
      %v4259 = vsel %vm3131, %v4247, %v4249
      %v4260 = vsel %vm3131, %v4245, %v4247
      %v4261 = vsel %vm3131, %v4243, %v4245
      %v4262 = vsel %vm3131, %v4241, %v4243
      %v4263 = vsel %vm3131, %v4255, %v4241
      %v4264 = vlaneseq
      %v4265 = vshrl.u32 %v4264, 7
      %v4266 = vsub.s32 0, %v4265
      %v4267 = vrot.slane %v4224, %v4266
      %v4268 = vlaneseq
      %v4269 = vshrl.u32 %v4268, 7
      %v4270 = vsub.s32 0, %v4269
      %v4271 = vrot.slane %v4225, %v4270
      %v4272 = vlaneseq
      %v4273 = vshrl.u32 %v4272, 7
      %v4274 = vsub.s32 0, %v4273
      %v4275 = vrot.slane %v4226, %v4274
      %v4276 = vlaneseq
      %v4277 = vshrl.u32 %v4276, 7
      %v4278 = vsub.s32 0, %v4277
      %v4279 = vrot.slane %v4227, %v4278
      %v4280 = vlaneseq
      %v4281 = vshrl.u32 %v4280, 7
      %v4282 = vsub.s32 0, %v4281
      %v4283 = vrot.slane %v4228, %v4282
      %v4284 = vlaneseq
      %v4285 = vshrl.u32 %v4284, 7
      %v4286 = vsub.s32 0, %v4285
      %v4287 = vrot.slane %v4229, %v4286
      %v4288 = vlaneseq
      %v4289 = vshrl.u32 %v4288, 7
      %v4290 = vsub.s32 0, %v4289
      %v4291 = vrot.slane %v4230, %v4290
      %v4292 = vlaneseq
      %v4293 = vshrl.u32 %v4292, 7
      %v4294 = vsub.s32 0, %v4293
      %v4295 = vrot.slane %v4231, %v4294
      %v4296 = vmul.f32 %v4263, %v4267
      %v4297 = vmul.f32 %v4262, %v4271
      %v4298 = vmul.f32 %v4261, %v4275
      %v4299 = vmul.f32 %v4260, %v4279
      %v4300 = vmul.f32 %v4259, %v4283
      %v4301 = vmul.f32 %v4258, %v4287
      %v4302 = vmul.f32 %v4257, %v4291
      %v4303 = vmul.f32 %v4256, %v4295
      %4304 = vrot.lane.b32.xlu0 %v4215, 64
      %v4305 = vpop.permute.xlu0 %4304
      %4306 = vrot.lane.b32.xlu0 %v4216, 64
      %v4307 = vpop.permute.xlu0 %4306
      %4308 = vrot.lane.b32.xlu0 %v4217, 64
      %v4309 = vpop.permute.xlu0 %4308
      %4310 = vrot.lane.b32.xlu0 %v4218, 64
      %v4311 = vpop.permute.xlu0 %4310
      %4312 = vrot.lane.b32.xlu0 %v4219, 64
      %v4313 = vpop.permute.xlu0 %4312
      %4314 = vrot.lane.b32.xlu0 %v4220, 64
      %v4315 = vpop.permute.xlu0 %4314
      %4316 = vrot.lane.b32.xlu0 %v4221, 64
      %v4317 = vpop.permute.xlu0 %4316
      %4318 = vrot.lane.b32.xlu0 %v4222, 64
      %v4319 = vpop.permute.xlu0 %4318
      %v4320 = vsel %vm3196, %v4317, %v4319
      %v4321 = vsel %vm3196, %v4315, %v4317
      %v4322 = vsel %vm3196, %v4313, %v4315
      %v4323 = vsel %vm3196, %v4311, %v4313
      %v4324 = vsel %vm3196, %v4309, %v4311
      %v4325 = vsel %vm3196, %v4307, %v4309
      %v4326 = vsel %vm3196, %v4305, %v4307
      %v4327 = vsel %vm3196, %v4319, %v4305
      %v4328 = vlaneseq
      %v4329 = vshrl.u32 %v4328, 7
      %v4330 = vsub.s32 1, %v4329
      %v4331 = vrot.slane %v4224, %v4330
      %v4332 = vlaneseq
      %v4333 = vshrl.u32 %v4332, 7
      %v4334 = vsub.s32 1, %v4333
      %v4335 = vrot.slane %v4225, %v4334
      %v4336 = vlaneseq
      %v4337 = vshrl.u32 %v4336, 7
      %v4338 = vsub.s32 1, %v4337
      %v4339 = vrot.slane %v4226, %v4338
      %v4340 = vlaneseq
      %v4341 = vshrl.u32 %v4340, 7
      %v4342 = vsub.s32 1, %v4341
      %v4343 = vrot.slane %v4227, %v4342
      %v4344 = vlaneseq
      %v4345 = vshrl.u32 %v4344, 7
      %v4346 = vsub.s32 1, %v4345
      %v4347 = vrot.slane %v4228, %v4346
      %v4348 = vlaneseq
      %v4349 = vshrl.u32 %v4348, 7
      %v4350 = vsub.s32 1, %v4349
      %v4351 = vrot.slane %v4229, %v4350
      %v4352 = vlaneseq
      %v4353 = vshrl.u32 %v4352, 7
      %v4354 = vsub.s32 1, %v4353
      %v4355 = vrot.slane %v4230, %v4354
      %v4356 = vlaneseq
      %v4357 = vshrl.u32 %v4356, 7
      %v4358 = vsub.s32 1, %v4357
      %v4359 = vrot.slane %v4231, %v4358
      %v4360 = vmul.f32 %v4327, %v4331
      %v4361 = vmul.f32 %v4326, %v4335
      %v4362 = vmul.f32 %v4325, %v4339
      %v4363 = vmul.f32 %v4324, %v4343
      %v4364 = vmul.f32 %v4323, %v4347
      %v4365 = vmul.f32 %v4322, %v4351
      %v4366 = vmul.f32 %v4321, %v4355
      %v4367 = vmul.f32 %v4320, %v4359
      %4368 = vrot.lane.b32.xlu0 %v4215, 60
      %v4369 = vpop.permute.xlu0 %4368
      %4370 = vrot.lane.b32.xlu0 %v4216, 60
      %v4371 = vpop.permute.xlu0 %4370
      %4372 = vrot.lane.b32.xlu0 %v4217, 60
      %v4373 = vpop.permute.xlu0 %4372
      %4374 = vrot.lane.b32.xlu0 %v4218, 60
      %v4375 = vpop.permute.xlu0 %4374
      %4376 = vrot.lane.b32.xlu0 %v4219, 60
      %v4377 = vpop.permute.xlu0 %4376
      %4378 = vrot.lane.b32.xlu0 %v4220, 60
      %v4379 = vpop.permute.xlu0 %4378
      %4380 = vrot.lane.b32.xlu0 %v4221, 60
      %v4381 = vpop.permute.xlu0 %4380
      %4382 = vrot.lane.b32.xlu0 %v4222, 60
      %v4383 = vpop.permute.xlu0 %4382
      %v4384 = vsel %vm3261, %v4381, %v4383
      %v4385 = vsel %vm3261, %v4379, %v4381
      %v4386 = vsel %vm3261, %v4377, %v4379
      %v4387 = vsel %vm3261, %v4375, %v4377
      %v4388 = vsel %vm3261, %v4373, %v4375
      %v4389 = vsel %vm3261, %v4371, %v4373
      %v4390 = vsel %vm3261, %v4369, %v4371
      %v4391 = vsel %vm3261, %v4383, %v4369
      %v4392 = vlaneseq
      %v4393 = vshrl.u32 %v4392, 7
      %v4394 = vsub.s32 2, %v4393
      %v4395 = vrot.slane %v4224, %v4394
      %v4396 = vlaneseq
      %v4397 = vshrl.u32 %v4396, 7
      %v4398 = vsub.s32 2, %v4397
      %v4399 = vrot.slane %v4225, %v4398
      %v4400 = vlaneseq
      %v4401 = vshrl.u32 %v4400, 7
      %v4402 = vsub.s32 2, %v4401
      %v4403 = vrot.slane %v4226, %v4402
      %v4404 = vlaneseq
      %v4405 = vshrl.u32 %v4404, 7
      %v4406 = vsub.s32 2, %v4405
      %v4407 = vrot.slane %v4227, %v4406
      %v4408 = vlaneseq
      %v4409 = vshrl.u32 %v4408, 7
      %v4410 = vsub.s32 2, %v4409
      %v4411 = vrot.slane %v4228, %v4410
      %v4412 = vlaneseq
      %v4413 = vshrl.u32 %v4412, 7
      %v4414 = vsub.s32 2, %v4413
      %v4415 = vrot.slane %v4229, %v4414
      %v4416 = vlaneseq
      %v4417 = vshrl.u32 %v4416, 7
      %v4418 = vsub.s32 2, %v4417
      %v4419 = vrot.slane %v4230, %v4418
      %v4420 = vlaneseq
      %v4421 = vshrl.u32 %v4420, 7
      %v4422 = vsub.s32 2, %v4421
      %v4423 = vrot.slane %v4231, %v4422
      %v4424 = vmul.f32 %v4391, %v4395
      %v4425 = vmul.f32 %v4390, %v4399
      %v4426 = vmul.f32 %v4389, %v4403
      %v4427 = vmul.f32 %v4388, %v4407
      %v4428 = vmul.f32 %v4387, %v4411
      %v4429 = vmul.f32 %v4386, %v4415
      %v4430 = vmul.f32 %v4385, %v4419
      %v4431 = vmul.f32 %v4384, %v4423
      %4432 = vrot.lane.b32.xlu0 %v4215, 4
      %v4433 = vpop.permute.xlu0 %4432
      %4434 = vrot.lane.b32.xlu0 %v4216, 4
      %v4435 = vpop.permute.xlu0 %4434
      %4436 = vrot.lane.b32.xlu0 %v4217, 4
      %v4437 = vpop.permute.xlu0 %4436
      %4438 = vrot.lane.b32.xlu0 %v4218, 4
      %v4439 = vpop.permute.xlu0 %4438
      %4440 = vrot.lane.b32.xlu0 %v4219, 4
      %v4441 = vpop.permute.xlu0 %4440
      %4442 = vrot.lane.b32.xlu0 %v4220, 4
      %v4443 = vpop.permute.xlu0 %4442
      %4444 = vrot.lane.b32.xlu0 %v4221, 4
      %v4445 = vpop.permute.xlu0 %4444
      %4446 = vrot.lane.b32.xlu0 %v4222, 4
      %v4447 = vpop.permute.xlu0 %4446
      %v4448 = vsel %vm3326, %v4445, %v4447
      %v4449 = vsel %vm3326, %v4443, %v4445
      %v4450 = vsel %vm3326, %v4441, %v4443
      %v4451 = vsel %vm3326, %v4439, %v4441
      %v4452 = vsel %vm3326, %v4437, %v4439
      %v4453 = vsel %vm3326, %v4435, %v4437
      %v4454 = vsel %vm3326, %v4433, %v4435
      %v4455 = vsel %vm3326, %v4447, %v4433
      %v4456 = vlaneseq
      %v4457 = vshrl.u32 %v4456, 7
      %v4458 = vsub.s32 3, %v4457
      %v4459 = vrot.slane %v4224, %v4458
      %v4460 = vlaneseq
      %v4461 = vshrl.u32 %v4460, 7
      %v4462 = vsub.s32 3, %v4461
      %v4463 = vrot.slane %v4225, %v4462
      %v4464 = vlaneseq
      %v4465 = vshrl.u32 %v4464, 7
      %v4466 = vsub.s32 3, %v4465
      %v4467 = vrot.slane %v4226, %v4466
      %v4468 = vlaneseq
      %v4469 = vshrl.u32 %v4468, 7
      %v4470 = vsub.s32 3, %v4469
      %v4471 = vrot.slane %v4227, %v4470
      %v4472 = vlaneseq
      %v4473 = vshrl.u32 %v4472, 7
      %v4474 = vsub.s32 3, %v4473
      %v4475 = vrot.slane %v4228, %v4474
      %v4476 = vlaneseq
      %v4477 = vshrl.u32 %v4476, 7
      %v4478 = vsub.s32 3, %v4477
      %v4479 = vrot.slane %v4229, %v4478
      %v4480 = vlaneseq
      %v4481 = vshrl.u32 %v4480, 7
      %v4482 = vsub.s32 3, %v4481
      %v4483 = vrot.slane %v4230, %v4482
      %v4484 = vlaneseq
      %v4485 = vshrl.u32 %v4484, 7
      %v4486 = vsub.s32 3, %v4485
      %v4487 = vrot.slane %v4231, %v4486
      %v4488 = vmul.f32 %v4455, %v4459
      %v4489 = vmul.f32 %v4454, %v4463
      %v4490 = vmul.f32 %v4453, %v4467
      %v4491 = vmul.f32 %v4452, %v4471
      %v4492 = vmul.f32 %v4451, %v4475
      %v4493 = vmul.f32 %v4450, %v4479
      %v4494 = vmul.f32 %v4449, %v4483
      %v4495 = vmul.f32 %v4448, %v4487
      %v4496 = vlaneseq
      %v4497 = vshrl.u32 %v4496, 7
      %v4498 = vsub.s32 4, %v4497
      %v4499 = vrot.slane %v4224, %v4498
      %v4500 = vlaneseq
      %v4501 = vshrl.u32 %v4500, 7
      %v4502 = vsub.s32 4, %v4501
      %v4503 = vrot.slane %v4225, %v4502
      %v4504 = vlaneseq
      %v4505 = vshrl.u32 %v4504, 7
      %v4506 = vsub.s32 4, %v4505
      %v4507 = vrot.slane %v4226, %v4506
      %v4508 = vlaneseq
      %v4509 = vshrl.u32 %v4508, 7
      %v4510 = vsub.s32 4, %v4509
      %v4511 = vrot.slane %v4227, %v4510
      %v4512 = vlaneseq
      %v4513 = vshrl.u32 %v4512, 7
      %v4514 = vsub.s32 4, %v4513
      %v4515 = vrot.slane %v4228, %v4514
      %v4516 = vlaneseq
      %v4517 = vshrl.u32 %v4516, 7
      %v4518 = vsub.s32 4, %v4517
      %v4519 = vrot.slane %v4229, %v4518
      %v4520 = vlaneseq
      %v4521 = vshrl.u32 %v4520, 7
      %v4522 = vsub.s32 4, %v4521
      %v4523 = vrot.slane %v4230, %v4522
      %v4524 = vlaneseq
      %v4525 = vshrl.u32 %v4524, 7
      %v4526 = vsub.s32 4, %v4525
      %v4527 = vrot.slane %v4231, %v4526
      %v4528 = vmul.f32 %v4215, %v4499
      %v4529 = vmul.f32 %v4216, %v4503
      %v4530 = vmul.f32 %v4217, %v4507
      %v4531 = vmul.f32 %v4218, %v4511
      %v4532 = vmul.f32 %v4219, %v4515
      %v4533 = vmul.f32 %v4220, %v4519
      %v4534 = vmul.f32 %v4221, %v4523
      %v4535 = vmul.f32 %v4222, %v4527
      %4536 = vrot.lane.b32.xlu0 %v4215, 124
      %v4537 = vpop.permute.xlu0 %4536
      %4538 = vrot.lane.b32.xlu0 %v4216, 124
      %v4539 = vpop.permute.xlu0 %4538
      %4540 = vrot.lane.b32.xlu0 %v4217, 124
      %v4541 = vpop.permute.xlu0 %4540
      %4542 = vrot.lane.b32.xlu0 %v4218, 124
      %v4543 = vpop.permute.xlu0 %4542
      %4544 = vrot.lane.b32.xlu0 %v4219, 124
      %v4545 = vpop.permute.xlu0 %4544
      %4546 = vrot.lane.b32.xlu0 %v4220, 124
      %v4547 = vpop.permute.xlu0 %4546
      %4548 = vrot.lane.b32.xlu0 %v4221, 124
      %v4549 = vpop.permute.xlu0 %4548
      %4550 = vrot.lane.b32.xlu0 %v4222, 124
      %v4551 = vpop.permute.xlu0 %4550
      %v4552 = vsel %vm3431, %v4549, %v4551
      %v4553 = vsel %vm3431, %v4547, %v4549
      %v4554 = vsel %vm3431, %v4545, %v4547
      %v4555 = vsel %vm3431, %v4543, %v4545
      %v4556 = vsel %vm3431, %v4541, %v4543
      %v4557 = vsel %vm3431, %v4539, %v4541
      %v4558 = vsel %vm3431, %v4537, %v4539
      %v4559 = vsel %vm3431, %v4551, %v4537
      %v4560 = vlaneseq
      %v4561 = vshrl.u32 %v4560, 7
      %v4562 = vsub.s32 5, %v4561
      %v4563 = vrot.slane %v4224, %v4562
      %v4564 = vlaneseq
      %v4565 = vshrl.u32 %v4564, 7
      %v4566 = vsub.s32 5, %v4565
      %v4567 = vrot.slane %v4225, %v4566
      %v4568 = vlaneseq
      %v4569 = vshrl.u32 %v4568, 7
      %v4570 = vsub.s32 5, %v4569
      %v4571 = vrot.slane %v4226, %v4570
      %v4572 = vlaneseq
      %v4573 = vshrl.u32 %v4572, 7
      %v4574 = vsub.s32 5, %v4573
      %v4575 = vrot.slane %v4227, %v4574
      %v4576 = vlaneseq
      %v4577 = vshrl.u32 %v4576, 7
      %v4578 = vsub.s32 5, %v4577
      %v4579 = vrot.slane %v4228, %v4578
      %v4580 = vlaneseq
      %v4581 = vshrl.u32 %v4580, 7
      %v4582 = vsub.s32 5, %v4581
      %v4583 = vrot.slane %v4229, %v4582
      %v4584 = vlaneseq
      %v4585 = vshrl.u32 %v4584, 7
      %v4586 = vsub.s32 5, %v4585
      %v4587 = vrot.slane %v4230, %v4586
      %v4588 = vlaneseq
      %v4589 = vshrl.u32 %v4588, 7
      %v4590 = vsub.s32 5, %v4589
      %v4591 = vrot.slane %v4231, %v4590
      %v4592 = vmul.f32 %v4558, %v4563
      %v4593 = vmul.f32 %v4557, %v4567
      %v4594 = vmul.f32 %v4556, %v4571
      %v4595 = vmul.f32 %v4555, %v4575
      %v4596 = vmul.f32 %v4554, %v4579
      %v4597 = vmul.f32 %v4553, %v4583
      %v4598 = vmul.f32 %v4552, %v4587
      %v4599 = vmul.f32 %v4559, %v4591
      %v4600 = vlaneseq
      %v4601 = vshrl.u32 %v4600, 7
      %v4602 = vsub.s32 6, %v4601
      %v4603 = vrot.slane %v4224, %v4602
      %v4604 = vlaneseq
      %v4605 = vshrl.u32 %v4604, 7
      %v4606 = vsub.s32 6, %v4605
      %v4607 = vrot.slane %v4225, %v4606
      %v4608 = vlaneseq
      %v4609 = vshrl.u32 %v4608, 7
      %v4610 = vsub.s32 6, %v4609
      %v4611 = vrot.slane %v4226, %v4610
      %v4612 = vlaneseq
      %v4613 = vshrl.u32 %v4612, 7
      %v4614 = vsub.s32 6, %v4613
      %v4615 = vrot.slane %v4227, %v4614
      %v4616 = vlaneseq
      %v4617 = vshrl.u32 %v4616, 7
      %v4618 = vsub.s32 6, %v4617
      %v4619 = vrot.slane %v4228, %v4618
      %v4620 = vlaneseq
      %v4621 = vshrl.u32 %v4620, 7
      %v4622 = vsub.s32 6, %v4621
      %v4623 = vrot.slane %v4229, %v4622
      %v4624 = vlaneseq
      %v4625 = vshrl.u32 %v4624, 7
      %v4626 = vsub.s32 6, %v4625
      %v4627 = vrot.slane %v4230, %v4626
      %v4628 = vlaneseq
      %v4629 = vshrl.u32 %v4628, 7
      %v4630 = vsub.s32 6, %v4629
      %v4631 = vrot.slane %v4231, %v4630
      %v4632 = vmul.f32 %v4262, %v4603
      %v4633 = vmul.f32 %v4261, %v4607
      %v4634 = vmul.f32 %v4260, %v4611
      %v4635 = vmul.f32 %v4259, %v4615
      %v4636 = vmul.f32 %v4258, %v4619
      %v4637 = vmul.f32 %v4257, %v4623
      %v4638 = vmul.f32 %v4256, %v4627
      %v4639 = vmul.f32 %v4263, %v4631
      %v4640 = vlaneseq
      %v4641 = vshrl.u32 %v4640, 7
      %v4642 = vsub.s32 7, %v4641
      %v4643 = vrot.slane %v4224, %v4642
      %v4644 = vlaneseq
      %v4645 = vshrl.u32 %v4644, 7
      %v4646 = vsub.s32 7, %v4645
      %v4647 = vrot.slane %v4225, %v4646
      %v4648 = vlaneseq
      %v4649 = vshrl.u32 %v4648, 7
      %v4650 = vsub.s32 7, %v4649
      %v4651 = vrot.slane %v4226, %v4650
      %v4652 = vlaneseq
      %v4653 = vshrl.u32 %v4652, 7
      %v4654 = vsub.s32 7, %v4653
      %v4655 = vrot.slane %v4227, %v4654
      %v4656 = vlaneseq
      %v4657 = vshrl.u32 %v4656, 7
      %v4658 = vsub.s32 7, %v4657
      %v4659 = vrot.slane %v4228, %v4658
      %v4660 = vlaneseq
      %v4661 = vshrl.u32 %v4660, 7
      %v4662 = vsub.s32 7, %v4661
      %v4663 = vrot.slane %v4229, %v4662
      %v4664 = vlaneseq
      %v4665 = vshrl.u32 %v4664, 7
      %v4666 = vsub.s32 7, %v4665
      %v4667 = vrot.slane %v4230, %v4666
      %v4668 = vlaneseq
      %v4669 = vshrl.u32 %v4668, 7
      %v4670 = vsub.s32 7, %v4669
      %v4671 = vrot.slane %v4231, %v4670
      %v4672 = vmul.f32 %v4326, %v4643
      %v4673 = vmul.f32 %v4325, %v4647
      %v4674 = vmul.f32 %v4324, %v4651
      %v4675 = vmul.f32 %v4323, %v4655
      %v4676 = vmul.f32 %v4322, %v4659
      %v4677 = vmul.f32 %v4321, %v4663
      %v4678 = vmul.f32 %v4320, %v4667
      %v4679 = vmul.f32 %v4327, %v4671
      %v4680 = vlaneseq
      %v4681 = vshrl.u32 %v4680, 7
      %v4682 = vsub.s32 0, %v4681
      %v4683 = vrot.slane %v4232, %v4682
      %v4684 = vlaneseq
      %v4685 = vshrl.u32 %v4684, 7
      %v4686 = vsub.s32 0, %v4685
      %v4687 = vrot.slane %v4233, %v4686
      %v4688 = vlaneseq
      %v4689 = vshrl.u32 %v4688, 7
      %v4690 = vsub.s32 0, %v4689
      %v4691 = vrot.slane %v4234, %v4690
      %v4692 = vlaneseq
      %v4693 = vshrl.u32 %v4692, 7
      %v4694 = vsub.s32 0, %v4693
      %v4695 = vrot.slane %v4235, %v4694
      %v4696 = vlaneseq
      %v4697 = vshrl.u32 %v4696, 7
      %v4698 = vsub.s32 0, %v4697
      %v4699 = vrot.slane %v4236, %v4698
      %v4700 = vlaneseq
      %v4701 = vshrl.u32 %v4700, 7
      %v4702 = vsub.s32 0, %v4701
      %v4703 = vrot.slane %v4237, %v4702
      %v4704 = vlaneseq
      %v4705 = vshrl.u32 %v4704, 7
      %v4706 = vsub.s32 0, %v4705
      %v4707 = vrot.slane %v4238, %v4706
      %v4708 = vlaneseq
      %v4709 = vshrl.u32 %v4708, 7
      %v4710 = vsub.s32 0, %v4709
      %v4711 = vrot.slane %v4239, %v4710
      %v4712 = vmul.f32 %v4390, %v4683
      %v4713 = vmul.f32 %v4389, %v4687
      %v4714 = vmul.f32 %v4388, %v4691
      %v4715 = vmul.f32 %v4387, %v4695
      %v4716 = vmul.f32 %v4386, %v4699
      %v4717 = vmul.f32 %v4385, %v4703
      %v4718 = vmul.f32 %v4384, %v4707
      %v4719 = vmul.f32 %v4391, %v4711
      %v4720 = vpack.c.bf16 %v4360, %v4296
      %v4721 = vpack.c.bf16 %v4361, %v4297
      %v4722 = vpack.c.bf16 %v4362, %v4298
      %v4723 = vpack.c.bf16 %v4363, %v4299
      %v4724 = vpack.c.bf16 %v4364, %v4300
      %v4725 = vpack.c.bf16 %v4365, %v4301
      %v4726 = vpack.c.bf16 %v4366, %v4302
      %v4727 = vpack.c.bf16 %v4367, %v4303
      %v4728 = vpack.c.bf16 %v4488, %v4424
      %v4729 = vpack.c.bf16 %v4489, %v4425
      %v4730 = vpack.c.bf16 %v4490, %v4426
      %v4731 = vpack.c.bf16 %v4491, %v4427
      %v4732 = vpack.c.bf16 %v4492, %v4428
      %v4733 = vpack.c.bf16 %v4493, %v4429
      %v4734 = vpack.c.bf16 %v4494, %v4430
      %v4735 = vpack.c.bf16 %v4495, %v4431
      %v4736 = vpack.c.bf16 %v4592, %v4528
      %v4737 = vpack.c.bf16 %v4593, %v4529
      %v4738 = vpack.c.bf16 %v4594, %v4530
      %v4739 = vpack.c.bf16 %v4595, %v4531
      %v4740 = vpack.c.bf16 %v4596, %v4532
      %v4741 = vpack.c.bf16 %v4597, %v4533
      %v4742 = vpack.c.bf16 %v4598, %v4534
      %v4743 = vpack.c.bf16 %v4599, %v4535
      %v4744 = vpack.c.bf16 %v4672, %v4632
      %v4745 = vpack.c.bf16 %v4673, %v4633
      %v4746 = vpack.c.bf16 %v4674, %v4634
      %v4747 = vpack.c.bf16 %v4675, %v4635
      %v4748 = vpack.c.bf16 %v4676, %v4636
      %v4749 = vpack.c.bf16 %v4677, %v4637
      %v4750 = vpack.c.bf16 %v4678, %v4638
      %v4751 = vpack.c.bf16 %v4679, %v4639
      %v4752 = vpack.c.bf16 1.0, %v4712
      %v4753 = vpack.c.bf16 1.0, %v4713
      %v4754 = vpack.c.bf16 1.0, %v4714
      %v4755 = vpack.c.bf16 1.0, %v4715
      %v4756 = vpack.c.bf16 1.0, %v4716
      %v4757 = vpack.c.bf16 1.0, %v4717
      %v4758 = vpack.c.bf16 1.0, %v4718
      %v4759 = vpack.c.bf16 1.0, %v4719
      %v4761 = vsel %vm1042, %v4223, 0
      %4763 = vmatprep.subr.bf16.mxu0 0
      %4764 = vmatpush1.bf16.msra.mxu0 0
      %4765 = vmatprep.subr.bf16.mxu0 0
      %4766 = vmatpush1.bf16.msra.mxu0 0
      %4767 = vmatprep.subr.bf16.mxu0 0
      %4768 = vmatpush1.bf16.msra.mxu0 0
      %4769 = vmatprep.subr.bf16.mxu0 %v4753
      %4770 = vmatpush1.bf16.msra.mxu0 %v4752
      %4771 = vmatprep.subr.bf16.mxu0 %v4745
      %4772 = vmatpush1.bf16.msra.mxu0 %v4744
      %4773 = vmatprep.subr.bf16.mxu0 %v4737
      %4774 = vmatpush1.bf16.msra.mxu0 %v4736
      %4775 = vmatprep.subr.bf16.mxu0 %v4729
      %4776 = vmatpush1.bf16.msra.mxu0 %v4728
      %4777 = vmatprep.subr.bf16.mxu0 %v4721
      %4778 = vmatpush1.bf16.msra.mxu0 %v4720
      %4779 = vmatprep.subr.bf16.mxu0 0
      %4780 = vmatpush2.bf16.msra.mxu0 0
      %4781 = vmatprep.subr.bf16.mxu0 0
      %4782 = vmatpush2.bf16.msra.mxu0 0
      %4783 = vmatprep.subr.bf16.mxu0 0
      %4784 = vmatpush2.bf16.msra.mxu0 0
      %4785 = vmatprep.subr.bf16.mxu0 0
      %4786 = vmatpush2.bf16.msra.mxu0 0
      %4787 = vmatprep.subr.bf16.mxu0 0
      %4788 = vmatpush2.bf16.msra.mxu0 0
      %4789 = vmatprep.subr.bf16.mxu0 0
      %4790 = vmatpush2.bf16.msra.mxu0 0
      %4791 = vmatprep.subr.bf16.mxu0 0
      %4792 = vmatpush2.bf16.msra.mxu0 0
      %4793 = vmatprep.subr.bf16.mxu0 0
      %4794 = vmatpush2.bf16.msra.mxu0 0
      %4795 = vmatprep.mubr.bf16.mxu0 0
      %4796 = vmatmul.mubr.bf16.gmra.mxu0 %v4761
      %v4797 = vpop.f32.mrf.mxu0
      %v4798 = vadd.f32 0.0, %v4797
      %v4799 = vpop.f32.mrf.mxu0
      %v4800 = vadd.f32 0.0, %v4799
      %v4801 = vpop.f32.mrf.mxu0
      %v4802 = vpop.f32.mrf.mxu0
      %4803 = vdwg.mxu0
      %4804 = vmatprep.subr.bf16.mxu0 0
      %4805 = vmatpush1.bf16.msra.mxu0 0
      %4806 = vmatprep.subr.bf16.mxu0 0
      %4807 = vmatpush1.bf16.msra.mxu0 0
      %4808 = vmatprep.subr.bf16.mxu0 0
      %4809 = vmatpush1.bf16.msra.mxu0 0
      %4810 = vmatprep.subr.bf16.mxu0 %v4755
      %4811 = vmatpush1.bf16.msra.mxu0 %v4754
      %4812 = vmatprep.subr.bf16.mxu0 %v4747
      %4813 = vmatpush1.bf16.msra.mxu0 %v4746
      %4814 = vmatprep.subr.bf16.mxu0 %v4739
      %4815 = vmatpush1.bf16.msra.mxu0 %v4738
      %4816 = vmatprep.subr.bf16.mxu0 %v4731
      %4817 = vmatpush1.bf16.msra.mxu0 %v4730
      %4818 = vmatprep.subr.bf16.mxu0 %v4723
      %4819 = vmatpush1.bf16.msra.mxu0 %v4722
      %4820 = vmatprep.subr.bf16.mxu0 0
      %4821 = vmatpush2.bf16.msra.mxu0 0
      %4822 = vmatprep.subr.bf16.mxu0 0
      %4823 = vmatpush2.bf16.msra.mxu0 0
      %4824 = vmatprep.subr.bf16.mxu0 0
      %4825 = vmatpush2.bf16.msra.mxu0 0
      %4826 = vmatprep.subr.bf16.mxu0 0
      %4827 = vmatpush2.bf16.msra.mxu0 0
      %4828 = vmatprep.subr.bf16.mxu0 0
      %4829 = vmatpush2.bf16.msra.mxu0 0
      %4830 = vmatprep.subr.bf16.mxu0 0
      %4831 = vmatpush2.bf16.msra.mxu0 0
      %4832 = vmatprep.subr.bf16.mxu0 0
      %4833 = vmatpush2.bf16.msra.mxu0 0
      %4834 = vmatprep.subr.bf16.mxu0 0
      %4835 = vmatpush2.bf16.msra.mxu0 0
      %4836 = vmatprep.mubr.bf16.mxu0 0
      %4837 = vmatmul.mubr.bf16.gmra.mxu0 %v4761
      %v4838 = vpop.f32.mrf.mxu0
      %v4839 = vadd.f32 0.0, %v4838
      %v4840 = vpop.f32.mrf.mxu0
      %v4841 = vadd.f32 0.0, %v4840
      %v4842 = vpop.f32.mrf.mxu0
      %v4843 = vpop.f32.mrf.mxu0
      %4844 = vdwg.mxu0
      %4845 = vmatprep.subr.bf16.mxu0 0
      %4846 = vmatpush1.bf16.msra.mxu0 0
      %4847 = vmatprep.subr.bf16.mxu0 0
      %4848 = vmatpush1.bf16.msra.mxu0 0
      %4849 = vmatprep.subr.bf16.mxu0 0
      %4850 = vmatpush1.bf16.msra.mxu0 0
      %4851 = vmatprep.subr.bf16.mxu0 %v4757
      %4852 = vmatpush1.bf16.msra.mxu0 %v4756
      %4853 = vmatprep.subr.bf16.mxu0 %v4749
      %4854 = vmatpush1.bf16.msra.mxu0 %v4748
      %4855 = vmatprep.subr.bf16.mxu0 %v4741
      %4856 = vmatpush1.bf16.msra.mxu0 %v4740
      %4857 = vmatprep.subr.bf16.mxu0 %v4733
      %4858 = vmatpush1.bf16.msra.mxu0 %v4732
      %4859 = vmatprep.subr.bf16.mxu0 %v4725
      %4860 = vmatpush1.bf16.msra.mxu0 %v4724
      %4861 = vmatprep.subr.bf16.mxu0 0
      %4862 = vmatpush2.bf16.msra.mxu0 0
      %4863 = vmatprep.subr.bf16.mxu0 0
      %4864 = vmatpush2.bf16.msra.mxu0 0
      %4865 = vmatprep.subr.bf16.mxu0 0
      %4866 = vmatpush2.bf16.msra.mxu0 0
      %4867 = vmatprep.subr.bf16.mxu0 0
      %4868 = vmatpush2.bf16.msra.mxu0 0
      %4869 = vmatprep.subr.bf16.mxu0 0
      %4870 = vmatpush2.bf16.msra.mxu0 0
      %4871 = vmatprep.subr.bf16.mxu0 0
      %4872 = vmatpush2.bf16.msra.mxu0 0
      %4873 = vmatprep.subr.bf16.mxu0 0
      %4874 = vmatpush2.bf16.msra.mxu0 0
      %4875 = vmatprep.subr.bf16.mxu0 0
      %4876 = vmatpush2.bf16.msra.mxu0 0
      %4877 = vmatprep.mubr.bf16.mxu0 0
      %4878 = vmatmul.mubr.bf16.gmra.mxu0 %v4761
      %v4879 = vpop.f32.mrf.mxu0
      %v4880 = vadd.f32 0.0, %v4879
      %v4881 = vpop.f32.mrf.mxu0
      %v4882 = vadd.f32 0.0, %v4881
      %v4883 = vpop.f32.mrf.mxu0
      %v4884 = vpop.f32.mrf.mxu0
      %4885 = vdwg.mxu0
      %4886 = vmatprep.subr.bf16.mxu0 0
      %4887 = vmatpush1.bf16.msra.mxu0 0
      %4888 = vmatprep.subr.bf16.mxu0 0
      %4889 = vmatpush1.bf16.msra.mxu0 0
      %4890 = vmatprep.subr.bf16.mxu0 0
      %4891 = vmatpush1.bf16.msra.mxu0 0
      %4892 = vmatprep.subr.bf16.mxu0 %v4759
      %4893 = vmatpush1.bf16.msra.mxu0 %v4758
      %4894 = vmatprep.subr.bf16.mxu0 %v4751
      %4895 = vmatpush1.bf16.msra.mxu0 %v4750
      %4896 = vmatprep.subr.bf16.mxu0 %v4743
      %4897 = vmatpush1.bf16.msra.mxu0 %v4742
      %4898 = vmatprep.subr.bf16.mxu0 %v4735
      %4899 = vmatpush1.bf16.msra.mxu0 %v4734
      %4900 = vmatprep.subr.bf16.mxu0 %v4727
      %4901 = vmatpush1.bf16.msra.mxu0 %v4726
      %4902 = vmatprep.subr.bf16.mxu0 0
      %4903 = vmatpush2.bf16.msra.mxu0 0
      %4904 = vmatprep.subr.bf16.mxu0 0
      %4905 = vmatpush2.bf16.msra.mxu0 0
      %4906 = vmatprep.subr.bf16.mxu0 0
      %4907 = vmatpush2.bf16.msra.mxu0 0
      %4908 = vmatprep.subr.bf16.mxu0 0
      %4909 = vmatpush2.bf16.msra.mxu0 0
      %4910 = vmatprep.subr.bf16.mxu0 0
      %4911 = vmatpush2.bf16.msra.mxu0 0
      %4912 = vmatprep.subr.bf16.mxu0 0
      %4913 = vmatpush2.bf16.msra.mxu0 0
      %4914 = vmatprep.subr.bf16.mxu0 0
      %4915 = vmatpush2.bf16.msra.mxu0 0
      %4916 = vmatprep.subr.bf16.mxu0 0
      %4917 = vmatpush2.bf16.msra.mxu0 0
      %4918 = vmatprep.mubr.bf16.mxu0 0
      %4919 = vmatmul.mubr.bf16.gmra.mxu0 %v4761
      %v4920 = vpop.f32.mrf.mxu0
      %v4921 = vadd.f32 0.0, %v4920
      %v4922 = vpop.f32.mrf.mxu0
      %v4923 = vadd.f32 0.0, %v4922
      %v4924 = vpop.f32.mrf.mxu0
      %v4925 = vpop.f32.mrf.mxu0
      %4926 = vdwg.mxu0
      %4927 = vst [vmem:[%s413] sm:$0xff] %v4798
      %4928 = vst [vmem:[%s413 + $0x8] sm:$0xff] %v4800
      %4929 = vst [vmem:[%s413 + $0x10] sm:$0xff] %v4839
      %4930 = vst [vmem:[%s413 + $0x18] sm:$0xff] %v4841
      %4931 = vst [vmem:[%s413 + $0x20] sm:$0xff] %v4880
      %4932 = vst [vmem:[%s413 + $0x28] sm:$0xff] %v4882
      %4933 = vst [vmem:[%s413 + $0x30] sm:$0xff] %v4921
      %4934 = vst [vmem:[%s413 + $0x38] sm:$0xff] %v4923
      %p4935 = scmp.lt.s32.totalorder %s23, 1
      %s4936 = scalar_select %p4935, %s23, 1
      %s4937 = smul.addr %s4936, 8
      %s4938 = smul.addr %s4937, 8
      %s4939 = scalar_lea.vmem %s12, %s4938
      // Predicated region
      $region69: #{conv2d_model_forward.1} parent=67 // pred_check
        %p4940 = pneg %p298
      $region70: #{conv2d_model_forward.1} parent=67 // pred_check_branch
        %4942 = sbr.rel (%p4940) target = $region72
      $region71: #{conv2d_model_forward.1} parent=67 // pred_region
        _
      $region72: #{conv2d_model_forward.1} parent=67 // pred_fallthru
        _
    $region68: #{conv2d_model_forward.1} parent=5 // pred_fallthru
      _
    %p4943 = scmp.le.s32.totalorder 2, %s18
    // Predicated region
    $region73: #{conv2d_model_forward.1} parent=5 // pred_check
      %p4944 = pneg %p4943
    $region74: #{conv2d_model_forward.1} parent=5 // pred_check_branch
      %4946 = sbr.rel (%p4944) target = $region76
    $region75: #{conv2d_model_forward.1} parent=5 // pred_region
      %s4947 = ssub.s32 %s18, 2
      // Predicated region
      $region77: #{conv2d_model_forward.1} parent=75 // pred_check
        %p4948 = pneg %p304
      $region78: #{conv2d_model_forward.1} parent=75 // pred_check_branch
        %4950 = sbr.rel (%p4948) target = $region80
      $region79: #{conv2d_model_forward.1} parent=75 // pred_region
        %p4951 = scmp.lt.s32.totalorder %s24, 1
        %s4952 = scalar_select %p4951, %s24, 1
        %s4953 = smul.addr %s4952, 8
        %s4954 = smul.addr %s4953, 8
        %s4955 = scalar_lea.vmem %s12, %s4954
      $region80: #{conv2d_model_forward.1} parent=75 // pred_fallthru
        _
    $region76: #{conv2d_model_forward.1} parent=5 // pred_fallthru
      _
  $region6: #{conv2d_model_forward.1} parent=0 // loop_footer
    %s22 = sadd.s32 1, %s18
  $region7: #{conv2d_model_forward.1} parent=0 // loop_footer_branch
    %17 = sbr.rel target = $region3
  $region8: #{conv2d_model_forward.1} parent=0 // loop_exit
    _

</llo_original>
